<compile_context>
chip_gen: v7x
topology: tpu7x:2x2x1
jax: 0.10.0
libtpu: 0.0.40
codegen_flags: <defaults>
</compile_context>

<pallas_src>
import functools
import math

import jax
import jax.numpy as jnp
from jax import lax
from jax.experimental import pallas as pl
from jax.experimental.pallas import tpu as pltpu


_NC = 10  # number of hoisted per-vertex scalar constants


def _acos_f32(x):
    """float32 arccos from sqrt/mul/add/select only (Cephes acosf scheme).

    Single shared polynomial evaluation for both the |x|<=0.5 and |x|>0.5
    branches (roughly half the VALU cost of evaluating the poly twice).
    """
    ax = jnp.abs(x)
    use_small = ax <= 0.5
    s = jnp.sqrt(jnp.maximum(0.5 * (1.0 - ax), 0.0))
    t = jnp.where(use_small, x, s)
    z = t * t
    p = jnp.float32(4.2163199048e-2)
    p = p * z + 2.4181311049e-2
    p = p * z + 4.5470025998e-2
    p = p * z + 7.4953002686e-2
    p = p * z + 1.6666752422e-1
    asin_t = t + t * z * p
    small = jnp.float32(math.pi / 2.0) - asin_t            # acos(x), |x| <= 0.5
    big = 2.0 * asin_t                                     # acos(|x|), |x| > 0.5
    big = jnp.where(x < 0.0, jnp.float32(math.pi) - big, big)
    return jnp.where(use_small, small, big)


def _draw_contour_kernel(consts_ref, out_ref, *, size, s_pad, tile_r, halo,
                         n_verts, thickness, k, eps, use_sign):
    bn = pl.program_id(0)           # which (b, n) polygon
    rt = pl.program_id(1)           # which row tile
    e_rows = tile_r + 2 * halo      # haloed tile (multiple of 8 rows)

    # Global pixel coordinates of the extended (haloed) row tile.
    row_i = (rt * tile_r - halo) + lax.broadcasted_iota(
        jnp.int32, (e_rows, s_pad), 0)
    col_j = lax.broadcasted_iota(jnp.int32, (e_rows, s_pad), 1)
    inv_s = jnp.float32(1.0 / size)
    ii = row_i.astype(jnp.float32) * inv_s
    jj = col_j.astype(jnp.float32) * inv_s
    r2 = ii * ii + jj * jj          # tile-constant ii^2 + jj^2 (hoisted)

    base = bn * _NC

    def body(kk, wind):
        # Per-vertex scalars (precomputed in the wrapper, read from SMEM).
        a_v = consts_ref[base + 0, kk]     # cy*rx - cx*ry
        b_v = consts_ref[base + 1, kk]     # ry - cy
        c_v = consts_ref[base + 2, kk]     # cx - rx
        e_v = consts_ref[base + 3, kk]     # cx^2 + cy^2
        f_v = consts_ref[base + 4, kk]     # rx^2 + ry^2
        g_v = consts_ref[base + 5, kk]     # (cx-rx)^2 + (cy-ry)^2
        cx2 = consts_ref[base + 6, kk]     # 2*cx
        cy2 = consts_ref[base + 7, kk]     # 2*cy
        rx2 = consts_ref[base + 8, kk]     # 2*rx
        ry2 = consts_ref[base + 9, kk]     # 2*ry

        # cross = diff_y*roll_x - diff_x*roll_y, expanded around the pixel grid
        cross = a_v + ii * b_v + jj * c_v
        if use_sign:
            # tanh(k*x) with k >= 1e4 is numerically sign(x) in float32
            sgn = (jnp.where(cross > 0.0, 1.0, 0.0)
                   - jnp.where(cross < 0.0, 1.0, 0.0))
        else:
            sgn = jnp.tanh(k * cross)

        dd = (r2 + e_v) - ii * cx2 - jj * cy2      # |p - v_k|^2
        rr = (r2 + f_v) - ii * rx2 - jj * ry2      # |p - v_{k+1}|^2
        sp = 0.5 * ((dd + rr) - g_v)               # (p - v_k) . (p - v_{k+1})
        den = jnp.sqrt(dd * rr) + eps              # single EUP sqrt
        clipv = jnp.clip(sp / den, -1.0 + eps, 1.0 - eps)
        return wind + sgn * _acos_f32(clipv)

    wind = lax.fori_loop(0, n_verts, body,
                         jnp.zeros((e_rows, s_pad), jnp.float32),
                         unroll=(True if n_verts <= 16 else 8))

    mask = jnp.clip(jnp.abs(wind) * jnp.float32(1.0 / (2.0 * math.pi)), 0.0, 1.0)

    # ---- separable Sobel (cross-correlation).  Border / out-of-image pixels
    #      are zeroed afterwards, so roll wrap-around never reaches the output.
    t_v = jnp.roll(mask, 1, axis=0) + mask + mask + jnp.roll(mask, -1, axis=0)
    t_h = jnp.roll(mask, 1, axis=1) + mask + mask + jnp.roll(mask, -1, axis=1)
    gx = jnp.roll(t_v, 1, axis=1) - jnp.roll(t_v, -1, axis=1)   # T(c-1) - T(c+1)
    gy = jnp.roll(t_h, 1, axis=0) - jnp.roll(t_h, -1, axis=0)   # S(r-1) - S(r+1)
    edge = 2.0 * jnp.sqrt(gx * gx + gy * gy)

    interior = ((row_i >= 1) & (row_i <= size - 2) &
                (col_j >= 1) & (col_j <= size - 2))
    edge = jnp.where(interior, edge, 0.0)

    # ---- separable MaxPool2d(thickness, stride=1, padding=thickness//2)
    #      (all edge values are >= 0, so masked-out positions contribute 0)
    if thickness > 1:
        pad = thickness // 2
        rp = edge
        for d in range(1, pad + 1):                 # rows: halo covers the window
            rp = jnp.maximum(rp, jnp.roll(edge, d, axis=0))
            rp = jnp.maximum(rp, jnp.roll(edge, -d, axis=0))
        pooled = rp
        for d in range(1, pad + 1):                 # cols: mask roll wrap-around
            lft = jnp.where(col_j - d >= 0, jnp.roll(rp, d, axis=1), 0.0)
            rgt = jnp.where(col_j + d < s_pad, jnp.roll(rp, -d, axis=1), 0.0)
            pooled = jnp.maximum(pooled, jnp.maximum(lft, rgt))
        edge = pooled

    out_ref[0, :, :] = edge[halo:halo + tile_r, :]


def _round_up(x, m):
    return ((x + m - 1) // m) * m


def draw_contour(contour, size, thickness=1, k=100000.0, eps=1e-5,
                 validate=False):
    """JAX/Pallas equivalent of Draw_contour.forward.

    contour: (B, N, K, 2) float32, values in [0, 1].
    returns: (B, N, size, size) float32.
    """
    contour = jnp.asarray(contour, jnp.float32)
    if thickness % 2 != 1:
        raise ValueError("only odd thickness is supported "
                         "(the torch module also breaks otherwise)")
    if validate:
        # host-sync range check (same semantics as torch); leave off under jit
        if bool(jnp.any((contour < 0.0) | (contour > 1.0))):
            raise ValueError("Tensor values should be in the range [0, 1]")

    B, N, K, _ = contour.shape
    c = contour.reshape(B * N, K, 2)
    cx, cy = c[:, :, 0], c[:, :, 1]
    rx, ry = jnp.roll(cx, -1, axis=1), jnp.roll(cy, -1, axis=1)

    # Hoisted per-vertex scalar constants (see kernel); staged whole in SMEM.
    consts = jnp.stack([
        cy * rx - cx * ry,                     # A
        ry - cy,                               # B
        cx - rx,                               # C
        cx * cx + cy * cy,                     # E
        rx * rx + ry * ry,                     # F
        (cx - rx) ** 2 + (cy - ry) ** 2,       # G
        2.0 * cx, 2.0 * cy, 2.0 * rx, 2.0 * ry,
    ], axis=1).reshape(B * N * _NC, K).astype(jnp.float32)

    # Lane-dense column padding; row tiles sized to keep the working set small.
    s_pad = _round_up(max(size, 1), 128)
    tile_cap = max(8, min(256, (300_000 // s_pad) // 8 * 8))
    n_row_tiles = pl.cdiv(size, tile_cap)
    tile_r = _round_up(pl.cdiv(size, n_row_tiles), 8)
    r_pad = n_row_tiles * tile_r
    halo = _round_up(thickness // 2 + 1, 4)    # haloed tile stays multiple of 8

    kernel = functools.partial(
        _draw_contour_kernel, size=size, s_pad=s_pad, tile_r=tile_r, halo=halo,
        n_verts=K, thickness=thickness, k=float(k), eps=float(eps),
        use_sign=(float(k) >= 1e4))

    edge = pl.pallas_call(
        kernel,
        out_shape=jax.ShapeDtypeStruct((B * N, r_pad, s_pad), jnp.float32),
        grid_spec=pltpu.PrefetchScalarGridSpec(
            num_scalar_prefetch=0,
            grid=(B * N, n_row_tiles),
            in_specs=[pl.BlockSpec(memory_space=pltpu.MemorySpace.SMEM)],
            out_specs=pl.BlockSpec((1, tile_r, s_pad),
                                   lambda bn, rt: (bn, rt, 0)),
        ),
        compiler_params=pltpu.CompilerParams(
            dimension_semantics=("parallel", "parallel"),
            vmem_limit_bytes=32 * 1024 * 1024),
    )(consts)

    # Finalize pass: crop the padding, then per-(b, n) min/max normalization
    # (cross-tile reduction, done in plain JAX to keep both grid axes parallel).
    drawn = edge[:, :size, :size].reshape(B, N, size * size)
    mn = jnp.min(drawn, axis=-1, keepdims=True)
    mx = jnp.max(drawn, axis=-1, keepdims=True)
    drawn = (drawn - mn) / (mx - mn + 1e-9)
    return drawn.reshape(B, N, size, size)


if __name__ == "__main__":
    key = jax.random.PRNGKey(0)
    B, N, K, size = 2, 1, 8, 16   # N=1: the only case the torch Sobel accepts

    # deterministic polygon: circle of radius 0.3 around (0.5, 0.5) plus a
    # small random perturbation, values kept inside [0, 1]
    theta = jnp.linspace(0.0, 2.0 * math.pi, K, endpoint=False)
    base = jnp.stack([0.5 + 0.3 * jnp.cos(theta),
                      0.5 + 0.3 * jnp.sin(theta)], axis=-1)
    noise = 0.03 * jax.random.uniform(key, (B, N, K, 2), minval=-1.0, maxval=1.0)
    contour = jnp.clip(base[None, None] + noise, 0.0, 1.0).astype(jnp.float32)

    out = draw_contour(contour, size=size, thickness=1, validate=True)
    out = jax.block_until_ready(out)
    assert out.shape == (B, N, size, size) and out.dtype == jnp.float32
    assert bool(jnp.all(jnp.isfinite(out)))

    out3 = draw_contour(contour, size=size, thickness=3)   # exercises max-pool path
    out3 = jax.block_until_ready(out3)
    assert out3.shape == (B, N, size, size)

    print("KERNEL_OK")
</pallas_src>

<mosaic_0001>
module attributes {stable_mosaic.version = 11 : i64} {
  func.func @_draw_contour_kernel(%arg0: i32, %arg1: i32, %arg2: memref<20x8xf32, #tpu.memory_space<smem>>, %arg3: memref<1x16x128xf32, #tpu.memory_space<vmem>>) attributes {dimension_semantics = [#tpu.dimension_semantics<parallel>, #tpu.dimension_semantics<parallel>], iteration_bounds = array<i64: 2, 1>, scalar_prefetch = 0 : i64, scratch_operands = 0 : i64, tpu.core_type = #tpu.core_type<tc>, window_params = [{transform_indices = @transform_0, window_bounds = array<i64: 20, 8>}, {transform_indices = @transform_1, window_bounds = array<i64: 1, 16, 128>}]} {
    %c16_i32 = arith.constant 16 : i32
    %0 = arith.muli %arg1, %c16_i32 : i32
    %c4_i32 = arith.constant 4 : i32
    %1 = arith.subi %0, %c4_i32 : i32
    %2 = tpu.iota {dimensions = array<i32: 0>} : vector<24x128xi32>
    %3 = vector.broadcast %1 : i32 to vector<24x128xi32>
    %4 = arith.addi %3, %2 : vector<24x128xi32>
    %5 = tpu.iota {dimensions = array<i32: 1>} : vector<24x128xi32>
    %6 = arith.sitofp %4 : vector<24x128xi32> to vector<24x128xf32>
    %cst = arith.constant 6.250000e-02 : f32
    %7 = vector.broadcast %cst : f32 to vector<24x128xf32>
    %8 = arith.mulf %6, %7 : vector<24x128xf32>
    %9 = arith.sitofp %5 : vector<24x128xi32> to vector<24x128xf32>
    %cst_0 = arith.constant 6.250000e-02 : f32
    %10 = vector.broadcast %cst_0 : f32 to vector<24x128xf32>
    %11 = arith.mulf %9, %10 : vector<24x128xf32>
    %12 = arith.mulf %8, %8 : vector<24x128xf32>
    %13 = arith.mulf %11, %11 : vector<24x128xf32>
    %14 = arith.addf %12, %13 : vector<24x128xf32>
    %c10_i32 = arith.constant 10 : i32
    %15 = arith.muli %arg0, %c10_i32 : i32
    %cst_1 = arith.constant 0.000000e+00 : f32
    %16 = vector.broadcast %cst_1 : f32 to vector<24x128xf32>
    %c0_i32 = arith.constant 0 : i32
    %c0_i32_2 = arith.constant 0 : i32
    %17 = arith.addi %15, %c0_i32_2 : i32
    %18 = arith.index_cast %17 : i32 to index
    %19 = arith.index_cast %c0_i32 : i32 to index
    %20 = memref.load %arg2[%18, %19] : memref<20x8xf32, #tpu.memory_space<smem>>
    %c1_i32 = arith.constant 1 : i32
    %21 = arith.addi %15, %c1_i32 : i32
    %22 = arith.index_cast %21 : i32 to index
    %23 = arith.index_cast %c0_i32 : i32 to index
    %24 = memref.load %arg2[%22, %23] : memref<20x8xf32, #tpu.memory_space<smem>>
    %c2_i32 = arith.constant 2 : i32
    %25 = arith.addi %15, %c2_i32 : i32
    %26 = arith.index_cast %25 : i32 to index
    %27 = arith.index_cast %c0_i32 : i32 to index
    %28 = memref.load %arg2[%26, %27] : memref<20x8xf32, #tpu.memory_space<smem>>
    %c3_i32 = arith.constant 3 : i32
    %29 = arith.addi %15, %c3_i32 : i32
    %30 = arith.index_cast %29 : i32 to index
    %31 = arith.index_cast %c0_i32 : i32 to index
    %32 = memref.load %arg2[%30, %31] : memref<20x8xf32, #tpu.memory_space<smem>>
    %c4_i32_3 = arith.constant 4 : i32
    %33 = arith.addi %15, %c4_i32_3 : i32
    %34 = arith.index_cast %33 : i32 to index
    %35 = arith.index_cast %c0_i32 : i32 to index
    %36 = memref.load %arg2[%34, %35] : memref<20x8xf32, #tpu.memory_space<smem>>
    %c5_i32 = arith.constant 5 : i32
    %37 = arith.addi %15, %c5_i32 : i32
    %38 = arith.index_cast %37 : i32 to index
    %39 = arith.index_cast %c0_i32 : i32 to index
    %40 = memref.load %arg2[%38, %39] : memref<20x8xf32, #tpu.memory_space<smem>>
    %c6_i32 = arith.constant 6 : i32
    %41 = arith.addi %15, %c6_i32 : i32
    %42 = arith.index_cast %41 : i32 to index
    %43 = arith.index_cast %c0_i32 : i32 to index
    %44 = memref.load %arg2[%42, %43] : memref<20x8xf32, #tpu.memory_space<smem>>
    %c7_i32 = arith.constant 7 : i32
    %45 = arith.addi %15, %c7_i32 : i32
    %46 = arith.index_cast %45 : i32 to index
    %47 = arith.index_cast %c0_i32 : i32 to index
    %48 = memref.load %arg2[%46, %47] : memref<20x8xf32, #tpu.memory_space<smem>>
    %c8_i32 = arith.constant 8 : i32
    %49 = arith.addi %15, %c8_i32 : i32
    %50 = arith.index_cast %49 : i32 to index
    %51 = arith.index_cast %c0_i32 : i32 to index
    %52 = memref.load %arg2[%50, %51] : memref<20x8xf32, #tpu.memory_space<smem>>
    %c9_i32 = arith.constant 9 : i32
    %53 = arith.addi %15, %c9_i32 : i32
    %54 = arith.index_cast %53 : i32 to index
    %55 = arith.index_cast %c0_i32 : i32 to index
    %56 = memref.load %arg2[%54, %55] : memref<20x8xf32, #tpu.memory_space<smem>>
    %57 = vector.broadcast %24 : f32 to vector<24x128xf32>
    %58 = arith.mulf %8, %57 : vector<24x128xf32>
    %59 = vector.broadcast %20 : f32 to vector<24x128xf32>
    %60 = arith.addf %59, %58 : vector<24x128xf32>
    %61 = vector.broadcast %28 : f32 to vector<24x128xf32>
    %62 = arith.mulf %11, %61 : vector<24x128xf32>
    %63 = arith.addf %60, %62 : vector<24x128xf32>
    %cst_4 = arith.constant 0.000000e+00 : f32
    %64 = vector.broadcast %cst_4 : f32 to vector<24x128xf32>
    %65 = arith.cmpf ogt, %63, %64 : vector<24x128xf32>
    %cst_5 = arith.constant 1.000000e+00 : f32
    %cst_6 = arith.constant 0.000000e+00 : f32
    %66 = vector.broadcast %cst_5 : f32 to vector<24x128xf32>
    %67 = vector.broadcast %cst_6 : f32 to vector<24x128xf32>
    %68 = arith.select %65, %66, %67 : vector<24x128xi1>, vector<24x128xf32>
    %cst_7 = arith.constant 0.000000e+00 : f32
    %69 = vector.broadcast %cst_7 : f32 to vector<24x128xf32>
    %70 = arith.cmpf olt, %63, %69 : vector<24x128xf32>
    %cst_8 = arith.constant 1.000000e+00 : f32
    %cst_9 = arith.constant 0.000000e+00 : f32
    %71 = vector.broadcast %cst_8 : f32 to vector<24x128xf32>
    %72 = vector.broadcast %cst_9 : f32 to vector<24x128xf32>
    %73 = arith.select %70, %71, %72 : vector<24x128xi1>, vector<24x128xf32>
    %74 = arith.subf %68, %73 : vector<24x128xf32>
    %75 = vector.broadcast %32 : f32 to vector<24x128xf32>
    %76 = arith.addf %14, %75 : vector<24x128xf32>
    %77 = vector.broadcast %44 : f32 to vector<24x128xf32>
    %78 = arith.mulf %8, %77 : vector<24x128xf32>
    %79 = arith.subf %76, %78 : vector<24x128xf32>
    %80 = vector.broadcast %48 : f32 to vector<24x128xf32>
    %81 = arith.mulf %11, %80 : vector<24x128xf32>
    %82 = arith.subf %79, %81 : vector<24x128xf32>
    %83 = vector.broadcast %36 : f32 to vector<24x128xf32>
    %84 = arith.addf %14, %83 : vector<24x128xf32>
    %85 = vector.broadcast %52 : f32 to vector<24x128xf32>
    %86 = arith.mulf %8, %85 : vector<24x128xf32>
    %87 = arith.subf %84, %86 : vector<24x128xf32>
    %88 = vector.broadcast %56 : f32 to vector<24x128xf32>
    %89 = arith.mulf %11, %88 : vector<24x128xf32>
    %90 = arith.subf %87, %89 : vector<24x128xf32>
    %91 = arith.addf %82, %90 : vector<24x128xf32>
    %92 = vector.broadcast %40 : f32 to vector<24x128xf32>
    %93 = arith.subf %91, %92 : vector<24x128xf32>
    %cst_10 = arith.constant 5.000000e-01 : f32
    %94 = vector.broadcast %cst_10 : f32 to vector<24x128xf32>
    %95 = arith.mulf %94, %93 : vector<24x128xf32>
    %96 = arith.mulf %82, %90 : vector<24x128xf32>
    %97 = math.sqrt %96 : vector<24x128xf32>
    %cst_11 = arith.constant 9.99999974E-6 : f32
    %98 = vector.broadcast %cst_11 : f32 to vector<24x128xf32>
    %99 = arith.addf %97, %98 : vector<24x128xf32>
    %100 = arith.divf %95, %99 : vector<24x128xf32>
    %cst_12 = arith.constant -0.999989986 : f32
    %cst_13 = arith.constant 0.999989986 : f32
    %101 = vector.broadcast %cst_12 : f32 to vector<24x128xf32>
    %102 = arith.maximumf %101, %100 : vector<24x128xf32>
    %103 = vector.broadcast %cst_13 : f32 to vector<24x128xf32>
    %104 = arith.minimumf %103, %102 : vector<24x128xf32>
    %105 = math.absf %104 : vector<24x128xf32>
    %cst_14 = arith.constant 5.000000e-01 : f32
    %106 = vector.broadcast %cst_14 : f32 to vector<24x128xf32>
    %107 = arith.cmpf ole, %105, %106 : vector<24x128xf32>
    %cst_15 = arith.constant 1.000000e+00 : f32
    %108 = vector.broadcast %cst_15 : f32 to vector<24x128xf32>
    %109 = arith.subf %108, %105 : vector<24x128xf32>
    %cst_16 = arith.constant 5.000000e-01 : f32
    %110 = vector.broadcast %cst_16 : f32 to vector<24x128xf32>
    %111 = arith.mulf %110, %109 : vector<24x128xf32>
    %cst_17 = arith.constant 0.000000e+00 : f32
    %112 = vector.broadcast %cst_17 : f32 to vector<24x128xf32>
    %113 = arith.maximumf %111, %112 : vector<24x128xf32>
    %114 = math.sqrt %113 : vector<24x128xf32>
    %115 = arith.select %107, %104, %114 : vector<24x128xi1>, vector<24x128xf32>
    %116 = arith.mulf %115, %115 : vector<24x128xf32>
    %cst_18 = arith.constant 4.216320e-02 : f32
    %117 = vector.broadcast %cst_18 : f32 to vector<24x128xf32>
    %118 = arith.mulf %117, %116 : vector<24x128xf32>
    %cst_19 = arith.constant 0.024181312 : f32
    %119 = vector.broadcast %cst_19 : f32 to vector<24x128xf32>
    %120 = arith.addf %118, %119 : vector<24x128xf32>
    %121 = arith.mulf %120, %116 : vector<24x128xf32>
    %cst_20 = arith.constant 0.0454700254 : f32
    %122 = vector.broadcast %cst_20 : f32 to vector<24x128xf32>
    %123 = arith.addf %121, %122 : vector<24x128xf32>
    %124 = arith.mulf %123, %116 : vector<24x128xf32>
    %cst_21 = arith.constant 0.0749530047 : f32
    %125 = vector.broadcast %cst_21 : f32 to vector<24x128xf32>
    %126 = arith.addf %124, %125 : vector<24x128xf32>
    %127 = arith.mulf %126, %116 : vector<24x128xf32>
    %cst_22 = arith.constant 0.166667521 : f32
    %128 = vector.broadcast %cst_22 : f32 to vector<24x128xf32>
    %129 = arith.addf %127, %128 : vector<24x128xf32>
    %130 = arith.mulf %115, %116 : vector<24x128xf32>
    %131 = arith.mulf %130, %129 : vector<24x128xf32>
    %132 = arith.addf %115, %131 : vector<24x128xf32>
    %cst_23 = arith.constant 1.57079637 : f32
    %133 = vector.broadcast %cst_23 : f32 to vector<24x128xf32>
    %134 = arith.subf %133, %132 : vector<24x128xf32>
    %cst_24 = arith.constant 2.000000e+00 : f32
    %135 = vector.broadcast %cst_24 : f32 to vector<24x128xf32>
    %136 = arith.mulf %135, %132 : vector<24x128xf32>
    %cst_25 = arith.constant 0.000000e+00 : f32
    %137 = vector.broadcast %cst_25 : f32 to vector<24x128xf32>
    %138 = arith.cmpf olt, %104, %137 : vector<24x128xf32>
    %cst_26 = arith.constant 3.14159274 : f32
    %139 = vector.broadcast %cst_26 : f32 to vector<24x128xf32>
    %140 = arith.subf %139, %136 : vector<24x128xf32>
    %141 = arith.select %138, %140, %136 : vector<24x128xi1>, vector<24x128xf32>
    %142 = arith.select %107, %134, %141 : vector<24x128xi1>, vector<24x128xf32>
    %143 = arith.mulf %74, %142 : vector<24x128xf32>
    %144 = arith.addf %16, %143 : vector<24x128xf32>
    %c1_i32_27 = arith.constant 1 : i32
    %c0_i32_28 = arith.constant 0 : i32
    %145 = arith.addi %15, %c0_i32_28 : i32
    %146 = arith.index_cast %145 : i32 to index
    %147 = arith.index_cast %c1_i32_27 : i32 to index
    %148 = memref.load %arg2[%146, %147] : memref<20x8xf32, #tpu.memory_space<smem>>
    %c1_i32_29 = arith.constant 1 : i32
    %149 = arith.addi %15, %c1_i32_29 : i32
    %150 = arith.index_cast %149 : i32 to index
    %151 = arith.index_cast %c1_i32_27 : i32 to index
    %152 = memref.load %arg2[%150, %151] : memref<20x8xf32, #tpu.memory_space<smem>>
    %c2_i32_30 = arith.constant 2 : i32
    %153 = arith.addi %15, %c2_i32_30 : i32
    %154 = arith.index_cast %153 : i32 to index
    %155 = arith.index_cast %c1_i32_27 : i32 to index
    %156 = memref.load %arg2[%154, %155] : memref<20x8xf32, #tpu.memory_space<smem>>
    %c3_i32_31 = arith.constant 3 : i32
    %157 = arith.addi %15, %c3_i32_31 : i32
    %158 = arith.index_cast %157 : i32 to index
    %159 = arith.index_cast %c1_i32_27 : i32 to index
    %160 = memref.load %arg2[%158, %159] : memref<20x8xf32, #tpu.memory_space<smem>>
    %c4_i32_32 = arith.constant 4 : i32
    %161 = arith.addi %15, %c4_i32_32 : i32
    %162 = arith.index_cast %161 : i32 to index
    %163 = arith.index_cast %c1_i32_27 : i32 to index
    %164 = memref.load %arg2[%162, %163] : memref<20x8xf32, #tpu.memory_space<smem>>
    %c5_i32_33 = arith.constant 5 : i32
    %165 = arith.addi %15, %c5_i32_33 : i32
    %166 = arith.index_cast %165 : i32 to index
    %167 = arith.index_cast %c1_i32_27 : i32 to index
    %168 = memref.load %arg2[%166, %167] : memref<20x8xf32, #tpu.memory_space<smem>>
    %c6_i32_34 = arith.constant 6 : i32
    %169 = arith.addi %15, %c6_i32_34 : i32
    %170 = arith.index_cast %169 : i32 to index
    %171 = arith.index_cast %c1_i32_27 : i32 to index
    %172 = memref.load %arg2[%170, %171] : memref<20x8xf32, #tpu.memory_space<smem>>
    %c7_i32_35 = arith.constant 7 : i32
    %173 = arith.addi %15, %c7_i32_35 : i32
    %174 = arith.index_cast %173 : i32 to index
    %175 = arith.index_cast %c1_i32_27 : i32 to index
    %176 = memref.load %arg2[%174, %175] : memref<20x8xf32, #tpu.memory_space<smem>>
    %c8_i32_36 = arith.constant 8 : i32
    %177 = arith.addi %15, %c8_i32_36 : i32
    %178 = arith.index_cast %177 : i32 to index
    %179 = arith.index_cast %c1_i32_27 : i32 to index
    %180 = memref.load %arg2[%178, %179] : memref<20x8xf32, #tpu.memory_space<smem>>
    %c9_i32_37 = arith.constant 9 : i32
    %181 = arith.addi %15, %c9_i32_37 : i32
    %182 = arith.index_cast %181 : i32 to index
    %183 = arith.index_cast %c1_i32_27 : i32 to index
    %184 = memref.load %arg2[%182, %183] : memref<20x8xf32, #tpu.memory_space<smem>>
    %185 = vector.broadcast %152 : f32 to vector<24x128xf32>
    %186 = arith.mulf %8, %185 : vector<24x128xf32>
    %187 = vector.broadcast %148 : f32 to vector<24x128xf32>
    %188 = arith.addf %187, %186 : vector<24x128xf32>
    %189 = vector.broadcast %156 : f32 to vector<24x128xf32>
    %190 = arith.mulf %11, %189 : vector<24x128xf32>
    %191 = arith.addf %188, %190 : vector<24x128xf32>
    %cst_38 = arith.constant 0.000000e+00 : f32
    %192 = vector.broadcast %cst_38 : f32 to vector<24x128xf32>
    %193 = arith.cmpf ogt, %191, %192 : vector<24x128xf32>
    %cst_39 = arith.constant 1.000000e+00 : f32
    %cst_40 = arith.constant 0.000000e+00 : f32
    %194 = vector.broadcast %cst_39 : f32 to vector<24x128xf32>
    %195 = vector.broadcast %cst_40 : f32 to vector<24x128xf32>
    %196 = arith.select %193, %194, %195 : vector<24x128xi1>, vector<24x128xf32>
    %cst_41 = arith.constant 0.000000e+00 : f32
    %197 = vector.broadcast %cst_41 : f32 to vector<24x128xf32>
    %198 = arith.cmpf olt, %191, %197 : vector<24x128xf32>
    %cst_42 = arith.constant 1.000000e+00 : f32
    %cst_43 = arith.constant 0.000000e+00 : f32
    %199 = vector.broadcast %cst_42 : f32 to vector<24x128xf32>
    %200 = vector.broadcast %cst_43 : f32 to vector<24x128xf32>
    %201 = arith.select %198, %199, %200 : vector<24x128xi1>, vector<24x128xf32>
    %202 = arith.subf %196, %201 : vector<24x128xf32>
    %203 = vector.broadcast %160 : f32 to vector<24x128xf32>
    %204 = arith.addf %14, %203 : vector<24x128xf32>
    %205 = vector.broadcast %172 : f32 to vector<24x128xf32>
    %206 = arith.mulf %8, %205 : vector<24x128xf32>
    %207 = arith.subf %204, %206 : vector<24x128xf32>
    %208 = vector.broadcast %176 : f32 to vector<24x128xf32>
    %209 = arith.mulf %11, %208 : vector<24x128xf32>
    %210 = arith.subf %207, %209 : vector<24x128xf32>
    %211 = vector.broadcast %164 : f32 to vector<24x128xf32>
    %212 = arith.addf %14, %211 : vector<24x128xf32>
    %213 = vector.broadcast %180 : f32 to vector<24x128xf32>
    %214 = arith.mulf %8, %213 : vector<24x128xf32>
    %215 = arith.subf %212, %214 : vector<24x128xf32>
    %216 = vector.broadcast %184 : f32 to vector<24x128xf32>
    %217 = arith.mulf %11, %216 : vector<24x128xf32>
    %218 = arith.subf %215, %217 : vector<24x128xf32>
    %219 = arith.addf %210, %218 : vector<24x128xf32>
    %220 = vector.broadcast %168 : f32 to vector<24x128xf32>
    %221 = arith.subf %219, %220 : vector<24x128xf32>
    %cst_44 = arith.constant 5.000000e-01 : f32
    %222 = vector.broadcast %cst_44 : f32 to vector<24x128xf32>
    %223 = arith.mulf %222, %221 : vector<24x128xf32>
    %224 = arith.mulf %210, %218 : vector<24x128xf32>
    %225 = math.sqrt %224 : vector<24x128xf32>
    %cst_45 = arith.constant 9.99999974E-6 : f32
    %226 = vector.broadcast %cst_45 : f32 to vector<24x128xf32>
    %227 = arith.addf %225, %226 : vector<24x128xf32>
    %228 = arith.divf %223, %227 : vector<24x128xf32>
    %cst_46 = arith.constant -0.999989986 : f32
    %cst_47 = arith.constant 0.999989986 : f32
    %229 = vector.broadcast %cst_46 : f32 to vector<24x128xf32>
    %230 = arith.maximumf %229, %228 : vector<24x128xf32>
    %231 = vector.broadcast %cst_47 : f32 to vector<24x128xf32>
    %232 = arith.minimumf %231, %230 : vector<24x128xf32>
    %233 = math.absf %232 : vector<24x128xf32>
    %cst_48 = arith.constant 5.000000e-01 : f32
    %234 = vector.broadcast %cst_48 : f32 to vector<24x128xf32>
    %235 = arith.cmpf ole, %233, %234 : vector<24x128xf32>
    %cst_49 = arith.constant 1.000000e+00 : f32
    %236 = vector.broadcast %cst_49 : f32 to vector<24x128xf32>
    %237 = arith.subf %236, %233 : vector<24x128xf32>
    %cst_50 = arith.constant 5.000000e-01 : f32
    %238 = vector.broadcast %cst_50 : f32 to vector<24x128xf32>
    %239 = arith.mulf %238, %237 : vector<24x128xf32>
    %cst_51 = arith.constant 0.000000e+00 : f32
    %240 = vector.broadcast %cst_51 : f32 to vector<24x128xf32>
    %241 = arith.maximumf %239, %240 : vector<24x128xf32>
    %242 = math.sqrt %241 : vector<24x128xf32>
    %243 = arith.select %235, %232, %242 : vector<24x128xi1>, vector<24x128xf32>
    %244 = arith.mulf %243, %243 : vector<24x128xf32>
    %cst_52 = arith.constant 4.216320e-02 : f32
    %245 = vector.broadcast %cst_52 : f32 to vector<24x128xf32>
    %246 = arith.mulf %245, %244 : vector<24x128xf32>
    %cst_53 = arith.constant 0.024181312 : f32
    %247 = vector.broadcast %cst_53 : f32 to vector<24x128xf32>
    %248 = arith.addf %246, %247 : vector<24x128xf32>
    %249 = arith.mulf %248, %244 : vector<24x128xf32>
    %cst_54 = arith.constant 0.0454700254 : f32
    %250 = vector.broadcast %cst_54 : f32 to vector<24x128xf32>
    %251 = arith.addf %249, %250 : vector<24x128xf32>
    %252 = arith.mulf %251, %244 : vector<24x128xf32>
    %cst_55 = arith.constant 0.0749530047 : f32
    %253 = vector.broadcast %cst_55 : f32 to vector<24x128xf32>
    %254 = arith.addf %252, %253 : vector<24x128xf32>
    %255 = arith.mulf %254, %244 : vector<24x128xf32>
    %cst_56 = arith.constant 0.166667521 : f32
    %256 = vector.broadcast %cst_56 : f32 to vector<24x128xf32>
    %257 = arith.addf %255, %256 : vector<24x128xf32>
    %258 = arith.mulf %243, %244 : vector<24x128xf32>
    %259 = arith.mulf %258, %257 : vector<24x128xf32>
    %260 = arith.addf %243, %259 : vector<24x128xf32>
    %cst_57 = arith.constant 1.57079637 : f32
    %261 = vector.broadcast %cst_57 : f32 to vector<24x128xf32>
    %262 = arith.subf %261, %260 : vector<24x128xf32>
    %cst_58 = arith.constant 2.000000e+00 : f32
    %263 = vector.broadcast %cst_58 : f32 to vector<24x128xf32>
    %264 = arith.mulf %263, %260 : vector<24x128xf32>
    %cst_59 = arith.constant 0.000000e+00 : f32
    %265 = vector.broadcast %cst_59 : f32 to vector<24x128xf32>
    %266 = arith.cmpf olt, %232, %265 : vector<24x128xf32>
    %cst_60 = arith.constant 3.14159274 : f32
    %267 = vector.broadcast %cst_60 : f32 to vector<24x128xf32>
    %268 = arith.subf %267, %264 : vector<24x128xf32>
    %269 = arith.select %266, %268, %264 : vector<24x128xi1>, vector<24x128xf32>
    %270 = arith.select %235, %262, %269 : vector<24x128xi1>, vector<24x128xf32>
    %271 = arith.mulf %202, %270 : vector<24x128xf32>
    %272 = arith.addf %144, %271 : vector<24x128xf32>
    %c2_i32_61 = arith.constant 2 : i32
    %c0_i32_62 = arith.constant 0 : i32
    %273 = arith.addi %15, %c0_i32_62 : i32
    %274 = arith.index_cast %273 : i32 to index
    %275 = arith.index_cast %c2_i32_61 : i32 to index
    %276 = memref.load %arg2[%274, %275] : memref<20x8xf32, #tpu.memory_space<smem>>
    %c1_i32_63 = arith.constant 1 : i32
    %277 = arith.addi %15, %c1_i32_63 : i32
    %278 = arith.index_cast %277 : i32 to index
    %279 = arith.index_cast %c2_i32_61 : i32 to index
    %280 = memref.load %arg2[%278, %279] : memref<20x8xf32, #tpu.memory_space<smem>>
    %c2_i32_64 = arith.constant 2 : i32
    %281 = arith.addi %15, %c2_i32_64 : i32
    %282 = arith.index_cast %281 : i32 to index
    %283 = arith.index_cast %c2_i32_61 : i32 to index
    %284 = memref.load %arg2[%282, %283] : memref<20x8xf32, #tpu.memory_space<smem>>
    %c3_i32_65 = arith.constant 3 : i32
    %285 = arith.addi %15, %c3_i32_65 : i32
    %286 = arith.index_cast %285 : i32 to index
    %287 = arith.index_cast %c2_i32_61 : i32 to index
    %288 = memref.load %arg2[%286, %287] : memref<20x8xf32, #tpu.memory_space<smem>>
    %c4_i32_66 = arith.constant 4 : i32
    %289 = arith.addi %15, %c4_i32_66 : i32
    %290 = arith.index_cast %289 : i32 to index
    %291 = arith.index_cast %c2_i32_61 : i32 to index
    %292 = memref.load %arg2[%290, %291] : memref<20x8xf32, #tpu.memory_space<smem>>
    %c5_i32_67 = arith.constant 5 : i32
    %293 = arith.addi %15, %c5_i32_67 : i32
    %294 = arith.index_cast %293 : i32 to index
    %295 = arith.index_cast %c2_i32_61 : i32 to index
    %296 = memref.load %arg2[%294, %295] : memref<20x8xf32, #tpu.memory_space<smem>>
    %c6_i32_68 = arith.constant 6 : i32
    %297 = arith.addi %15, %c6_i32_68 : i32
    %298 = arith.index_cast %297 : i32 to index
    %299 = arith.index_cast %c2_i32_61 : i32 to index
    %300 = memref.load %arg2[%298, %299] : memref<20x8xf32, #tpu.memory_space<smem>>
    %c7_i32_69 = arith.constant 7 : i32
    %301 = arith.addi %15, %c7_i32_69 : i32
    %302 = arith.index_cast %301 : i32 to index
    %303 = arith.index_cast %c2_i32_61 : i32 to index
    %304 = memref.load %arg2[%302, %303] : memref<20x8xf32, #tpu.memory_space<smem>>
    %c8_i32_70 = arith.constant 8 : i32
    %305 = arith.addi %15, %c8_i32_70 : i32
    %306 = arith.index_cast %305 : i32 to index
    %307 = arith.index_cast %c2_i32_61 : i32 to index
    %308 = memref.load %arg2[%306, %307] : memref<20x8xf32, #tpu.memory_space<smem>>
    %c9_i32_71 = arith.constant 9 : i32
    %309 = arith.addi %15, %c9_i32_71 : i32
    %310 = arith.index_cast %309 : i32 to index
    %311 = arith.index_cast %c2_i32_61 : i32 to index
    %312 = memref.load %arg2[%310, %311] : memref<20x8xf32, #tpu.memory_space<smem>>
    %313 = vector.broadcast %280 : f32 to vector<24x128xf32>
    %314 = arith.mulf %8, %313 : vector<24x128xf32>
    %315 = vector.broadcast %276 : f32 to vector<24x128xf32>
    %316 = arith.addf %315, %314 : vector<24x128xf32>
    %317 = vector.broadcast %284 : f32 to vector<24x128xf32>
    %318 = arith.mulf %11, %317 : vector<24x128xf32>
    %319 = arith.addf %316, %318 : vector<24x128xf32>
    %cst_72 = arith.constant 0.000000e+00 : f32
    %320 = vector.broadcast %cst_72 : f32 to vector<24x128xf32>
    %321 = arith.cmpf ogt, %319, %320 : vector<24x128xf32>
    %cst_73 = arith.constant 1.000000e+00 : f32
    %cst_74 = arith.constant 0.000000e+00 : f32
    %322 = vector.broadcast %cst_73 : f32 to vector<24x128xf32>
    %323 = vector.broadcast %cst_74 : f32 to vector<24x128xf32>
    %324 = arith.select %321, %322, %323 : vector<24x128xi1>, vector<24x128xf32>
    %cst_75 = arith.constant 0.000000e+00 : f32
    %325 = vector.broadcast %cst_75 : f32 to vector<24x128xf32>
    %326 = arith.cmpf olt, %319, %325 : vector<24x128xf32>
    %cst_76 = arith.constant 1.000000e+00 : f32
    %cst_77 = arith.constant 0.000000e+00 : f32
    %327 = vector.broadcast %cst_76 : f32 to vector<24x128xf32>
    %328 = vector.broadcast %cst_77 : f32 to vector<24x128xf32>
    %329 = arith.select %326, %327, %328 : vector<24x128xi1>, vector<24x128xf32>
    %330 = arith.subf %324, %329 : vector<24x128xf32>
    %331 = vector.broadcast %288 : f32 to vector<24x128xf32>
    %332 = arith.addf %14, %331 : vector<24x128xf32>
    %333 = vector.broadcast %300 : f32 to vector<24x128xf32>
    %334 = arith.mulf %8, %333 : vector<24x128xf32>
    %335 = arith.subf %332, %334 : vector<24x128xf32>
    %336 = vector.broadcast %304 : f32 to vector<24x128xf32>
    %337 = arith.mulf %11, %336 : vector<24x128xf32>
    %338 = arith.subf %335, %337 : vector<24x128xf32>
    %339 = vector.broadcast %292 : f32 to vector<24x128xf32>
    %340 = arith.addf %14, %339 : vector<24x128xf32>
    %341 = vector.broadcast %308 : f32 to vector<24x128xf32>
    %342 = arith.mulf %8, %341 : vector<24x128xf32>
    %343 = arith.subf %340, %342 : vector<24x128xf32>
    %344 = vector.broadcast %312 : f32 to vector<24x128xf32>
    %345 = arith.mulf %11, %344 : vector<24x128xf32>
    %346 = arith.subf %343, %345 : vector<24x128xf32>
    %347 = arith.addf %338, %346 : vector<24x128xf32>
    %348 = vector.broadcast %296 : f32 to vector<24x128xf32>
    %349 = arith.subf %347, %348 : vector<24x128xf32>
    %cst_78 = arith.constant 5.000000e-01 : f32
    %350 = vector.broadcast %cst_78 : f32 to vector<24x128xf32>
    %351 = arith.mulf %350, %349 : vector<24x128xf32>
    %352 = arith.mulf %338, %346 : vector<24x128xf32>
    %353 = math.sqrt %352 : vector<24x128xf32>
    %cst_79 = arith.constant 9.99999974E-6 : f32
    %354 = vector.broadcast %cst_79 : f32 to vector<24x128xf32>
    %355 = arith.addf %353, %354 : vector<24x128xf32>
    %356 = arith.divf %351, %355 : vector<24x128xf32>
    %cst_80 = arith.constant -0.999989986 : f32
    %cst_81 = arith.constant 0.999989986 : f32
    %357 = vector.broadcast %cst_80 : f32 to vector<24x128xf32>
    %358 = arith.maximumf %357, %356 : vector<24x128xf32>
    %359 = vector.broadcast %cst_81 : f32 to vector<24x128xf32>
    %360 = arith.minimumf %359, %358 : vector<24x128xf32>
    %361 = math.absf %360 : vector<24x128xf32>
    %cst_82 = arith.constant 5.000000e-01 : f32
    %362 = vector.broadcast %cst_82 : f32 to vector<24x128xf32>
    %363 = arith.cmpf ole, %361, %362 : vector<24x128xf32>
    %cst_83 = arith.constant 1.000000e+00 : f32
    %364 = vector.broadcast %cst_83 : f32 to vector<24x128xf32>
    %365 = arith.subf %364, %361 : vector<24x128xf32>
    %cst_84 = arith.constant 5.000000e-01 : f32
    %366 = vector.broadcast %cst_84 : f32 to vector<24x128xf32>
    %367 = arith.mulf %366, %365 : vector<24x128xf32>
    %cst_85 = arith.constant 0.000000e+00 : f32
    %368 = vector.broadcast %cst_85 : f32 to vector<24x128xf32>
    %369 = arith.maximumf %367, %368 : vector<24x128xf32>
    %370 = math.sqrt %369 : vector<24x128xf32>
    %371 = arith.select %363, %360, %370 : vector<24x128xi1>, vector<24x128xf32>
    %372 = arith.mulf %371, %371 : vector<24x128xf32>
    %cst_86 = arith.constant 4.216320e-02 : f32
    %373 = vector.broadcast %cst_86 : f32 to vector<24x128xf32>
    %374 = arith.mulf %373, %372 : vector<24x128xf32>
    %cst_87 = arith.constant 0.024181312 : f32
    %375 = vector.broadcast %cst_87 : f32 to vector<24x128xf32>
    %376 = arith.addf %374, %375 : vector<24x128xf32>
    %377 = arith.mulf %376, %372 : vector<24x128xf32>
    %cst_88 = arith.constant 0.0454700254 : f32
    %378 = vector.broadcast %cst_88 : f32 to vector<24x128xf32>
    %379 = arith.addf %377, %378 : vector<24x128xf32>
    %380 = arith.mulf %379, %372 : vector<24x128xf32>
    %cst_89 = arith.constant 0.0749530047 : f32
    %381 = vector.broadcast %cst_89 : f32 to vector<24x128xf32>
    %382 = arith.addf %380, %381 : vector<24x128xf32>
    %383 = arith.mulf %382, %372 : vector<24x128xf32>
    %cst_90 = arith.constant 0.166667521 : f32
    %384 = vector.broadcast %cst_90 : f32 to vector<24x128xf32>
    %385 = arith.addf %383, %384 : vector<24x128xf32>
    %386 = arith.mulf %371, %372 : vector<24x128xf32>
    %387 = arith.mulf %386, %385 : vector<24x128xf32>
    %388 = arith.addf %371, %387 : vector<24x128xf32>
    %cst_91 = arith.constant 1.57079637 : f32
    %389 = vector.broadcast %cst_91 : f32 to vector<24x128xf32>
    %390 = arith.subf %389, %388 : vector<24x128xf32>
    %cst_92 = arith.constant 2.000000e+00 : f32
    %391 = vector.broadcast %cst_92 : f32 to vector<24x128xf32>
    %392 = arith.mulf %391, %388 : vector<24x128xf32>
    %cst_93 = arith.constant 0.000000e+00 : f32
    %393 = vector.broadcast %cst_93 : f32 to vector<24x128xf32>
    %394 = arith.cmpf olt, %360, %393 : vector<24x128xf32>
    %cst_94 = arith.constant 3.14159274 : f32
    %395 = vector.broadcast %cst_94 : f32 to vector<24x128xf32>
    %396 = arith.subf %395, %392 : vector<24x128xf32>
    %397 = arith.select %394, %396, %392 : vector<24x128xi1>, vector<24x128xf32>
    %398 = arith.select %363, %390, %397 : vector<24x128xi1>, vector<24x128xf32>
    %399 = arith.mulf %330, %398 : vector<24x128xf32>
    %400 = arith.addf %272, %399 : vector<24x128xf32>
    %c3_i32_95 = arith.constant 3 : i32
    %c0_i32_96 = arith.constant 0 : i32
    %401 = arith.addi %15, %c0_i32_96 : i32
    %402 = arith.index_cast %401 : i32 to index
    %403 = arith.index_cast %c3_i32_95 : i32 to index
    %404 = memref.load %arg2[%402, %403] : memref<20x8xf32, #tpu.memory_space<smem>>
    %c1_i32_97 = arith.constant 1 : i32
    %405 = arith.addi %15, %c1_i32_97 : i32
    %406 = arith.index_cast %405 : i32 to index
    %407 = arith.index_cast %c3_i32_95 : i32 to index
    %408 = memref.load %arg2[%406, %407] : memref<20x8xf32, #tpu.memory_space<smem>>
    %c2_i32_98 = arith.constant 2 : i32
    %409 = arith.addi %15, %c2_i32_98 : i32
    %410 = arith.index_cast %409 : i32 to index
    %411 = arith.index_cast %c3_i32_95 : i32 to index
    %412 = memref.load %arg2[%410, %411] : memref<20x8xf32, #tpu.memory_space<smem>>
    %c3_i32_99 = arith.constant 3 : i32
    %413 = arith.addi %15, %c3_i32_99 : i32
    %414 = arith.index_cast %413 : i32 to index
    %415 = arith.index_cast %c3_i32_95 : i32 to index
    %416 = memref.load %arg2[%414, %415] : memref<20x8xf32, #tpu.memory_space<smem>>
    %c4_i32_100 = arith.constant 4 : i32
    %417 = arith.addi %15, %c4_i32_100 : i32
    %418 = arith.index_cast %417 : i32 to index
    %419 = arith.index_cast %c3_i32_95 : i32 to index
    %420 = memref.load %arg2[%418, %419] : memref<20x8xf32, #tpu.memory_space<smem>>
    %c5_i32_101 = arith.constant 5 : i32
    %421 = arith.addi %15, %c5_i32_101 : i32
    %422 = arith.index_cast %421 : i32 to index
    %423 = arith.index_cast %c3_i32_95 : i32 to index
    %424 = memref.load %arg2[%422, %423] : memref<20x8xf32, #tpu.memory_space<smem>>
    %c6_i32_102 = arith.constant 6 : i32
    %425 = arith.addi %15, %c6_i32_102 : i32
    %426 = arith.index_cast %425 : i32 to index
    %427 = arith.index_cast %c3_i32_95 : i32 to index
    %428 = memref.load %arg2[%426, %427] : memref<20x8xf32, #tpu.memory_space<smem>>
    %c7_i32_103 = arith.constant 7 : i32
    %429 = arith.addi %15, %c7_i32_103 : i32
    %430 = arith.index_cast %429 : i32 to index
    %431 = arith.index_cast %c3_i32_95 : i32 to index
    %432 = memref.load %arg2[%430, %431] : memref<20x8xf32, #tpu.memory_space<smem>>
    %c8_i32_104 = arith.constant 8 : i32
    %433 = arith.addi %15, %c8_i32_104 : i32
    %434 = arith.index_cast %433 : i32 to index
    %435 = arith.index_cast %c3_i32_95 : i32 to index
    %436 = memref.load %arg2[%434, %435] : memref<20x8xf32, #tpu.memory_space<smem>>
    %c9_i32_105 = arith.constant 9 : i32
    %437 = arith.addi %15, %c9_i32_105 : i32
    %438 = arith.index_cast %437 : i32 to index
    %439 = arith.index_cast %c3_i32_95 : i32 to index
    %440 = memref.load %arg2[%438, %439] : memref<20x8xf32, #tpu.memory_space<smem>>
    %441 = vector.broadcast %408 : f32 to vector<24x128xf32>
    %442 = arith.mulf %8, %441 : vector<24x128xf32>
    %443 = vector.broadcast %404 : f32 to vector<24x128xf32>
    %444 = arith.addf %443, %442 : vector<24x128xf32>
    %445 = vector.broadcast %412 : f32 to vector<24x128xf32>
    %446 = arith.mulf %11, %445 : vector<24x128xf32>
    %447 = arith.addf %444, %446 : vector<24x128xf32>
    %cst_106 = arith.constant 0.000000e+00 : f32
    %448 = vector.broadcast %cst_106 : f32 to vector<24x128xf32>
    %449 = arith.cmpf ogt, %447, %448 : vector<24x128xf32>
    %cst_107 = arith.constant 1.000000e+00 : f32
    %cst_108 = arith.constant 0.000000e+00 : f32
    %450 = vector.broadcast %cst_107 : f32 to vector<24x128xf32>
    %451 = vector.broadcast %cst_108 : f32 to vector<24x128xf32>
    %452 = arith.select %449, %450, %451 : vector<24x128xi1>, vector<24x128xf32>
    %cst_109 = arith.constant 0.000000e+00 : f32
    %453 = vector.broadcast %cst_109 : f32 to vector<24x128xf32>
    %454 = arith.cmpf olt, %447, %453 : vector<24x128xf32>
    %cst_110 = arith.constant 1.000000e+00 : f32
    %cst_111 = arith.constant 0.000000e+00 : f32
    %455 = vector.broadcast %cst_110 : f32 to vector<24x128xf32>
    %456 = vector.broadcast %cst_111 : f32 to vector<24x128xf32>
    %457 = arith.select %454, %455, %456 : vector<24x128xi1>, vector<24x128xf32>
    %458 = arith.subf %452, %457 : vector<24x128xf32>
    %459 = vector.broadcast %416 : f32 to vector<24x128xf32>
    %460 = arith.addf %14, %459 : vector<24x128xf32>
    %461 = vector.broadcast %428 : f32 to vector<24x128xf32>
    %462 = arith.mulf %8, %461 : vector<24x128xf32>
    %463 = arith.subf %460, %462 : vector<24x128xf32>
    %464 = vector.broadcast %432 : f32 to vector<24x128xf32>
    %465 = arith.mulf %11, %464 : vector<24x128xf32>
    %466 = arith.subf %463, %465 : vector<24x128xf32>
    %467 = vector.broadcast %420 : f32 to vector<24x128xf32>
    %468 = arith.addf %14, %467 : vector<24x128xf32>
    %469 = vector.broadcast %436 : f32 to vector<24x128xf32>
    %470 = arith.mulf %8, %469 : vector<24x128xf32>
    %471 = arith.subf %468, %470 : vector<24x128xf32>
    %472 = vector.broadcast %440 : f32 to vector<24x128xf32>
    %473 = arith.mulf %11, %472 : vector<24x128xf32>
    %474 = arith.subf %471, %473 : vector<24x128xf32>
    %475 = arith.addf %466, %474 : vector<24x128xf32>
    %476 = vector.broadcast %424 : f32 to vector<24x128xf32>
    %477 = arith.subf %475, %476 : vector<24x128xf32>
    %cst_112 = arith.constant 5.000000e-01 : f32
    %478 = vector.broadcast %cst_112 : f32 to vector<24x128xf32>
    %479 = arith.mulf %478, %477 : vector<24x128xf32>
    %480 = arith.mulf %466, %474 : vector<24x128xf32>
    %481 = math.sqrt %480 : vector<24x128xf32>
    %cst_113 = arith.constant 9.99999974E-6 : f32
    %482 = vector.broadcast %cst_113 : f32 to vector<24x128xf32>
    %483 = arith.addf %481, %482 : vector<24x128xf32>
    %484 = arith.divf %479, %483 : vector<24x128xf32>
    %cst_114 = arith.constant -0.999989986 : f32
    %cst_115 = arith.constant 0.999989986 : f32
    %485 = vector.broadcast %cst_114 : f32 to vector<24x128xf32>
    %486 = arith.maximumf %485, %484 : vector<24x128xf32>
    %487 = vector.broadcast %cst_115 : f32 to vector<24x128xf32>
    %488 = arith.minimumf %487, %486 : vector<24x128xf32>
    %489 = math.absf %488 : vector<24x128xf32>
    %cst_116 = arith.constant 5.000000e-01 : f32
    %490 = vector.broadcast %cst_116 : f32 to vector<24x128xf32>
    %491 = arith.cmpf ole, %489, %490 : vector<24x128xf32>
    %cst_117 = arith.constant 1.000000e+00 : f32
    %492 = vector.broadcast %cst_117 : f32 to vector<24x128xf32>
    %493 = arith.subf %492, %489 : vector<24x128xf32>
    %cst_118 = arith.constant 5.000000e-01 : f32
    %494 = vector.broadcast %cst_118 : f32 to vector<24x128xf32>
    %495 = arith.mulf %494, %493 : vector<24x128xf32>
    %cst_119 = arith.constant 0.000000e+00 : f32
    %496 = vector.broadcast %cst_119 : f32 to vector<24x128xf32>
    %497 = arith.maximumf %495, %496 : vector<24x128xf32>
    %498 = math.sqrt %497 : vector<24x128xf32>
    %499 = arith.select %491, %488, %498 : vector<24x128xi1>, vector<24x128xf32>
    %500 = arith.mulf %499, %499 : vector<24x128xf32>
    %cst_120 = arith.constant 4.216320e-02 : f32
    %501 = vector.broadcast %cst_120 : f32 to vector<24x128xf32>
    %502 = arith.mulf %501, %500 : vector<24x128xf32>
    %cst_121 = arith.constant 0.024181312 : f32
    %503 = vector.broadcast %cst_121 : f32 to vector<24x128xf32>
    %504 = arith.addf %502, %503 : vector<24x128xf32>
    %505 = arith.mulf %504, %500 : vector<24x128xf32>
    %cst_122 = arith.constant 0.0454700254 : f32
    %506 = vector.broadcast %cst_122 : f32 to vector<24x128xf32>
    %507 = arith.addf %505, %506 : vector<24x128xf32>
    %508 = arith.mulf %507, %500 : vector<24x128xf32>
    %cst_123 = arith.constant 0.0749530047 : f32
    %509 = vector.broadcast %cst_123 : f32 to vector<24x128xf32>
    %510 = arith.addf %508, %509 : vector<24x128xf32>
    %511 = arith.mulf %510, %500 : vector<24x128xf32>
    %cst_124 = arith.constant 0.166667521 : f32
    %512 = vector.broadcast %cst_124 : f32 to vector<24x128xf32>
    %513 = arith.addf %511, %512 : vector<24x128xf32>
    %514 = arith.mulf %499, %500 : vector<24x128xf32>
    %515 = arith.mulf %514, %513 : vector<24x128xf32>
    %516 = arith.addf %499, %515 : vector<24x128xf32>
    %cst_125 = arith.constant 1.57079637 : f32
    %517 = vector.broadcast %cst_125 : f32 to vector<24x128xf32>
    %518 = arith.subf %517, %516 : vector<24x128xf32>
    %cst_126 = arith.constant 2.000000e+00 : f32
    %519 = vector.broadcast %cst_126 : f32 to vector<24x128xf32>
    %520 = arith.mulf %519, %516 : vector<24x128xf32>
    %cst_127 = arith.constant 0.000000e+00 : f32
    %521 = vector.broadcast %cst_127 : f32 to vector<24x128xf32>
    %522 = arith.cmpf olt, %488, %521 : vector<24x128xf32>
    %cst_128 = arith.constant 3.14159274 : f32
    %523 = vector.broadcast %cst_128 : f32 to vector<24x128xf32>
    %524 = arith.subf %523, %520 : vector<24x128xf32>
    %525 = arith.select %522, %524, %520 : vector<24x128xi1>, vector<24x128xf32>
    %526 = arith.select %491, %518, %525 : vector<24x128xi1>, vector<24x128xf32>
    %527 = arith.mulf %458, %526 : vector<24x128xf32>
    %528 = arith.addf %400, %527 : vector<24x128xf32>
    %c4_i32_129 = arith.constant 4 : i32
    %c0_i32_130 = arith.constant 0 : i32
    %529 = arith.addi %15, %c0_i32_130 : i32
    %530 = arith.index_cast %529 : i32 to index
    %531 = arith.index_cast %c4_i32_129 : i32 to index
    %532 = memref.load %arg2[%530, %531] : memref<20x8xf32, #tpu.memory_space<smem>>
    %c1_i32_131 = arith.constant 1 : i32
    %533 = arith.addi %15, %c1_i32_131 : i32
    %534 = arith.index_cast %533 : i32 to index
    %535 = arith.index_cast %c4_i32_129 : i32 to index
    %536 = memref.load %arg2[%534, %535] : memref<20x8xf32, #tpu.memory_space<smem>>
    %c2_i32_132 = arith.constant 2 : i32
    %537 = arith.addi %15, %c2_i32_132 : i32
    %538 = arith.index_cast %537 : i32 to index
    %539 = arith.index_cast %c4_i32_129 : i32 to index
    %540 = memref.load %arg2[%538, %539] : memref<20x8xf32, #tpu.memory_space<smem>>
    %c3_i32_133 = arith.constant 3 : i32
    %541 = arith.addi %15, %c3_i32_133 : i32
    %542 = arith.index_cast %541 : i32 to index
    %543 = arith.index_cast %c4_i32_129 : i32 to index
    %544 = memref.load %arg2[%542, %543] : memref<20x8xf32, #tpu.memory_space<smem>>
    %c4_i32_134 = arith.constant 4 : i32
    %545 = arith.addi %15, %c4_i32_134 : i32
    %546 = arith.index_cast %545 : i32 to index
    %547 = arith.index_cast %c4_i32_129 : i32 to index
    %548 = memref.load %arg2[%546, %547] : memref<20x8xf32, #tpu.memory_space<smem>>
    %c5_i32_135 = arith.constant 5 : i32
    %549 = arith.addi %15, %c5_i32_135 : i32
    %550 = arith.index_cast %549 : i32 to index
    %551 = arith.index_cast %c4_i32_129 : i32 to index
    %552 = memref.load %arg2[%550, %551] : memref<20x8xf32, #tpu.memory_space<smem>>
    %c6_i32_136 = arith.constant 6 : i32
    %553 = arith.addi %15, %c6_i32_136 : i32
    %554 = arith.index_cast %553 : i32 to index
    %555 = arith.index_cast %c4_i32_129 : i32 to index
    %556 = memref.load %arg2[%554, %555] : memref<20x8xf32, #tpu.memory_space<smem>>
    %c7_i32_137 = arith.constant 7 : i32
    %557 = arith.addi %15, %c7_i32_137 : i32
    %558 = arith.index_cast %557 : i32 to index
    %559 = arith.index_cast %c4_i32_129 : i32 to index
    %560 = memref.load %arg2[%558, %559] : memref<20x8xf32, #tpu.memory_space<smem>>
    %c8_i32_138 = arith.constant 8 : i32
    %561 = arith.addi %15, %c8_i32_138 : i32
    %562 = arith.index_cast %561 : i32 to index
    %563 = arith.index_cast %c4_i32_129 : i32 to index
    %564 = memref.load %arg2[%562, %563] : memref<20x8xf32, #tpu.memory_space<smem>>
    %c9_i32_139 = arith.constant 9 : i32
    %565 = arith.addi %15, %c9_i32_139 : i32
    %566 = arith.index_cast %565 : i32 to index
    %567 = arith.index_cast %c4_i32_129 : i32 to index
    %568 = memref.load %arg2[%566, %567] : memref<20x8xf32, #tpu.memory_space<smem>>
    %569 = vector.broadcast %536 : f32 to vector<24x128xf32>
    %570 = arith.mulf %8, %569 : vector<24x128xf32>
    %571 = vector.broadcast %532 : f32 to vector<24x128xf32>
    %572 = arith.addf %571, %570 : vector<24x128xf32>
    %573 = vector.broadcast %540 : f32 to vector<24x128xf32>
    %574 = arith.mulf %11, %573 : vector<24x128xf32>
    %575 = arith.addf %572, %574 : vector<24x128xf32>
    %cst_140 = arith.constant 0.000000e+00 : f32
    %576 = vector.broadcast %cst_140 : f32 to vector<24x128xf32>
    %577 = arith.cmpf ogt, %575, %576 : vector<24x128xf32>
    %cst_141 = arith.constant 1.000000e+00 : f32
    %cst_142 = arith.constant 0.000000e+00 : f32
    %578 = vector.broadcast %cst_141 : f32 to vector<24x128xf32>
    %579 = vector.broadcast %cst_142 : f32 to vector<24x128xf32>
    %580 = arith.select %577, %578, %579 : vector<24x128xi1>, vector<24x128xf32>
    %cst_143 = arith.constant 0.000000e+00 : f32
    %581 = vector.broadcast %cst_143 : f32 to vector<24x128xf32>
    %582 = arith.cmpf olt, %575, %581 : vector<24x128xf32>
    %cst_144 = arith.constant 1.000000e+00 : f32
    %cst_145 = arith.constant 0.000000e+00 : f32
    %583 = vector.broadcast %cst_144 : f32 to vector<24x128xf32>
    %584 = vector.broadcast %cst_145 : f32 to vector<24x128xf32>
    %585 = arith.select %582, %583, %584 : vector<24x128xi1>, vector<24x128xf32>
    %586 = arith.subf %580, %585 : vector<24x128xf32>
    %587 = vector.broadcast %544 : f32 to vector<24x128xf32>
    %588 = arith.addf %14, %587 : vector<24x128xf32>
    %589 = vector.broadcast %556 : f32 to vector<24x128xf32>
    %590 = arith.mulf %8, %589 : vector<24x128xf32>
    %591 = arith.subf %588, %590 : vector<24x128xf32>
    %592 = vector.broadcast %560 : f32 to vector<24x128xf32>
    %593 = arith.mulf %11, %592 : vector<24x128xf32>
    %594 = arith.subf %591, %593 : vector<24x128xf32>
    %595 = vector.broadcast %548 : f32 to vector<24x128xf32>
    %596 = arith.addf %14, %595 : vector<24x128xf32>
    %597 = vector.broadcast %564 : f32 to vector<24x128xf32>
    %598 = arith.mulf %8, %597 : vector<24x128xf32>
    %599 = arith.subf %596, %598 : vector<24x128xf32>
    %600 = vector.broadcast %568 : f32 to vector<24x128xf32>
    %601 = arith.mulf %11, %600 : vector<24x128xf32>
    %602 = arith.subf %599, %601 : vector<24x128xf32>
    %603 = arith.addf %594, %602 : vector<24x128xf32>
    %604 = vector.broadcast %552 : f32 to vector<24x128xf32>
    %605 = arith.subf %603, %604 : vector<24x128xf32>
    %cst_146 = arith.constant 5.000000e-01 : f32
    %606 = vector.broadcast %cst_146 : f32 to vector<24x128xf32>
    %607 = arith.mulf %606, %605 : vector<24x128xf32>
    %608 = arith.mulf %594, %602 : vector<24x128xf32>
    %609 = math.sqrt %608 : vector<24x128xf32>
    %cst_147 = arith.constant 9.99999974E-6 : f32
    %610 = vector.broadcast %cst_147 : f32 to vector<24x128xf32>
    %611 = arith.addf %609, %610 : vector<24x128xf32>
    %612 = arith.divf %607, %611 : vector<24x128xf32>
    %cst_148 = arith.constant -0.999989986 : f32
    %cst_149 = arith.constant 0.999989986 : f32
    %613 = vector.broadcast %cst_148 : f32 to vector<24x128xf32>
    %614 = arith.maximumf %613, %612 : vector<24x128xf32>
    %615 = vector.broadcast %cst_149 : f32 to vector<24x128xf32>
    %616 = arith.minimumf %615, %614 : vector<24x128xf32>
    %617 = math.absf %616 : vector<24x128xf32>
    %cst_150 = arith.constant 5.000000e-01 : f32
    %618 = vector.broadcast %cst_150 : f32 to vector<24x128xf32>
    %619 = arith.cmpf ole, %617, %618 : vector<24x128xf32>
    %cst_151 = arith.constant 1.000000e+00 : f32
    %620 = vector.broadcast %cst_151 : f32 to vector<24x128xf32>
    %621 = arith.subf %620, %617 : vector<24x128xf32>
    %cst_152 = arith.constant 5.000000e-01 : f32
    %622 = vector.broadcast %cst_152 : f32 to vector<24x128xf32>
    %623 = arith.mulf %622, %621 : vector<24x128xf32>
    %cst_153 = arith.constant 0.000000e+00 : f32
    %624 = vector.broadcast %cst_153 : f32 to vector<24x128xf32>
    %625 = arith.maximumf %623, %624 : vector<24x128xf32>
    %626 = math.sqrt %625 : vector<24x128xf32>
    %627 = arith.select %619, %616, %626 : vector<24x128xi1>, vector<24x128xf32>
    %628 = arith.mulf %627, %627 : vector<24x128xf32>
    %cst_154 = arith.constant 4.216320e-02 : f32
    %629 = vector.broadcast %cst_154 : f32 to vector<24x128xf32>
    %630 = arith.mulf %629, %628 : vector<24x128xf32>
    %cst_155 = arith.constant 0.024181312 : f32
    %631 = vector.broadcast %cst_155 : f32 to vector<24x128xf32>
    %632 = arith.addf %630, %631 : vector<24x128xf32>
    %633 = arith.mulf %632, %628 : vector<24x128xf32>
    %cst_156 = arith.constant 0.0454700254 : f32
    %634 = vector.broadcast %cst_156 : f32 to vector<24x128xf32>
    %635 = arith.addf %633, %634 : vector<24x128xf32>
    %636 = arith.mulf %635, %628 : vector<24x128xf32>
    %cst_157 = arith.constant 0.0749530047 : f32
    %637 = vector.broadcast %cst_157 : f32 to vector<24x128xf32>
    %638 = arith.addf %636, %637 : vector<24x128xf32>
    %639 = arith.mulf %638, %628 : vector<24x128xf32>
    %cst_158 = arith.constant 0.166667521 : f32
    %640 = vector.broadcast %cst_158 : f32 to vector<24x128xf32>
    %641 = arith.addf %639, %640 : vector<24x128xf32>
    %642 = arith.mulf %627, %628 : vector<24x128xf32>
    %643 = arith.mulf %642, %641 : vector<24x128xf32>
    %644 = arith.addf %627, %643 : vector<24x128xf32>
    %cst_159 = arith.constant 1.57079637 : f32
    %645 = vector.broadcast %cst_159 : f32 to vector<24x128xf32>
    %646 = arith.subf %645, %644 : vector<24x128xf32>
    %cst_160 = arith.constant 2.000000e+00 : f32
    %647 = vector.broadcast %cst_160 : f32 to vector<24x128xf32>
    %648 = arith.mulf %647, %644 : vector<24x128xf32>
    %cst_161 = arith.constant 0.000000e+00 : f32
    %649 = vector.broadcast %cst_161 : f32 to vector<24x128xf32>
    %650 = arith.cmpf olt, %616, %649 : vector<24x128xf32>
    %cst_162 = arith.constant 3.14159274 : f32
    %651 = vector.broadcast %cst_162 : f32 to vector<24x128xf32>
    %652 = arith.subf %651, %648 : vector<24x128xf32>
    %653 = arith.select %650, %652, %648 : vector<24x128xi1>, vector<24x128xf32>
    %654 = arith.select %619, %646, %653 : vector<24x128xi1>, vector<24x128xf32>
    %655 = arith.mulf %586, %654 : vector<24x128xf32>
    %656 = arith.addf %528, %655 : vector<24x128xf32>
    %c5_i32_163 = arith.constant 5 : i32
    %c0_i32_164 = arith.constant 0 : i32
    %657 = arith.addi %15, %c0_i32_164 : i32
    %658 = arith.index_cast %657 : i32 to index
    %659 = arith.index_cast %c5_i32_163 : i32 to index
    %660 = memref.load %arg2[%658, %659] : memref<20x8xf32, #tpu.memory_space<smem>>
    %c1_i32_165 = arith.constant 1 : i32
    %661 = arith.addi %15, %c1_i32_165 : i32
    %662 = arith.index_cast %661 : i32 to index
    %663 = arith.index_cast %c5_i32_163 : i32 to index
    %664 = memref.load %arg2[%662, %663] : memref<20x8xf32, #tpu.memory_space<smem>>
    %c2_i32_166 = arith.constant 2 : i32
    %665 = arith.addi %15, %c2_i32_166 : i32
    %666 = arith.index_cast %665 : i32 to index
    %667 = arith.index_cast %c5_i32_163 : i32 to index
    %668 = memref.load %arg2[%666, %667] : memref<20x8xf32, #tpu.memory_space<smem>>
    %c3_i32_167 = arith.constant 3 : i32
    %669 = arith.addi %15, %c3_i32_167 : i32
    %670 = arith.index_cast %669 : i32 to index
    %671 = arith.index_cast %c5_i32_163 : i32 to index
    %672 = memref.load %arg2[%670, %671] : memref<20x8xf32, #tpu.memory_space<smem>>
    %c4_i32_168 = arith.constant 4 : i32
    %673 = arith.addi %15, %c4_i32_168 : i32
    %674 = arith.index_cast %673 : i32 to index
    %675 = arith.index_cast %c5_i32_163 : i32 to index
    %676 = memref.load %arg2[%674, %675] : memref<20x8xf32, #tpu.memory_space<smem>>
    %c5_i32_169 = arith.constant 5 : i32
    %677 = arith.addi %15, %c5_i32_169 : i32
    %678 = arith.index_cast %677 : i32 to index
    %679 = arith.index_cast %c5_i32_163 : i32 to index
    %680 = memref.load %arg2[%678, %679] : memref<20x8xf32, #tpu.memory_space<smem>>
    %c6_i32_170 = arith.constant 6 : i32
    %681 = arith.addi %15, %c6_i32_170 : i32
    %682 = arith.index_cast %681 : i32 to index
    %683 = arith.index_cast %c5_i32_163 : i32 to index
    %684 = memref.load %arg2[%682, %683] : memref<20x8xf32, #tpu.memory_space<smem>>
    %c7_i32_171 = arith.constant 7 : i32
    %685 = arith.addi %15, %c7_i32_171 : i32
    %686 = arith.index_cast %685 : i32 to index
    %687 = arith.index_cast %c5_i32_163 : i32 to index
    %688 = memref.load %arg2[%686, %687] : memref<20x8xf32, #tpu.memory_space<smem>>
    %c8_i32_172 = arith.constant 8 : i32
    %689 = arith.addi %15, %c8_i32_172 : i32
    %690 = arith.index_cast %689 : i32 to index
    %691 = arith.index_cast %c5_i32_163 : i32 to index
    %692 = memref.load %arg2[%690, %691] : memref<20x8xf32, #tpu.memory_space<smem>>
    %c9_i32_173 = arith.constant 9 : i32
    %693 = arith.addi %15, %c9_i32_173 : i32
    %694 = arith.index_cast %693 : i32 to index
    %695 = arith.index_cast %c5_i32_163 : i32 to index
    %696 = memref.load %arg2[%694, %695] : memref<20x8xf32, #tpu.memory_space<smem>>
    %697 = vector.broadcast %664 : f32 to vector<24x128xf32>
    %698 = arith.mulf %8, %697 : vector<24x128xf32>
    %699 = vector.broadcast %660 : f32 to vector<24x128xf32>
    %700 = arith.addf %699, %698 : vector<24x128xf32>
    %701 = vector.broadcast %668 : f32 to vector<24x128xf32>
    %702 = arith.mulf %11, %701 : vector<24x128xf32>
    %703 = arith.addf %700, %702 : vector<24x128xf32>
    %cst_174 = arith.constant 0.000000e+00 : f32
    %704 = vector.broadcast %cst_174 : f32 to vector<24x128xf32>
    %705 = arith.cmpf ogt, %703, %704 : vector<24x128xf32>
    %cst_175 = arith.constant 1.000000e+00 : f32
    %cst_176 = arith.constant 0.000000e+00 : f32
    %706 = vector.broadcast %cst_175 : f32 to vector<24x128xf32>
    %707 = vector.broadcast %cst_176 : f32 to vector<24x128xf32>
    %708 = arith.select %705, %706, %707 : vector<24x128xi1>, vector<24x128xf32>
    %cst_177 = arith.constant 0.000000e+00 : f32
    %709 = vector.broadcast %cst_177 : f32 to vector<24x128xf32>
    %710 = arith.cmpf olt, %703, %709 : vector<24x128xf32>
    %cst_178 = arith.constant 1.000000e+00 : f32
    %cst_179 = arith.constant 0.000000e+00 : f32
    %711 = vector.broadcast %cst_178 : f32 to vector<24x128xf32>
    %712 = vector.broadcast %cst_179 : f32 to vector<24x128xf32>
    %713 = arith.select %710, %711, %712 : vector<24x128xi1>, vector<24x128xf32>
    %714 = arith.subf %708, %713 : vector<24x128xf32>
    %715 = vector.broadcast %672 : f32 to vector<24x128xf32>
    %716 = arith.addf %14, %715 : vector<24x128xf32>
    %717 = vector.broadcast %684 : f32 to vector<24x128xf32>
    %718 = arith.mulf %8, %717 : vector<24x128xf32>
    %719 = arith.subf %716, %718 : vector<24x128xf32>
    %720 = vector.broadcast %688 : f32 to vector<24x128xf32>
    %721 = arith.mulf %11, %720 : vector<24x128xf32>
    %722 = arith.subf %719, %721 : vector<24x128xf32>
    %723 = vector.broadcast %676 : f32 to vector<24x128xf32>
    %724 = arith.addf %14, %723 : vector<24x128xf32>
    %725 = vector.broadcast %692 : f32 to vector<24x128xf32>
    %726 = arith.mulf %8, %725 : vector<24x128xf32>
    %727 = arith.subf %724, %726 : vector<24x128xf32>
    %728 = vector.broadcast %696 : f32 to vector<24x128xf32>
    %729 = arith.mulf %11, %728 : vector<24x128xf32>
    %730 = arith.subf %727, %729 : vector<24x128xf32>
    %731 = arith.addf %722, %730 : vector<24x128xf32>
    %732 = vector.broadcast %680 : f32 to vector<24x128xf32>
    %733 = arith.subf %731, %732 : vector<24x128xf32>
    %cst_180 = arith.constant 5.000000e-01 : f32
    %734 = vector.broadcast %cst_180 : f32 to vector<24x128xf32>
    %735 = arith.mulf %734, %733 : vector<24x128xf32>
    %736 = arith.mulf %722, %730 : vector<24x128xf32>
    %737 = math.sqrt %736 : vector<24x128xf32>
    %cst_181 = arith.constant 9.99999974E-6 : f32
    %738 = vector.broadcast %cst_181 : f32 to vector<24x128xf32>
    %739 = arith.addf %737, %738 : vector<24x128xf32>
    %740 = arith.divf %735, %739 : vector<24x128xf32>
    %cst_182 = arith.constant -0.999989986 : f32
    %cst_183 = arith.constant 0.999989986 : f32
    %741 = vector.broadcast %cst_182 : f32 to vector<24x128xf32>
    %742 = arith.maximumf %741, %740 : vector<24x128xf32>
    %743 = vector.broadcast %cst_183 : f32 to vector<24x128xf32>
    %744 = arith.minimumf %743, %742 : vector<24x128xf32>
    %745 = math.absf %744 : vector<24x128xf32>
    %cst_184 = arith.constant 5.000000e-01 : f32
    %746 = vector.broadcast %cst_184 : f32 to vector<24x128xf32>
    %747 = arith.cmpf ole, %745, %746 : vector<24x128xf32>
    %cst_185 = arith.constant 1.000000e+00 : f32
    %748 = vector.broadcast %cst_185 : f32 to vector<24x128xf32>
    %749 = arith.subf %748, %745 : vector<24x128xf32>
    %cst_186 = arith.constant 5.000000e-01 : f32
    %750 = vector.broadcast %cst_186 : f32 to vector<24x128xf32>
    %751 = arith.mulf %750, %749 : vector<24x128xf32>
    %cst_187 = arith.constant 0.000000e+00 : f32
    %752 = vector.broadcast %cst_187 : f32 to vector<24x128xf32>
    %753 = arith.maximumf %751, %752 : vector<24x128xf32>
    %754 = math.sqrt %753 : vector<24x128xf32>
    %755 = arith.select %747, %744, %754 : vector<24x128xi1>, vector<24x128xf32>
    %756 = arith.mulf %755, %755 : vector<24x128xf32>
    %cst_188 = arith.constant 4.216320e-02 : f32
    %757 = vector.broadcast %cst_188 : f32 to vector<24x128xf32>
    %758 = arith.mulf %757, %756 : vector<24x128xf32>
    %cst_189 = arith.constant 0.024181312 : f32
    %759 = vector.broadcast %cst_189 : f32 to vector<24x128xf32>
    %760 = arith.addf %758, %759 : vector<24x128xf32>
    %761 = arith.mulf %760, %756 : vector<24x128xf32>
    %cst_190 = arith.constant 0.0454700254 : f32
    %762 = vector.broadcast %cst_190 : f32 to vector<24x128xf32>
    %763 = arith.addf %761, %762 : vector<24x128xf32>
    %764 = arith.mulf %763, %756 : vector<24x128xf32>
    %cst_191 = arith.constant 0.0749530047 : f32
    %765 = vector.broadcast %cst_191 : f32 to vector<24x128xf32>
    %766 = arith.addf %764, %765 : vector<24x128xf32>
    %767 = arith.mulf %766, %756 : vector<24x128xf32>
    %cst_192 = arith.constant 0.166667521 : f32
    %768 = vector.broadcast %cst_192 : f32 to vector<24x128xf32>
    %769 = arith.addf %767, %768 : vector<24x128xf32>
    %770 = arith.mulf %755, %756 : vector<24x128xf32>
    %771 = arith.mulf %770, %769 : vector<24x128xf32>
    %772 = arith.addf %755, %771 : vector<24x128xf32>
    %cst_193 = arith.constant 1.57079637 : f32
    %773 = vector.broadcast %cst_193 : f32 to vector<24x128xf32>
    %774 = arith.subf %773, %772 : vector<24x128xf32>
    %cst_194 = arith.constant 2.000000e+00 : f32
    %775 = vector.broadcast %cst_194 : f32 to vector<24x128xf32>
    %776 = arith.mulf %775, %772 : vector<24x128xf32>
    %cst_195 = arith.constant 0.000000e+00 : f32
    %777 = vector.broadcast %cst_195 : f32 to vector<24x128xf32>
    %778 = arith.cmpf olt, %744, %777 : vector<24x128xf32>
    %cst_196 = arith.constant 3.14159274 : f32
    %779 = vector.broadcast %cst_196 : f32 to vector<24x128xf32>
    %780 = arith.subf %779, %776 : vector<24x128xf32>
    %781 = arith.select %778, %780, %776 : vector<24x128xi1>, vector<24x128xf32>
    %782 = arith.select %747, %774, %781 : vector<24x128xi1>, vector<24x128xf32>
    %783 = arith.mulf %714, %782 : vector<24x128xf32>
    %784 = arith.addf %656, %783 : vector<24x128xf32>
    %c6_i32_197 = arith.constant 6 : i32
    %c0_i32_198 = arith.constant 0 : i32
    %785 = arith.addi %15, %c0_i32_198 : i32
    %786 = arith.index_cast %785 : i32 to index
    %787 = arith.index_cast %c6_i32_197 : i32 to index
    %788 = memref.load %arg2[%786, %787] : memref<20x8xf32, #tpu.memory_space<smem>>
    %c1_i32_199 = arith.constant 1 : i32
    %789 = arith.addi %15, %c1_i32_199 : i32
    %790 = arith.index_cast %789 : i32 to index
    %791 = arith.index_cast %c6_i32_197 : i32 to index
    %792 = memref.load %arg2[%790, %791] : memref<20x8xf32, #tpu.memory_space<smem>>
    %c2_i32_200 = arith.constant 2 : i32
    %793 = arith.addi %15, %c2_i32_200 : i32
    %794 = arith.index_cast %793 : i32 to index
    %795 = arith.index_cast %c6_i32_197 : i32 to index
    %796 = memref.load %arg2[%794, %795] : memref<20x8xf32, #tpu.memory_space<smem>>
    %c3_i32_201 = arith.constant 3 : i32
    %797 = arith.addi %15, %c3_i32_201 : i32
    %798 = arith.index_cast %797 : i32 to index
    %799 = arith.index_cast %c6_i32_197 : i32 to index
    %800 = memref.load %arg2[%798, %799] : memref<20x8xf32, #tpu.memory_space<smem>>
    %c4_i32_202 = arith.constant 4 : i32
    %801 = arith.addi %15, %c4_i32_202 : i32
    %802 = arith.index_cast %801 : i32 to index
    %803 = arith.index_cast %c6_i32_197 : i32 to index
    %804 = memref.load %arg2[%802, %803] : memref<20x8xf32, #tpu.memory_space<smem>>
    %c5_i32_203 = arith.constant 5 : i32
    %805 = arith.addi %15, %c5_i32_203 : i32
    %806 = arith.index_cast %805 : i32 to index
    %807 = arith.index_cast %c6_i32_197 : i32 to index
    %808 = memref.load %arg2[%806, %807] : memref<20x8xf32, #tpu.memory_space<smem>>
    %c6_i32_204 = arith.constant 6 : i32
    %809 = arith.addi %15, %c6_i32_204 : i32
    %810 = arith.index_cast %809 : i32 to index
    %811 = arith.index_cast %c6_i32_197 : i32 to index
    %812 = memref.load %arg2[%810, %811] : memref<20x8xf32, #tpu.memory_space<smem>>
    %c7_i32_205 = arith.constant 7 : i32
    %813 = arith.addi %15, %c7_i32_205 : i32
    %814 = arith.index_cast %813 : i32 to index
    %815 = arith.index_cast %c6_i32_197 : i32 to index
    %816 = memref.load %arg2[%814, %815] : memref<20x8xf32, #tpu.memory_space<smem>>
    %c8_i32_206 = arith.constant 8 : i32
    %817 = arith.addi %15, %c8_i32_206 : i32
    %818 = arith.index_cast %817 : i32 to index
    %819 = arith.index_cast %c6_i32_197 : i32 to index
    %820 = memref.load %arg2[%818, %819] : memref<20x8xf32, #tpu.memory_space<smem>>
    %c9_i32_207 = arith.constant 9 : i32
    %821 = arith.addi %15, %c9_i32_207 : i32
    %822 = arith.index_cast %821 : i32 to index
    %823 = arith.index_cast %c6_i32_197 : i32 to index
    %824 = memref.load %arg2[%822, %823] : memref<20x8xf32, #tpu.memory_space<smem>>
    %825 = vector.broadcast %792 : f32 to vector<24x128xf32>
    %826 = arith.mulf %8, %825 : vector<24x128xf32>
    %827 = vector.broadcast %788 : f32 to vector<24x128xf32>
    %828 = arith.addf %827, %826 : vector<24x128xf32>
    %829 = vector.broadcast %796 : f32 to vector<24x128xf32>
    %830 = arith.mulf %11, %829 : vector<24x128xf32>
    %831 = arith.addf %828, %830 : vector<24x128xf32>
    %cst_208 = arith.constant 0.000000e+00 : f32
    %832 = vector.broadcast %cst_208 : f32 to vector<24x128xf32>
    %833 = arith.cmpf ogt, %831, %832 : vector<24x128xf32>
    %cst_209 = arith.constant 1.000000e+00 : f32
    %cst_210 = arith.constant 0.000000e+00 : f32
    %834 = vector.broadcast %cst_209 : f32 to vector<24x128xf32>
    %835 = vector.broadcast %cst_210 : f32 to vector<24x128xf32>
    %836 = arith.select %833, %834, %835 : vector<24x128xi1>, vector<24x128xf32>
    %cst_211 = arith.constant 0.000000e+00 : f32
    %837 = vector.broadcast %cst_211 : f32 to vector<24x128xf32>
    %838 = arith.cmpf olt, %831, %837 : vector<24x128xf32>
    %cst_212 = arith.constant 1.000000e+00 : f32
    %cst_213 = arith.constant 0.000000e+00 : f32
    %839 = vector.broadcast %cst_212 : f32 to vector<24x128xf32>
    %840 = vector.broadcast %cst_213 : f32 to vector<24x128xf32>
    %841 = arith.select %838, %839, %840 : vector<24x128xi1>, vector<24x128xf32>
    %842 = arith.subf %836, %841 : vector<24x128xf32>
    %843 = vector.broadcast %800 : f32 to vector<24x128xf32>
    %844 = arith.addf %14, %843 : vector<24x128xf32>
    %845 = vector.broadcast %812 : f32 to vector<24x128xf32>
    %846 = arith.mulf %8, %845 : vector<24x128xf32>
    %847 = arith.subf %844, %846 : vector<24x128xf32>
    %848 = vector.broadcast %816 : f32 to vector<24x128xf32>
    %849 = arith.mulf %11, %848 : vector<24x128xf32>
    %850 = arith.subf %847, %849 : vector<24x128xf32>
    %851 = vector.broadcast %804 : f32 to vector<24x128xf32>
    %852 = arith.addf %14, %851 : vector<24x128xf32>
    %853 = vector.broadcast %820 : f32 to vector<24x128xf32>
    %854 = arith.mulf %8, %853 : vector<24x128xf32>
    %855 = arith.subf %852, %854 : vector<24x128xf32>
    %856 = vector.broadcast %824 : f32 to vector<24x128xf32>
    %857 = arith.mulf %11, %856 : vector<24x128xf32>
    %858 = arith.subf %855, %857 : vector<24x128xf32>
    %859 = arith.addf %850, %858 : vector<24x128xf32>
    %860 = vector.broadcast %808 : f32 to vector<24x128xf32>
    %861 = arith.subf %859, %860 : vector<24x128xf32>
    %cst_214 = arith.constant 5.000000e-01 : f32
    %862 = vector.broadcast %cst_214 : f32 to vector<24x128xf32>
    %863 = arith.mulf %862, %861 : vector<24x128xf32>
    %864 = arith.mulf %850, %858 : vector<24x128xf32>
    %865 = math.sqrt %864 : vector<24x128xf32>
    %cst_215 = arith.constant 9.99999974E-6 : f32
    %866 = vector.broadcast %cst_215 : f32 to vector<24x128xf32>
    %867 = arith.addf %865, %866 : vector<24x128xf32>
    %868 = arith.divf %863, %867 : vector<24x128xf32>
    %cst_216 = arith.constant -0.999989986 : f32
    %cst_217 = arith.constant 0.999989986 : f32
    %869 = vector.broadcast %cst_216 : f32 to vector<24x128xf32>
    %870 = arith.maximumf %869, %868 : vector<24x128xf32>
    %871 = vector.broadcast %cst_217 : f32 to vector<24x128xf32>
    %872 = arith.minimumf %871, %870 : vector<24x128xf32>
    %873 = math.absf %872 : vector<24x128xf32>
    %cst_218 = arith.constant 5.000000e-01 : f32
    %874 = vector.broadcast %cst_218 : f32 to vector<24x128xf32>
    %875 = arith.cmpf ole, %873, %874 : vector<24x128xf32>
    %cst_219 = arith.constant 1.000000e+00 : f32
    %876 = vector.broadcast %cst_219 : f32 to vector<24x128xf32>
    %877 = arith.subf %876, %873 : vector<24x128xf32>
    %cst_220 = arith.constant 5.000000e-01 : f32
    %878 = vector.broadcast %cst_220 : f32 to vector<24x128xf32>
    %879 = arith.mulf %878, %877 : vector<24x128xf32>
    %cst_221 = arith.constant 0.000000e+00 : f32
    %880 = vector.broadcast %cst_221 : f32 to vector<24x128xf32>
    %881 = arith.maximumf %879, %880 : vector<24x128xf32>
    %882 = math.sqrt %881 : vector<24x128xf32>
    %883 = arith.select %875, %872, %882 : vector<24x128xi1>, vector<24x128xf32>
    %884 = arith.mulf %883, %883 : vector<24x128xf32>
    %cst_222 = arith.constant 4.216320e-02 : f32
    %885 = vector.broadcast %cst_222 : f32 to vector<24x128xf32>
    %886 = arith.mulf %885, %884 : vector<24x128xf32>
    %cst_223 = arith.constant 0.024181312 : f32
    %887 = vector.broadcast %cst_223 : f32 to vector<24x128xf32>
    %888 = arith.addf %886, %887 : vector<24x128xf32>
    %889 = arith.mulf %888, %884 : vector<24x128xf32>
    %cst_224 = arith.constant 0.0454700254 : f32
    %890 = vector.broadcast %cst_224 : f32 to vector<24x128xf32>
    %891 = arith.addf %889, %890 : vector<24x128xf32>
    %892 = arith.mulf %891, %884 : vector<24x128xf32>
    %cst_225 = arith.constant 0.0749530047 : f32
    %893 = vector.broadcast %cst_225 : f32 to vector<24x128xf32>
    %894 = arith.addf %892, %893 : vector<24x128xf32>
    %895 = arith.mulf %894, %884 : vector<24x128xf32>
    %cst_226 = arith.constant 0.166667521 : f32
    %896 = vector.broadcast %cst_226 : f32 to vector<24x128xf32>
    %897 = arith.addf %895, %896 : vector<24x128xf32>
    %898 = arith.mulf %883, %884 : vector<24x128xf32>
    %899 = arith.mulf %898, %897 : vector<24x128xf32>
    %900 = arith.addf %883, %899 : vector<24x128xf32>
    %cst_227 = arith.constant 1.57079637 : f32
    %901 = vector.broadcast %cst_227 : f32 to vector<24x128xf32>
    %902 = arith.subf %901, %900 : vector<24x128xf32>
    %cst_228 = arith.constant 2.000000e+00 : f32
    %903 = vector.broadcast %cst_228 : f32 to vector<24x128xf32>
    %904 = arith.mulf %903, %900 : vector<24x128xf32>
    %cst_229 = arith.constant 0.000000e+00 : f32
    %905 = vector.broadcast %cst_229 : f32 to vector<24x128xf32>
    %906 = arith.cmpf olt, %872, %905 : vector<24x128xf32>
    %cst_230 = arith.constant 3.14159274 : f32
    %907 = vector.broadcast %cst_230 : f32 to vector<24x128xf32>
    %908 = arith.subf %907, %904 : vector<24x128xf32>
    %909 = arith.select %906, %908, %904 : vector<24x128xi1>, vector<24x128xf32>
    %910 = arith.select %875, %902, %909 : vector<24x128xi1>, vector<24x128xf32>
    %911 = arith.mulf %842, %910 : vector<24x128xf32>
    %912 = arith.addf %784, %911 : vector<24x128xf32>
    %c7_i32_231 = arith.constant 7 : i32
    %c0_i32_232 = arith.constant 0 : i32
    %913 = arith.addi %15, %c0_i32_232 : i32
    %914 = arith.index_cast %913 : i32 to index
    %915 = arith.index_cast %c7_i32_231 : i32 to index
    %916 = memref.load %arg2[%914, %915] : memref<20x8xf32, #tpu.memory_space<smem>>
    %c1_i32_233 = arith.constant 1 : i32
    %917 = arith.addi %15, %c1_i32_233 : i32
    %918 = arith.index_cast %917 : i32 to index
    %919 = arith.index_cast %c7_i32_231 : i32 to index
    %920 = memref.load %arg2[%918, %919] : memref<20x8xf32, #tpu.memory_space<smem>>
    %c2_i32_234 = arith.constant 2 : i32
    %921 = arith.addi %15, %c2_i32_234 : i32
    %922 = arith.index_cast %921 : i32 to index
    %923 = arith.index_cast %c7_i32_231 : i32 to index
    %924 = memref.load %arg2[%922, %923] : memref<20x8xf32, #tpu.memory_space<smem>>
    %c3_i32_235 = arith.constant 3 : i32
    %925 = arith.addi %15, %c3_i32_235 : i32
    %926 = arith.index_cast %925 : i32 to index
    %927 = arith.index_cast %c7_i32_231 : i32 to index
    %928 = memref.load %arg2[%926, %927] : memref<20x8xf32, #tpu.memory_space<smem>>
    %c4_i32_236 = arith.constant 4 : i32
    %929 = arith.addi %15, %c4_i32_236 : i32
    %930 = arith.index_cast %929 : i32 to index
    %931 = arith.index_cast %c7_i32_231 : i32 to index
    %932 = memref.load %arg2[%930, %931] : memref<20x8xf32, #tpu.memory_space<smem>>
    %c5_i32_237 = arith.constant 5 : i32
    %933 = arith.addi %15, %c5_i32_237 : i32
    %934 = arith.index_cast %933 : i32 to index
    %935 = arith.index_cast %c7_i32_231 : i32 to index
    %936 = memref.load %arg2[%934, %935] : memref<20x8xf32, #tpu.memory_space<smem>>
    %c6_i32_238 = arith.constant 6 : i32
    %937 = arith.addi %15, %c6_i32_238 : i32
    %938 = arith.index_cast %937 : i32 to index
    %939 = arith.index_cast %c7_i32_231 : i32 to index
    %940 = memref.load %arg2[%938, %939] : memref<20x8xf32, #tpu.memory_space<smem>>
    %c7_i32_239 = arith.constant 7 : i32
    %941 = arith.addi %15, %c7_i32_239 : i32
    %942 = arith.index_cast %941 : i32 to index
    %943 = arith.index_cast %c7_i32_231 : i32 to index
    %944 = memref.load %arg2[%942, %943] : memref<20x8xf32, #tpu.memory_space<smem>>
    %c8_i32_240 = arith.constant 8 : i32
    %945 = arith.addi %15, %c8_i32_240 : i32
    %946 = arith.index_cast %945 : i32 to index
    %947 = arith.index_cast %c7_i32_231 : i32 to index
    %948 = memref.load %arg2[%946, %947] : memref<20x8xf32, #tpu.memory_space<smem>>
    %c9_i32_241 = arith.constant 9 : i32
    %949 = arith.addi %15, %c9_i32_241 : i32
    %950 = arith.index_cast %949 : i32 to index
    %951 = arith.index_cast %c7_i32_231 : i32 to index
    %952 = memref.load %arg2[%950, %951] : memref<20x8xf32, #tpu.memory_space<smem>>
    %953 = vector.broadcast %920 : f32 to vector<24x128xf32>
    %954 = arith.mulf %8, %953 : vector<24x128xf32>
    %955 = vector.broadcast %916 : f32 to vector<24x128xf32>
    %956 = arith.addf %955, %954 : vector<24x128xf32>
    %957 = vector.broadcast %924 : f32 to vector<24x128xf32>
    %958 = arith.mulf %11, %957 : vector<24x128xf32>
    %959 = arith.addf %956, %958 : vector<24x128xf32>
    %cst_242 = arith.constant 0.000000e+00 : f32
    %960 = vector.broadcast %cst_242 : f32 to vector<24x128xf32>
    %961 = arith.cmpf ogt, %959, %960 : vector<24x128xf32>
    %cst_243 = arith.constant 1.000000e+00 : f32
    %cst_244 = arith.constant 0.000000e+00 : f32
    %962 = vector.broadcast %cst_243 : f32 to vector<24x128xf32>
    %963 = vector.broadcast %cst_244 : f32 to vector<24x128xf32>
    %964 = arith.select %961, %962, %963 : vector<24x128xi1>, vector<24x128xf32>
    %cst_245 = arith.constant 0.000000e+00 : f32
    %965 = vector.broadcast %cst_245 : f32 to vector<24x128xf32>
    %966 = arith.cmpf olt, %959, %965 : vector<24x128xf32>
    %cst_246 = arith.constant 1.000000e+00 : f32
    %cst_247 = arith.constant 0.000000e+00 : f32
    %967 = vector.broadcast %cst_246 : f32 to vector<24x128xf32>
    %968 = vector.broadcast %cst_247 : f32 to vector<24x128xf32>
    %969 = arith.select %966, %967, %968 : vector<24x128xi1>, vector<24x128xf32>
    %970 = arith.subf %964, %969 : vector<24x128xf32>
    %971 = vector.broadcast %928 : f32 to vector<24x128xf32>
    %972 = arith.addf %14, %971 : vector<24x128xf32>
    %973 = vector.broadcast %940 : f32 to vector<24x128xf32>
    %974 = arith.mulf %8, %973 : vector<24x128xf32>
    %975 = arith.subf %972, %974 : vector<24x128xf32>
    %976 = vector.broadcast %944 : f32 to vector<24x128xf32>
    %977 = arith.mulf %11, %976 : vector<24x128xf32>
    %978 = arith.subf %975, %977 : vector<24x128xf32>
    %979 = vector.broadcast %932 : f32 to vector<24x128xf32>
    %980 = arith.addf %14, %979 : vector<24x128xf32>
    %981 = vector.broadcast %948 : f32 to vector<24x128xf32>
    %982 = arith.mulf %8, %981 : vector<24x128xf32>
    %983 = arith.subf %980, %982 : vector<24x128xf32>
    %984 = vector.broadcast %952 : f32 to vector<24x128xf32>
    %985 = arith.mulf %11, %984 : vector<24x128xf32>
    %986 = arith.subf %983, %985 : vector<24x128xf32>
    %987 = arith.addf %978, %986 : vector<24x128xf32>
    %988 = vector.broadcast %936 : f32 to vector<24x128xf32>
    %989 = arith.subf %987, %988 : vector<24x128xf32>
    %cst_248 = arith.constant 5.000000e-01 : f32
    %990 = vector.broadcast %cst_248 : f32 to vector<24x128xf32>
    %991 = arith.mulf %990, %989 : vector<24x128xf32>
    %992 = arith.mulf %978, %986 : vector<24x128xf32>
    %993 = math.sqrt %992 : vector<24x128xf32>
    %cst_249 = arith.constant 9.99999974E-6 : f32
    %994 = vector.broadcast %cst_249 : f32 to vector<24x128xf32>
    %995 = arith.addf %993, %994 : vector<24x128xf32>
    %996 = arith.divf %991, %995 : vector<24x128xf32>
    %cst_250 = arith.constant -0.999989986 : f32
    %cst_251 = arith.constant 0.999989986 : f32
    %997 = vector.broadcast %cst_250 : f32 to vector<24x128xf32>
    %998 = arith.maximumf %997, %996 : vector<24x128xf32>
    %999 = vector.broadcast %cst_251 : f32 to vector<24x128xf32>
    %1000 = arith.minimumf %999, %998 : vector<24x128xf32>
    %1001 = math.absf %1000 : vector<24x128xf32>
    %cst_252 = arith.constant 5.000000e-01 : f32
    %1002 = vector.broadcast %cst_252 : f32 to vector<24x128xf32>
    %1003 = arith.cmpf ole, %1001, %1002 : vector<24x128xf32>
    %cst_253 = arith.constant 1.000000e+00 : f32
    %1004 = vector.broadcast %cst_253 : f32 to vector<24x128xf32>
    %1005 = arith.subf %1004, %1001 : vector<24x128xf32>
    %cst_254 = arith.constant 5.000000e-01 : f32
    %1006 = vector.broadcast %cst_254 : f32 to vector<24x128xf32>
    %1007 = arith.mulf %1006, %1005 : vector<24x128xf32>
    %cst_255 = arith.constant 0.000000e+00 : f32
    %1008 = vector.broadcast %cst_255 : f32 to vector<24x128xf32>
    %1009 = arith.maximumf %1007, %1008 : vector<24x128xf32>
    %1010 = math.sqrt %1009 : vector<24x128xf32>
    %1011 = arith.select %1003, %1000, %1010 : vector<24x128xi1>, vector<24x128xf32>
    %1012 = arith.mulf %1011, %1011 : vector<24x128xf32>
    %cst_256 = arith.constant 4.216320e-02 : f32
    %1013 = vector.broadcast %cst_256 : f32 to vector<24x128xf32>
    %1014 = arith.mulf %1013, %1012 : vector<24x128xf32>
    %cst_257 = arith.constant 0.024181312 : f32
    %1015 = vector.broadcast %cst_257 : f32 to vector<24x128xf32>
    %1016 = arith.addf %1014, %1015 : vector<24x128xf32>
    %1017 = arith.mulf %1016, %1012 : vector<24x128xf32>
    %cst_258 = arith.constant 0.0454700254 : f32
    %1018 = vector.broadcast %cst_258 : f32 to vector<24x128xf32>
    %1019 = arith.addf %1017, %1018 : vector<24x128xf32>
    %1020 = arith.mulf %1019, %1012 : vector<24x128xf32>
    %cst_259 = arith.constant 0.0749530047 : f32
    %1021 = vector.broadcast %cst_259 : f32 to vector<24x128xf32>
    %1022 = arith.addf %1020, %1021 : vector<24x128xf32>
    %1023 = arith.mulf %1022, %1012 : vector<24x128xf32>
    %cst_260 = arith.constant 0.166667521 : f32
    %1024 = vector.broadcast %cst_260 : f32 to vector<24x128xf32>
    %1025 = arith.addf %1023, %1024 : vector<24x128xf32>
    %1026 = arith.mulf %1011, %1012 : vector<24x128xf32>
    %1027 = arith.mulf %1026, %1025 : vector<24x128xf32>
    %1028 = arith.addf %1011, %1027 : vector<24x128xf32>
    %cst_261 = arith.constant 1.57079637 : f32
    %1029 = vector.broadcast %cst_261 : f32 to vector<24x128xf32>
    %1030 = arith.subf %1029, %1028 : vector<24x128xf32>
    %cst_262 = arith.constant 2.000000e+00 : f32
    %1031 = vector.broadcast %cst_262 : f32 to vector<24x128xf32>
    %1032 = arith.mulf %1031, %1028 : vector<24x128xf32>
    %cst_263 = arith.constant 0.000000e+00 : f32
    %1033 = vector.broadcast %cst_263 : f32 to vector<24x128xf32>
    %1034 = arith.cmpf olt, %1000, %1033 : vector<24x128xf32>
    %cst_264 = arith.constant 3.14159274 : f32
    %1035 = vector.broadcast %cst_264 : f32 to vector<24x128xf32>
    %1036 = arith.subf %1035, %1032 : vector<24x128xf32>
    %1037 = arith.select %1034, %1036, %1032 : vector<24x128xi1>, vector<24x128xf32>
    %1038 = arith.select %1003, %1030, %1037 : vector<24x128xi1>, vector<24x128xf32>
    %1039 = arith.mulf %970, %1038 : vector<24x128xf32>
    %1040 = arith.addf %912, %1039 : vector<24x128xf32>
    %c8_i32_265 = arith.constant 8 : i32
    %1041 = math.absf %1040 : vector<24x128xf32>
    %cst_266 = arith.constant 0.159154937 : f32
    %1042 = vector.broadcast %cst_266 : f32 to vector<24x128xf32>
    %1043 = arith.mulf %1041, %1042 : vector<24x128xf32>
    %cst_267 = arith.constant 0.000000e+00 : f32
    %cst_268 = arith.constant 1.000000e+00 : f32
    %1044 = vector.broadcast %cst_267 : f32 to vector<24x128xf32>
    %1045 = arith.maximumf %1044, %1043 : vector<24x128xf32>
    %1046 = vector.broadcast %cst_268 : f32 to vector<24x128xf32>
    %1047 = arith.minimumf %1046, %1045 : vector<24x128xf32>
    %1048 = vector.extract_strided_slice %1047 {offsets = [23, 0], sizes = [1, 128], strides = [1, 1]} : vector<24x128xf32> to vector<1x128xf32>
    %1049 = vector.extract_strided_slice %1047 {offsets = [0, 0], sizes = [23, 128], strides = [1, 1]} : vector<24x128xf32> to vector<23x128xf32>
    %1050 = tpu.concatenate %1048, %1049 in 0 : vector<1x128xf32>, vector<23x128xf32> -> vector<24x128xf32>
    %1051 = arith.addf %1050, %1047 : vector<24x128xf32>
    %1052 = arith.addf %1051, %1047 : vector<24x128xf32>
    %1053 = vector.extract_strided_slice %1047 {offsets = [1, 0], sizes = [23, 128], strides = [1, 1]} : vector<24x128xf32> to vector<23x128xf32>
    %1054 = vector.extract_strided_slice %1047 {offsets = [0, 0], sizes = [1, 128], strides = [1, 1]} : vector<24x128xf32> to vector<1x128xf32>
    %1055 = tpu.concatenate %1053, %1054 in 0 : vector<23x128xf32>, vector<1x128xf32> -> vector<24x128xf32>
    %1056 = arith.addf %1052, %1055 : vector<24x128xf32>
    %1057 = vector.extract_strided_slice %1047 {offsets = [0, 127], sizes = [24, 1], strides = [1, 1]} : vector<24x128xf32> to vector<24x1xf32>
    %1058 = vector.extract_strided_slice %1047 {offsets = [0, 0], sizes = [24, 127], strides = [1, 1]} : vector<24x128xf32> to vector<24x127xf32>
    %1059 = tpu.concatenate %1057, %1058 in 1 : vector<24x1xf32>, vector<24x127xf32> -> vector<24x128xf32>
    %1060 = arith.addf %1059, %1047 : vector<24x128xf32>
    %1061 = arith.addf %1060, %1047 : vector<24x128xf32>
    %1062 = vector.extract_strided_slice %1047 {offsets = [0, 1], sizes = [24, 127], strides = [1, 1]} : vector<24x128xf32> to vector<24x127xf32>
    %1063 = vector.extract_strided_slice %1047 {offsets = [0, 0], sizes = [24, 1], strides = [1, 1]} : vector<24x128xf32> to vector<24x1xf32>
    %1064 = tpu.concatenate %1062, %1063 in 1 : vector<24x127xf32>, vector<24x1xf32> -> vector<24x128xf32>
    %1065 = arith.addf %1061, %1064 : vector<24x128xf32>
    %1066 = vector.extract_strided_slice %1056 {offsets = [0, 127], sizes = [24, 1], strides = [1, 1]} : vector<24x128xf32> to vector<24x1xf32>
    %1067 = vector.extract_strided_slice %1056 {offsets = [0, 0], sizes = [24, 127], strides = [1, 1]} : vector<24x128xf32> to vector<24x127xf32>
    %1068 = tpu.concatenate %1066, %1067 in 1 : vector<24x1xf32>, vector<24x127xf32> -> vector<24x128xf32>
    %1069 = vector.extract_strided_slice %1056 {offsets = [0, 1], sizes = [24, 127], strides = [1, 1]} : vector<24x128xf32> to vector<24x127xf32>
    %1070 = vector.extract_strided_slice %1056 {offsets = [0, 0], sizes = [24, 1], strides = [1, 1]} : vector<24x128xf32> to vector<24x1xf32>
    %1071 = tpu.concatenate %1069, %1070 in 1 : vector<24x127xf32>, vector<24x1xf32> -> vector<24x128xf32>
    %1072 = arith.subf %1068, %1071 : vector<24x128xf32>
    %1073 = vector.extract_strided_slice %1065 {offsets = [23, 0], sizes = [1, 128], strides = [1, 1]} : vector<24x128xf32> to vector<1x128xf32>
    %1074 = vector.extract_strided_slice %1065 {offsets = [0, 0], sizes = [23, 128], strides = [1, 1]} : vector<24x128xf32> to vector<23x128xf32>
    %1075 = tpu.concatenate %1073, %1074 in 0 : vector<1x128xf32>, vector<23x128xf32> -> vector<24x128xf32>
    %1076 = vector.extract_strided_slice %1065 {offsets = [1, 0], sizes = [23, 128], strides = [1, 1]} : vector<24x128xf32> to vector<23x128xf32>
    %1077 = vector.extract_strided_slice %1065 {offsets = [0, 0], sizes = [1, 128], strides = [1, 1]} : vector<24x128xf32> to vector<1x128xf32>
    %1078 = tpu.concatenate %1076, %1077 in 0 : vector<23x128xf32>, vector<1x128xf32> -> vector<24x128xf32>
    %1079 = arith.subf %1075, %1078 : vector<24x128xf32>
    %1080 = arith.mulf %1072, %1072 : vector<24x128xf32>
    %1081 = arith.mulf %1079, %1079 : vector<24x128xf32>
    %1082 = arith.addf %1080, %1081 : vector<24x128xf32>
    %1083 = math.sqrt %1082 : vector<24x128xf32>
    %cst_269 = arith.constant 2.000000e+00 : f32
    %1084 = vector.broadcast %cst_269 : f32 to vector<24x128xf32>
    %1085 = arith.mulf %1084, %1083 : vector<24x128xf32>
    %c1_i32_270 = arith.constant 1 : i32
    %1086 = vector.broadcast %c1_i32_270 : i32 to vector<24x128xi32>
    %1087 = arith.cmpi sge, %4, %1086 : vector<24x128xi32>
    %c14_i32 = arith.constant 14 : i32
    %1088 = vector.broadcast %c14_i32 : i32 to vector<24x128xi32>
    %1089 = arith.cmpi sle, %4, %1088 : vector<24x128xi32>
    %1090 = arith.andi %1087, %1089 : vector<24x128xi1>
    %c1_i32_271 = arith.constant 1 : i32
    %1091 = vector.broadcast %c1_i32_271 : i32 to vector<24x128xi32>
    %1092 = arith.cmpi sge, %5, %1091 : vector<24x128xi32>
    %1093 = arith.andi %1090, %1092 : vector<24x128xi1>
    %c14_i32_272 = arith.constant 14 : i32
    %1094 = vector.broadcast %c14_i32_272 : i32 to vector<24x128xi32>
    %1095 = arith.cmpi sle, %5, %1094 : vector<24x128xi32>
    %1096 = arith.andi %1093, %1095 : vector<24x128xi1>
    %cst_273 = arith.constant 0.000000e+00 : f32
    %1097 = vector.broadcast %cst_273 : f32 to vector<24x128xf32>
    %1098 = arith.select %1096, %1085, %1097 : vector<24x128xi1>, vector<24x128xf32>
    %1099 = vector.extract_strided_slice %1098 {offsets = [4, 0], sizes = [16, 128], strides = [1, 1]} : vector<24x128xf32> to vector<16x128xf32>
    %c0 = arith.constant 0 : index
    %c0_274 = arith.constant 0 : index
    %c0_275 = arith.constant 0 : index
    %1100 = vector.load %arg3[%c0, %c0_274, %c0_275] : memref<1x16x128xf32, #tpu.memory_space<vmem>>, vector<1x16x128xf32>
    %1101 = vector.shape_cast %1100 : vector<1x16x128xf32> to vector<16x128xf32>
    %1102 = vector.shape_cast %1099 : vector<16x128xf32> to vector<1x16x128xf32>
    tpu.vector_store %arg3[%c0, %c0_274, %c0_275], %1102 {strides = array<i32>} : memref<1x16x128xf32, #tpu.memory_space<vmem>>, vector<1x16x128xf32>,
    return
  }
  func.func @transform_0(%arg0: i32, %arg1: i32) -> (i32, i32) {
    %c0_i32 = arith.constant 0 : i32
    %c0_i32_0 = arith.constant 0 : i32
    %c0_i32_1 = arith.constant 0 : i32
    return %c0_i32, %c0_i32_0 : i32, i32
  }
  func.func @transform_1(%arg0: i32, %arg1: i32) -> (i32, i32, i32) {
    %c0_i32 = arith.constant 0 : i32
    %c0_i32_0 = arith.constant 0 : i32
    return %arg0, %arg1, %c0_i32 : i32, i32, i32
  }
}

</mosaic_0001>

<llo_original>
// kernel: tpu_custom_call.1
$region0: #{tpu_custom_call.1}
  #allocation0 [shape = 'u32[]', space=smem, size = 0x4, offset = 0x4, fixed_abs, tag = 'smem constant byte address 0x4 - core index']
  #allocation1 [shape = 'u32[144,128]{1,0:T(1,128)}', space=vmem, size = 0x12000, scoped, tag = 'internal scratch']
  %s0 = inlined_call_operand.vmem [shape: f32[20,8], index: 0, kind: input, shape index: {}]
  %s1 = inlined_call_operand.hbm [shape: f32[2,16,128], index: 1, kind: output, shape index: {}]
  %s2 = sld [smem:[#allocation0]]
  $region41: #{tpu_custom_call.1} parent=0
    _
  %s4 = ssub.s32 1, %s2
  %s5 = scalar_select 0, %s4, %s2
  $region1: #{tpu_custom_call.1} parent=0
    #allocation2 [shape = 'u8[12288]{0}', space=smem, size = 0x3000, scoped, tag = 'input window, operand 0, single buffered']
    #allocation3 [shape = 's32[2]{0}', space=sflag, size = 0x8, scoped, tag = 'scoped memory for tpu_custom_call.1']
    #allocation4 [shape = 's32[2]{0}', space=sflag, size = 0x8, scoped, tag = 'scoped memory for tpu_custom_call.1']
    #allocation5 [shape = 'u8[16384]{0}', space=vmem, size = 0x4000, scoped, tag = 'output window, operand 0']
    %6 = vsyncpa [#allocation4], 0
    %7 = vsyncpa [#allocation3], 0
    %s8 = scalar_lea.sflag [#allocation3], 1
    %9 = vsyncpa %s8, 0
    loop: start=0, step=1, limit=4
    $region2: #{tpu_custom_call.1} parent=1 // loop_pre_header
      _
    $region3: #{tpu_custom_call.1} parent=1 // loop_header
      %s11 = sphi 0, %s15
      %p12 = scmp.ge.s32.totalorder %s11, 4
      %s18 = sphi 0, %s30
      %s19 = sphi 0, %s26
      %s20 = sphi 0, %s18
      %s21 = sphi 0, %s19
      %s22 = sphi 0, %s20
      %s23 = sphi 0, %s21
      %s31 = sphi 0, %s31
      %s33 = sphi 0, %s31
      %s34 = sphi 0, %s33
      %s48 = sphi 0, %s34
      %s56 = sphi 0, %s58
      %s59 = sphi 0, %s56
      %s60 = sphi 0, %s59
      %s76 = sphi 0, %s60
    $region4: #{tpu_custom_call.1} parent=1 // loop_header_branch
      %14 = sbr.rel (%p12) target = $region8
    $region5: #{tpu_custom_call.1} parent=1 // loop_body
      %s16 = ssub.s32 %s11, 1
      %s17 = ssub.s32 %s11, 2
      %s24 = sadd.s32 1, %s19
      %p25 = scmp.ge.s32.totalorder %s24, 1
      %s26 = scalar_select %p25, 0, %s24
      %s27 = sadd.s32 1, %s18
      %s28 = scalar_select %p25, %s27, %s18
      %p29 = scmp.ge.s32.totalorder %s28, 2
      %s30 = scalar_select %p29, 0, %s28
      %s32 = sadd.s32 %s31, 1
      %p35 = scmp.eq.s32.totalorder %s11, 1
      %p36 = scmp.ne.s32.totalorder %s31, %s33
      %p37 = scmp.eq.s32.totalorder %s11, 0
      %p38 = por %p36, %p37
      %p39 = scmp.ne.s32.totalorder %s31, %s33
      %p40 = scmp.eq.s32.totalorder %s16, 1
      %p41 = por %p39, %p40
      %p42 = scmp.ne.s32.totalorder %s33, %s34
      %p43 = scmp.eq.s32.totalorder %s16, 0
      %p44 = por %p42, %p43
      %p45 = scmp.ne.s32.totalorder %s33, %s34
      %p46 = scmp.eq.s32.totalorder %s17, 1
      %p47 = por %p45, %p46
      %p49 = scmp.ne.s32.totalorder %s34, %s48
      %p50 = scmp.eq.s32.totalorder %s17, 0
      %p51 = por %p49, %p50
      %s52 = ssub.s32 %s18, %s30
      %s53 = ssub.s32 %s19, %s26
      %s54 = sor.u32 %s52, %s53
      %p55 = scmp.eq.s32.totalorder %s54, 0
      %s57 = sadd.s32 %s56, 1
      %s58 = scalar_select %p55, %s56, %s57
      %p61 = pneg %p55
      %p62 = scmp.eq.s32.totalorder %s11, 1
      %p63 = por %p61, %p62
      %p64 = scmp.ne.s32.totalorder %s56, %s59
      %p65 = scmp.eq.s32.totalorder %s11, 0
      %p66 = por %p64, %p65
      %p67 = scmp.ne.s32.totalorder %s56, %s59
      %p68 = scmp.eq.s32.totalorder %s16, 1
      %p69 = por %p67, %p68
      %p70 = scmp.ne.s32.totalorder %s59, %s60
      %p71 = scmp.eq.s32.totalorder %s16, 0
      %p72 = por %p70, %p71
      %p73 = scmp.ne.s32.totalorder %s59, %s60
      %p74 = scmp.eq.s32.totalorder %s17, 1
      %p75 = por %p73, %p74
      %p77 = scmp.ne.s32.totalorder %s60, %s76
      %p78 = scmp.eq.s32.totalorder %s17, 0
      %p79 = por %p77, %p78
      %p80 = scmp.le.s32.totalorder 1, %s11
      %p81 = scmp.lt.s32.totalorder %s11, 3
      %p82 = pnand %p80, %p81
      %p83 = pneg %p82
      // Predicated region
      $region9: #{tpu_custom_call.1} parent=5 // pred_check
        _
      $region10: #{tpu_custom_call.1} parent=5 // pred_check_branch
        %85 = sbr.rel (%p82) target = $region12
      $region11: #{tpu_custom_call.1} parent=5 // pred_region
        %s86 = ssub.s32 %s11, 1
        // Predicated region
        $region13: #{tpu_custom_call.1} parent=11 // pred_check
          %p87 = pneg %p44
        $region14: #{tpu_custom_call.1} parent=11 // pred_check_branch
          %89 = sbr.rel (%p87) target = $region16
        $region15: #{tpu_custom_call.1} parent=11 // pred_region
          %s91 = ssub.s32 384, 384
          %92 = vsyncadd [#allocation4], %s91
          %s93 = sshll.u32 %s0, 4
          %s94 = int_to_ptr.vmem [resolvable:$true] %s93
          %99 = dma.vmem_to_smem %s94, 384, [#allocation2], [#allocation4], 128, 128, 8
        $region16: #{tpu_custom_call.1} parent=11 // pred_fallthru
          _
      $region12: #{tpu_custom_call.1} parent=5 // pred_fallthru
        _
      %p100 = scmp.lt.s32.totalorder %s11, 2
      // Predicated region
      $region17: #{tpu_custom_call.1} parent=5 // pred_check
        %p101 = pneg %p100
      $region18: #{tpu_custom_call.1} parent=5 // pred_check_branch
        %103 = sbr.rel (%p101) target = $region20
      $region19: #{tpu_custom_call.1} parent=5 // pred_region
        _
      $region20: #{tpu_custom_call.1} parent=5 // pred_fallthru
        _
      %p104 = scmp.le.s32.totalorder 1, %s11
      %p105 = scmp.lt.s32.totalorder %s11, 3
      %p106 = pnand %p104, %p105
      %p107 = pneg %p106
      // Predicated region
      $region21: #{tpu_custom_call.1} parent=5 // pred_check
        _
      $region22: #{tpu_custom_call.1} parent=5 // pred_check_branch
        %109 = sbr.rel (%p106) target = $region24
      $region23: #{tpu_custom_call.1} parent=5 // pred_region
        %s110 = ssub.s32 %s11, 1
        // Predicated region
        $region25: #{tpu_custom_call.1} parent=23 // pred_check
          %p111 = pneg %p44
        $region26: #{tpu_custom_call.1} parent=23 // pred_check_branch
          %113 = sbr.rel (%p111) target = $region28
        $region27: #{tpu_custom_call.1} parent=23 // pred_region
          %114 = dma.done [#allocation4], 384
        $region28: #{tpu_custom_call.1} parent=23 // pred_fallthru
          _
        %115 = sfence
        %p116 = pneg %p44
        %p117 = pneg %p41
        %p118 = pneg %p72
        %p119 = pneg %p69
        %s120 = sand.u32 %s59, 1
        %s121 = scalar_lea.sflag [#allocation3], %s120
        %s122 = sand.u32 %s59, 1
        %s123 = smul.addr %s122, 16
        %s124 = scalar_lea.vmem [#allocation5], %s123
        %s125 = smul.u32 2, %s21
        %s126 = smul.u32 %s21, 16
        %s127 = ssub.s32 %s126, 4
        %v128 = vlaneseq
        %v129 = vshrl.u32 %v128, 7
        %v130 = vadd.s32 %v129, 8
        %v131 = vadd.s32 %v129, 16
        %v132 = vstv %s127
        %v133 = vadd.s32 %v132, %v129
        %v134 = vadd.s32 %v132, %v130
        %v135 = vadd.s32 %v132, %v131
        %v136 = vlaneseq
        %v137 = vand.u32 %v136, 127
        %v138 = vcvt.s32.f32 %v133
        %v139 = vcvt.s32.f32 %v134
        %v140 = vcvt.s32.f32 %v135
        %v141 = vmul.f32 %v138, 0.0625
        %v142 = vmul.f32 %v139, 0.0625
        %v143 = vmul.f32 %v140, 0.0625
        %v144 = vcvt.s32.f32 %v137
        %v145 = vmul.f32 %v144, 0.0625
        %v146 = vmul.f32 %v141, %v141
        %v147 = vmul.f32 %v142, %v142
        %v148 = vmul.f32 %v143, %v143
        %v149 = vmul.f32 %v145, %v145
        %v150 = vadd.f32 %v146, %v149
        %v151 = vadd.f32 %v147, %v149
        %v152 = vadd.f32 %v148, %v149
        %s153 = smul.u32 %s20, 10
        %s154 = smul.u32 %s153, 128
        %s155 = sld [smem:[#allocation2 + %s154]]
        %s156 = sadd.s32 %s153, 1
        %s157 = smul.u32 %s156, 128
        %s158 = sld [smem:[#allocation2 + %s157]]
        %s159 = sadd.s32 %s153, 2
        %s160 = smul.u32 %s159, 128
        %s161 = sld [smem:[#allocation2 + %s160]]
        %s162 = sadd.s32 %s153, 3
        %s163 = smul.u32 %s162, 128
        %s164 = sld [smem:[#allocation2 + %s163]]
        %s165 = sadd.s32 %s153, 4
        %s166 = smul.u32 %s165, 128
        %s167 = sld [smem:[#allocation2 + %s166]]
        %s168 = sadd.s32 %s153, 5
        %s169 = smul.u32 %s168, 128
        %s170 = sld [smem:[#allocation2 + %s169]]
        %s171 = sadd.s32 %s153, 6
        %s172 = smul.u32 %s171, 128
        %s173 = sld [smem:[#allocation2 + %s172]]
        %s174 = sadd.s32 %s153, 7
        %s175 = smul.u32 %s174, 128
        %s176 = sld [smem:[#allocation2 + %s175]]
        %s177 = sadd.s32 %s153, 8
        %s178 = smul.u32 %s177, 128
        %s179 = sld [smem:[#allocation2 + %s178]]
        %s180 = sadd.s32 %s153, 9
        %s181 = smul.u32 %s180, 128
        %s182 = sld [smem:[#allocation2 + %s181]]
        %v183 = vstv %s158
        %v184 = vmul.f32 %v141, %v183
        %v185 = vmul.f32 %v142, %v183
        %v186 = vmul.f32 %v143, %v183
        %v187 = vstv %s155
        %v188 = vadd.f32 %v187, %v184
        %v189 = vadd.f32 %v187, %v185
        %v190 = vadd.f32 %v187, %v186
        %v191 = vstv %s161
        %v192 = vmul.f32 %v145, %v191
        %v193 = vadd.f32 %v188, %v192
        %v194 = vadd.f32 %v189, %v192
        %v195 = vadd.f32 %v190, %v192
        %vm196 = vcmp.gt.f32.partialorder %v193, 0.0
        %vm197 = vcmp.gt.f32.partialorder %v194, 0.0
        %vm198 = vcmp.gt.f32.partialorder %v195, 0.0
        %v199 = vsel %vm196, 1.0, 0.0
        %v200 = vsel %vm197, 1.0, 0.0
        %v201 = vsel %vm198, 1.0, 0.0
        %vm202 = vcmp.lt.f32.partialorder %v193, 0.0
        %vm203 = vcmp.lt.f32.partialorder %v194, 0.0
        %vm204 = vcmp.lt.f32.partialorder %v195, 0.0
        %v205 = vsel %vm202, 1.0, 0.0
        %v206 = vsel %vm203, 1.0, 0.0
        %v207 = vsel %vm204, 1.0, 0.0
        %v208 = vsub.f32 %v199, %v205
        %v209 = vsub.f32 %v200, %v206
        %v210 = vsub.f32 %v201, %v207
        %v211 = vstv %s164
        %v212 = vadd.f32 %v150, %v211
        %v213 = vadd.f32 %v151, %v211
        %v214 = vadd.f32 %v152, %v211
        %v215 = vstv %s173
        %v216 = vmul.f32 %v141, %v215
        %v217 = vmul.f32 %v142, %v215
        %v218 = vmul.f32 %v143, %v215
        %v219 = vsub.f32 %v212, %v216
        %v220 = vsub.f32 %v213, %v217
        %v221 = vsub.f32 %v214, %v218
        %v222 = vstv %s176
        %v223 = vmul.f32 %v145, %v222
        %v224 = vsub.f32 %v219, %v223
        %v225 = vsub.f32 %v220, %v223
        %v226 = vsub.f32 %v221, %v223
        %v227 = vstv %s167
        %v228 = vadd.f32 %v150, %v227
        %v229 = vadd.f32 %v151, %v227
        %v230 = vadd.f32 %v152, %v227
        %v231 = vstv %s179
        %v232 = vmul.f32 %v141, %v231
        %v233 = vmul.f32 %v142, %v231
        %v234 = vmul.f32 %v143, %v231
        %v235 = vsub.f32 %v228, %v232
        %v236 = vsub.f32 %v229, %v233
        %v237 = vsub.f32 %v230, %v234
        %v238 = vstv %s182
        %v239 = vmul.f32 %v145, %v238
        %v240 = vsub.f32 %v235, %v239
        %v241 = vsub.f32 %v236, %v239
        %v242 = vsub.f32 %v237, %v239
        %v243 = vadd.f32 %v224, %v240
        %v244 = vadd.f32 %v225, %v241
        %v245 = vadd.f32 %v226, %v242
        %v246 = vstv %s170
        %v247 = vsub.f32 %v243, %v246
        %v248 = vsub.f32 %v244, %v246
        %v249 = vsub.f32 %v245, %v246
        %v250 = vmul.f32 %v247, 0.5
        %v251 = vmul.f32 %v248, 0.5
        %v252 = vmul.f32 %v249, 0.5
        %v253 = vmul.f32 %v224, %v240
        %v254 = vmul.f32 %v225, %v241
        %v255 = vmul.f32 %v226, %v242
        %v256 = vrsqrt.pop %v253
        %v257 = vmul.f32 %v253, %v256
        %vm258 = vcmp.eq.f32.partialorder %v253, inf
        %v259 = vsel %vm258, %v253, %v257
        %vm260 = vcmp.eq.f32.partialorder %v253, 0.0
        %v261 = vand.u32 %v253, 2147483648
        %v262 = vsel %vm260, %v261, %v259
        %v263 = vrsqrt.pop %v254
        %v264 = vmul.f32 %v254, %v263
        %vm265 = vcmp.eq.f32.partialorder %v254, inf
        %v266 = vsel %vm265, %v254, %v264
        %vm267 = vcmp.eq.f32.partialorder %v254, 0.0
        %v268 = vand.u32 %v254, 2147483648
        %v269 = vsel %vm267, %v268, %v266
        %v270 = vrsqrt.pop %v255
        %v271 = vmul.f32 %v255, %v270
        %vm272 = vcmp.eq.f32.partialorder %v255, inf
        %v273 = vsel %vm272, %v255, %v271
        %vm274 = vcmp.eq.f32.partialorder %v255, 0.0
        %v275 = vand.u32 %v255, 2147483648
        %v276 = vsel %vm274, %v275, %v273
        %v277 = vadd.f32 %v262, 1e-05
        %v278 = vadd.f32 %v269, 1e-05
        %v279 = vadd.f32 %v276, 1e-05
        %v280 = vrcp.pop %v277
        %v281 = vmul.f32 %v250, %v280
        %v282 = vrcp.pop %v278
        %v283 = vmul.f32 %v251, %v282
        %v284 = vrcp.pop %v279
        %v285 = vmul.f32 %v252, %v284
        %v286 = vmax.f32 %v281, -0.99999
        %v287 = vmax.f32 %v283, -0.99999
        %v288 = vmax.f32 %v285, -0.99999
        %v289 = vmin.f32 %v286, 0.99999
        %v290 = vmin.f32 %v287, 0.99999
        %v291 = vmin.f32 %v288, 0.99999
        %v292 = vand.u32 2147483647, %v289
        %v293 = vand.u32 2147483647, %v290
        %v294 = vand.u32 2147483647, %v291
        %vm295 = vcmp.le.f32.partialorder %v292, 0.5
        %vm296 = vcmp.le.f32.partialorder %v293, 0.5
        %vm297 = vcmp.le.f32.partialorder %v294, 0.5
        %v298 = vsub.f32 1.0, %v292
        %v299 = vsub.f32 1.0, %v293
        %v300 = vsub.f32 1.0, %v294
        %v301 = vmul.f32 %v298, 0.5
        %v302 = vmul.f32 %v299, 0.5
        %v303 = vmul.f32 %v300, 0.5
        %v304 = vmax.f32 %v301, 0.0
        %v305 = vmax.f32 %v302, 0.0
        %v306 = vmax.f32 %v303, 0.0
        %v307 = vrsqrt.pop %v304
        %v308 = vmul.f32 %v304, %v307
        %vm309 = vcmp.eq.f32.partialorder %v304, inf
        %v310 = vsel %vm309, %v304, %v308
        %vm311 = vcmp.eq.f32.partialorder %v304, 0.0
        %v312 = vand.u32 %v304, 2147483648
        %v313 = vsel %vm311, %v312, %v310
        %v314 = vrsqrt.pop %v305
        %v315 = vmul.f32 %v305, %v314
        %vm316 = vcmp.eq.f32.partialorder %v305, inf
        %v317 = vsel %vm316, %v305, %v315
        %vm318 = vcmp.eq.f32.partialorder %v305, 0.0
        %v319 = vand.u32 %v305, 2147483648
        %v320 = vsel %vm318, %v319, %v317
        %v321 = vrsqrt.pop %v306
        %v322 = vmul.f32 %v306, %v321
        %vm323 = vcmp.eq.f32.partialorder %v306, inf
        %v324 = vsel %vm323, %v306, %v322
        %vm325 = vcmp.eq.f32.partialorder %v306, 0.0
        %v326 = vand.u32 %v306, 2147483648
        %v327 = vsel %vm325, %v326, %v324
        %v328 = vsel %vm295, %v289, %v313
        %v329 = vsel %vm296, %v290, %v320
        %v330 = vsel %vm297, %v291, %v327
        %v331 = vmul.f32 %v328, %v328
        %v332 = vmul.f32 %v329, %v329
        %v333 = vmul.f32 %v330, %v330
        %v334 = vmul.f32 %v331, 0.0421632
        %v335 = vmul.f32 %v332, 0.0421632
        %v336 = vmul.f32 %v333, 0.0421632
        %v337 = vadd.f32 %v334, 0.024181312
        %v338 = vadd.f32 %v335, 0.024181312
        %v339 = vadd.f32 %v336, 0.024181312
        %v340 = vmul.f32 %v337, %v331
        %v341 = vmul.f32 %v338, %v332
        %v342 = vmul.f32 %v339, %v333
        %v343 = vadd.f32 %v340, 0.045470025
        %v344 = vadd.f32 %v341, 0.045470025
        %v345 = vadd.f32 %v342, 0.045470025
        %v346 = vmul.f32 %v343, %v331
        %v347 = vmul.f32 %v344, %v332
        %v348 = vmul.f32 %v345, %v333
        %v349 = vadd.f32 %v346, 0.074953005
        %v350 = vadd.f32 %v347, 0.074953005
        %v351 = vadd.f32 %v348, 0.074953005
        %v352 = vmul.f32 %v349, %v331
        %v353 = vmul.f32 %v350, %v332
        %v354 = vmul.f32 %v351, %v333
        %v355 = vadd.f32 %v352, 0.16666752
        %v356 = vadd.f32 %v353, 0.16666752
        %v357 = vadd.f32 %v354, 0.16666752
        %v358 = vmul.f32 %v328, %v331
        %v359 = vmul.f32 %v329, %v332
        %v360 = vmul.f32 %v330, %v333
        %v361 = vmul.f32 %v358, %v355
        %v362 = vmul.f32 %v359, %v356
        %v363 = vmul.f32 %v360, %v357
        %v364 = vadd.f32 %v328, %v361
        %v365 = vadd.f32 %v329, %v362
        %v366 = vadd.f32 %v330, %v363
        %v367 = vsub.f32 1.5707964, %v364
        %v368 = vsub.f32 1.5707964, %v365
        %v369 = vsub.f32 1.5707964, %v366
        %v370 = vmul.f32 %v364, 2.0
        %v371 = vmul.f32 %v365, 2.0
        %v372 = vmul.f32 %v366, 2.0
        %vm373 = vcmp.lt.f32.partialorder %v289, 0.0
        %vm374 = vcmp.lt.f32.partialorder %v290, 0.0
        %vm375 = vcmp.lt.f32.partialorder %v291, 0.0
        %v376 = vsub.f32 3.1415927, %v370
        %v377 = vsub.f32 3.1415927, %v371
        %v378 = vsub.f32 3.1415927, %v372
        %v379 = vsel %vm373, %v376, %v370
        %v380 = vsel %vm374, %v377, %v371
        %v381 = vsel %vm375, %v378, %v372
        %v382 = vsel %vm295, %v367, %v379
        %v383 = vsel %vm296, %v368, %v380
        %v384 = vsel %vm297, %v369, %v381
        %v385 = vmul.f32 %v208, %v382
        %v386 = vmul.f32 %v209, %v383
        %v387 = vmul.f32 %v210, %v384
        %v388 = vadd.f32 %v385, 0.0
        %v389 = vadd.f32 %v386, 0.0
        %v390 = vadd.f32 %v387, 0.0
        %s391 = sadd.s32 %s154, 1
        %s392 = sld [smem:[#allocation2 + %s391]]
        %s393 = sadd.s32 %s157, 1
        %s394 = sld [smem:[#allocation2 + %s393]]
        %s395 = sadd.s32 %s160, 1
        %s396 = sld [smem:[#allocation2 + %s395]]
        %s397 = sadd.s32 %s163, 1
        %s398 = sld [smem:[#allocation2 + %s397]]
        %s399 = sadd.s32 %s166, 1
        %s400 = sld [smem:[#allocation2 + %s399]]
        %s401 = sadd.s32 %s169, 1
        %s402 = sld [smem:[#allocation2 + %s401]]
        %s403 = sadd.s32 %s172, 1
        %s404 = sld [smem:[#allocation2 + %s403]]
        %s405 = sadd.s32 %s175, 1
        %s406 = sld [smem:[#allocation2 + %s405]]
        %s407 = sadd.s32 %s178, 1
        %s408 = sld [smem:[#allocation2 + %s407]]
        %s409 = sadd.s32 %s181, 1
        %s410 = sld [smem:[#allocation2 + %s409]]
        %v411 = vstv %s394
        %v412 = vmul.f32 %v141, %v411
        %v413 = vmul.f32 %v142, %v411
        %v414 = vmul.f32 %v143, %v411
        %v415 = vstv %s392
        %v416 = vadd.f32 %v415, %v412
        %v417 = vadd.f32 %v415, %v413
        %v418 = vadd.f32 %v415, %v414
        %v419 = vstv %s396
        %v420 = vmul.f32 %v145, %v419
        %v421 = vadd.f32 %v416, %v420
        %v422 = vadd.f32 %v417, %v420
        %v423 = vadd.f32 %v418, %v420
        %vm424 = vcmp.gt.f32.partialorder %v421, 0.0
        %vm425 = vcmp.gt.f32.partialorder %v422, 0.0
        %vm426 = vcmp.gt.f32.partialorder %v423, 0.0
        %v427 = vsel %vm424, 1.0, 0.0
        %v428 = vsel %vm425, 1.0, 0.0
        %v429 = vsel %vm426, 1.0, 0.0
        %vm430 = vcmp.lt.f32.partialorder %v421, 0.0
        %vm431 = vcmp.lt.f32.partialorder %v422, 0.0
        %vm432 = vcmp.lt.f32.partialorder %v423, 0.0
        %v433 = vsel %vm430, 1.0, 0.0
        %v434 = vsel %vm431, 1.0, 0.0
        %v435 = vsel %vm432, 1.0, 0.0
        %v436 = vsub.f32 %v427, %v433
        %v437 = vsub.f32 %v428, %v434
        %v438 = vsub.f32 %v429, %v435
        %v439 = vstv %s398
        %v440 = vadd.f32 %v150, %v439
        %v441 = vadd.f32 %v151, %v439
        %v442 = vadd.f32 %v152, %v439
        %v443 = vstv %s404
        %v444 = vmul.f32 %v141, %v443
        %v445 = vmul.f32 %v142, %v443
        %v446 = vmul.f32 %v143, %v443
        %v447 = vsub.f32 %v440, %v444
        %v448 = vsub.f32 %v441, %v445
        %v449 = vsub.f32 %v442, %v446
        %v450 = vstv %s406
        %v451 = vmul.f32 %v145, %v450
        %v452 = vsub.f32 %v447, %v451
        %v453 = vsub.f32 %v448, %v451
        %v454 = vsub.f32 %v449, %v451
        %v455 = vstv %s400
        %v456 = vadd.f32 %v150, %v455
        %v457 = vadd.f32 %v151, %v455
        %v458 = vadd.f32 %v152, %v455
        %v459 = vstv %s408
        %v460 = vmul.f32 %v141, %v459
        %v461 = vmul.f32 %v142, %v459
        %v462 = vmul.f32 %v143, %v459
        %v463 = vsub.f32 %v456, %v460
        %v464 = vsub.f32 %v457, %v461
        %v465 = vsub.f32 %v458, %v462
        %v466 = vstv %s410
        %v467 = vmul.f32 %v145, %v466
        %v468 = vsub.f32 %v463, %v467
        %v469 = vsub.f32 %v464, %v467
        %v470 = vsub.f32 %v465, %v467
        %v471 = vadd.f32 %v452, %v468
        %v472 = vadd.f32 %v453, %v469
        %v473 = vadd.f32 %v454, %v470
        %v474 = vstv %s402
        %v475 = vsub.f32 %v471, %v474
        %v476 = vsub.f32 %v472, %v474
        %v477 = vsub.f32 %v473, %v474
        %v478 = vmul.f32 %v475, 0.5
        %v479 = vmul.f32 %v476, 0.5
        %v480 = vmul.f32 %v477, 0.5
        %v481 = vmul.f32 %v452, %v468
        %v482 = vmul.f32 %v453, %v469
        %v483 = vmul.f32 %v454, %v470
        %v484 = vrsqrt.pop %v481
        %v485 = vmul.f32 %v481, %v484
        %vm486 = vcmp.eq.f32.partialorder %v481, inf
        %v487 = vsel %vm486, %v481, %v485
        %vm488 = vcmp.eq.f32.partialorder %v481, 0.0
        %v489 = vand.u32 %v481, 2147483648
        %v490 = vsel %vm488, %v489, %v487
        %v491 = vrsqrt.pop %v482
        %v492 = vmul.f32 %v482, %v491
        %vm493 = vcmp.eq.f32.partialorder %v482, inf
        %v494 = vsel %vm493, %v482, %v492
        %vm495 = vcmp.eq.f32.partialorder %v482, 0.0
        %v496 = vand.u32 %v482, 2147483648
        %v497 = vsel %vm495, %v496, %v494
        %v498 = vrsqrt.pop %v483
        %v499 = vmul.f32 %v483, %v498
        %vm500 = vcmp.eq.f32.partialorder %v483, inf
        %v501 = vsel %vm500, %v483, %v499
        %vm502 = vcmp.eq.f32.partialorder %v483, 0.0
        %v503 = vand.u32 %v483, 2147483648
        %v504 = vsel %vm502, %v503, %v501
        %v505 = vadd.f32 %v490, 1e-05
        %v506 = vadd.f32 %v497, 1e-05
        %v507 = vadd.f32 %v504, 1e-05
        %v508 = vrcp.pop %v505
        %v509 = vmul.f32 %v478, %v508
        %v510 = vrcp.pop %v506
        %v511 = vmul.f32 %v479, %v510
        %v512 = vrcp.pop %v507
        %v513 = vmul.f32 %v480, %v512
        %v514 = vmax.f32 %v509, -0.99999
        %v515 = vmax.f32 %v511, -0.99999
        %v516 = vmax.f32 %v513, -0.99999
        %v517 = vmin.f32 %v514, 0.99999
        %v518 = vmin.f32 %v515, 0.99999
        %v519 = vmin.f32 %v516, 0.99999
        %v520 = vand.u32 2147483647, %v517
        %v521 = vand.u32 2147483647, %v518
        %v522 = vand.u32 2147483647, %v519
        %vm523 = vcmp.le.f32.partialorder %v520, 0.5
        %vm524 = vcmp.le.f32.partialorder %v521, 0.5
        %vm525 = vcmp.le.f32.partialorder %v522, 0.5
        %v526 = vsub.f32 1.0, %v520
        %v527 = vsub.f32 1.0, %v521
        %v528 = vsub.f32 1.0, %v522
        %v529 = vmul.f32 %v526, 0.5
        %v530 = vmul.f32 %v527, 0.5
        %v531 = vmul.f32 %v528, 0.5
        %v532 = vmax.f32 %v529, 0.0
        %v533 = vmax.f32 %v530, 0.0
        %v534 = vmax.f32 %v531, 0.0
        %v535 = vrsqrt.pop %v532
        %v536 = vmul.f32 %v532, %v535
        %vm537 = vcmp.eq.f32.partialorder %v532, inf
        %v538 = vsel %vm537, %v532, %v536
        %vm539 = vcmp.eq.f32.partialorder %v532, 0.0
        %v540 = vand.u32 %v532, 2147483648
        %v541 = vsel %vm539, %v540, %v538
        %v542 = vrsqrt.pop %v533
        %v543 = vmul.f32 %v533, %v542
        %vm544 = vcmp.eq.f32.partialorder %v533, inf
        %v545 = vsel %vm544, %v533, %v543
        %vm546 = vcmp.eq.f32.partialorder %v533, 0.0
        %v547 = vand.u32 %v533, 2147483648
        %v548 = vsel %vm546, %v547, %v545
        %v549 = vrsqrt.pop %v534
        %v550 = vmul.f32 %v534, %v549
        %vm551 = vcmp.eq.f32.partialorder %v534, inf
        %v552 = vsel %vm551, %v534, %v550
        %vm553 = vcmp.eq.f32.partialorder %v534, 0.0
        %v554 = vand.u32 %v534, 2147483648
        %v555 = vsel %vm553, %v554, %v552
        %v556 = vsel %vm523, %v517, %v541
        %v557 = vsel %vm524, %v518, %v548
        %v558 = vsel %vm525, %v519, %v555
        %v559 = vmul.f32 %v556, %v556
        %v560 = vmul.f32 %v557, %v557
        %v561 = vmul.f32 %v558, %v558
        %v562 = vmul.f32 %v559, 0.0421632
        %v563 = vmul.f32 %v560, 0.0421632
        %v564 = vmul.f32 %v561, 0.0421632
        %v565 = vadd.f32 %v562, 0.024181312
        %v566 = vadd.f32 %v563, 0.024181312
        %v567 = vadd.f32 %v564, 0.024181312
        %v568 = vmul.f32 %v565, %v559
        %v569 = vmul.f32 %v566, %v560
        %v570 = vmul.f32 %v567, %v561
        %v571 = vadd.f32 %v568, 0.045470025
        %v572 = vadd.f32 %v569, 0.045470025
        %v573 = vadd.f32 %v570, 0.045470025
        %v574 = vmul.f32 %v571, %v559
        %v575 = vmul.f32 %v572, %v560
        %v576 = vmul.f32 %v573, %v561
        %v577 = vadd.f32 %v574, 0.074953005
        %v578 = vadd.f32 %v575, 0.074953005
        %v579 = vadd.f32 %v576, 0.074953005
        %v580 = vmul.f32 %v577, %v559
        %v581 = vmul.f32 %v578, %v560
        %v582 = vmul.f32 %v579, %v561
        %v583 = vadd.f32 %v580, 0.16666752
        %v584 = vadd.f32 %v581, 0.16666752
        %v585 = vadd.f32 %v582, 0.16666752
        %v586 = vmul.f32 %v556, %v559
        %v587 = vmul.f32 %v557, %v560
        %v588 = vmul.f32 %v558, %v561
        %v589 = vmul.f32 %v586, %v583
        %v590 = vmul.f32 %v587, %v584
        %v591 = vmul.f32 %v588, %v585
        %v592 = vadd.f32 %v556, %v589
        %v593 = vadd.f32 %v557, %v590
        %v594 = vadd.f32 %v558, %v591
        %v595 = vsub.f32 1.5707964, %v592
        %v596 = vsub.f32 1.5707964, %v593
        %v597 = vsub.f32 1.5707964, %v594
        %v598 = vmul.f32 %v592, 2.0
        %v599 = vmul.f32 %v593, 2.0
        %v600 = vmul.f32 %v594, 2.0
        %vm601 = vcmp.lt.f32.partialorder %v517, 0.0
        %vm602 = vcmp.lt.f32.partialorder %v518, 0.0
        %vm603 = vcmp.lt.f32.partialorder %v519, 0.0
        %v604 = vsub.f32 3.1415927, %v598
        %v605 = vsub.f32 3.1415927, %v599
        %v606 = vsub.f32 3.1415927, %v600
        %v607 = vsel %vm601, %v604, %v598
        %v608 = vsel %vm602, %v605, %v599
        %v609 = vsel %vm603, %v606, %v600
        %v610 = vsel %vm523, %v595, %v607
        %v611 = vsel %vm524, %v596, %v608
        %v612 = vsel %vm525, %v597, %v609
        %v613 = vmul.f32 %v436, %v610
        %v614 = vmul.f32 %v437, %v611
        %v615 = vmul.f32 %v438, %v612
        %v616 = vadd.f32 %v388, %v613
        %v617 = vadd.f32 %v389, %v614
        %v618 = vadd.f32 %v390, %v615
        %s619 = sadd.s32 %s154, 2
        %s620 = sld [smem:[#allocation2 + %s619]]
        %s621 = sadd.s32 %s157, 2
        %s622 = sld [smem:[#allocation2 + %s621]]
        %s623 = sadd.s32 %s160, 2
        %s624 = sld [smem:[#allocation2 + %s623]]
        %s625 = sadd.s32 %s163, 2
        %s626 = sld [smem:[#allocation2 + %s625]]
        %s627 = sadd.s32 %s166, 2
        %s628 = sld [smem:[#allocation2 + %s627]]
        %s629 = sadd.s32 %s169, 2
        %s630 = sld [smem:[#allocation2 + %s629]]
        %s631 = sadd.s32 %s172, 2
        %s632 = sld [smem:[#allocation2 + %s631]]
        %s633 = sadd.s32 %s175, 2
        %s634 = sld [smem:[#allocation2 + %s633]]
        %s635 = sadd.s32 %s178, 2
        %s636 = sld [smem:[#allocation2 + %s635]]
        %s637 = sadd.s32 %s181, 2
        %s638 = sld [smem:[#allocation2 + %s637]]
        %v639 = vstv %s622
        %v640 = vmul.f32 %v141, %v639
        %v641 = vmul.f32 %v142, %v639
        %v642 = vmul.f32 %v143, %v639
        %v643 = vstv %s620
        %v644 = vadd.f32 %v643, %v640
        %v645 = vadd.f32 %v643, %v641
        %v646 = vadd.f32 %v643, %v642
        %v647 = vstv %s624
        %v648 = vmul.f32 %v145, %v647
        %v649 = vadd.f32 %v644, %v648
        %v650 = vadd.f32 %v645, %v648
        %v651 = vadd.f32 %v646, %v648
        %vm652 = vcmp.gt.f32.partialorder %v649, 0.0
        %vm653 = vcmp.gt.f32.partialorder %v650, 0.0
        %vm654 = vcmp.gt.f32.partialorder %v651, 0.0
        %v655 = vsel %vm652, 1.0, 0.0
        %v656 = vsel %vm653, 1.0, 0.0
        %v657 = vsel %vm654, 1.0, 0.0
        %vm658 = vcmp.lt.f32.partialorder %v649, 0.0
        %vm659 = vcmp.lt.f32.partialorder %v650, 0.0
        %vm660 = vcmp.lt.f32.partialorder %v651, 0.0
        %v661 = vsel %vm658, 1.0, 0.0
        %v662 = vsel %vm659, 1.0, 0.0
        %v663 = vsel %vm660, 1.0, 0.0
        %v664 = vsub.f32 %v655, %v661
        %v665 = vsub.f32 %v656, %v662
        %v666 = vsub.f32 %v657, %v663
        %v667 = vstv %s626
        %v668 = vadd.f32 %v150, %v667
        %v669 = vadd.f32 %v151, %v667
        %v670 = vadd.f32 %v152, %v667
        %v671 = vstv %s632
        %v672 = vmul.f32 %v141, %v671
        %v673 = vmul.f32 %v142, %v671
        %v674 = vmul.f32 %v143, %v671
        %v675 = vsub.f32 %v668, %v672
        %v676 = vsub.f32 %v669, %v673
        %v677 = vsub.f32 %v670, %v674
        %v678 = vstv %s634
        %v679 = vmul.f32 %v145, %v678
        %v680 = vsub.f32 %v675, %v679
        %v681 = vsub.f32 %v676, %v679
        %v682 = vsub.f32 %v677, %v679
        %v683 = vstv %s628
        %v684 = vadd.f32 %v150, %v683
        %v685 = vadd.f32 %v151, %v683
        %v686 = vadd.f32 %v152, %v683
        %v687 = vstv %s636
        %v688 = vmul.f32 %v141, %v687
        %v689 = vmul.f32 %v142, %v687
        %v690 = vmul.f32 %v143, %v687
        %v691 = vsub.f32 %v684, %v688
        %v692 = vsub.f32 %v685, %v689
        %v693 = vsub.f32 %v686, %v690
        %v694 = vstv %s638
        %v695 = vmul.f32 %v145, %v694
        %v696 = vsub.f32 %v691, %v695
        %v697 = vsub.f32 %v692, %v695
        %v698 = vsub.f32 %v693, %v695
        %v699 = vadd.f32 %v680, %v696
        %v700 = vadd.f32 %v681, %v697
        %v701 = vadd.f32 %v682, %v698
        %v702 = vstv %s630
        %v703 = vsub.f32 %v699, %v702
        %v704 = vsub.f32 %v700, %v702
        %v705 = vsub.f32 %v701, %v702
        %v706 = vmul.f32 %v703, 0.5
        %v707 = vmul.f32 %v704, 0.5
        %v708 = vmul.f32 %v705, 0.5
        %v709 = vmul.f32 %v680, %v696
        %v710 = vmul.f32 %v681, %v697
        %v711 = vmul.f32 %v682, %v698
        %v712 = vrsqrt.pop %v709
        %v713 = vmul.f32 %v709, %v712
        %vm714 = vcmp.eq.f32.partialorder %v709, inf
        %v715 = vsel %vm714, %v709, %v713
        %vm716 = vcmp.eq.f32.partialorder %v709, 0.0
        %v717 = vand.u32 %v709, 2147483648
        %v718 = vsel %vm716, %v717, %v715
        %v719 = vrsqrt.pop %v710
        %v720 = vmul.f32 %v710, %v719
        %vm721 = vcmp.eq.f32.partialorder %v710, inf
        %v722 = vsel %vm721, %v710, %v720
        %vm723 = vcmp.eq.f32.partialorder %v710, 0.0
        %v724 = vand.u32 %v710, 2147483648
        %v725 = vsel %vm723, %v724, %v722
        %v726 = vrsqrt.pop %v711
        %v727 = vmul.f32 %v711, %v726
        %vm728 = vcmp.eq.f32.partialorder %v711, inf
        %v729 = vsel %vm728, %v711, %v727
        %vm730 = vcmp.eq.f32.partialorder %v711, 0.0
        %v731 = vand.u32 %v711, 2147483648
        %v732 = vsel %vm730, %v731, %v729
        %v733 = vadd.f32 %v718, 1e-05
        %v734 = vadd.f32 %v725, 1e-05
        %v735 = vadd.f32 %v732, 1e-05
        %v736 = vrcp.pop %v733
        %v737 = vmul.f32 %v706, %v736
        %v738 = vrcp.pop %v734
        %v739 = vmul.f32 %v707, %v738
        %v740 = vrcp.pop %v735
        %v741 = vmul.f32 %v708, %v740
        %v742 = vmax.f32 %v737, -0.99999
        %v743 = vmax.f32 %v739, -0.99999
        %v744 = vmax.f32 %v741, -0.99999
        %v745 = vmin.f32 %v742, 0.99999
        %v746 = vmin.f32 %v743, 0.99999
        %v747 = vmin.f32 %v744, 0.99999
        %v748 = vand.u32 2147483647, %v745
        %v749 = vand.u32 2147483647, %v746
        %v750 = vand.u32 2147483647, %v747
        %vm751 = vcmp.le.f32.partialorder %v748, 0.5
        %vm752 = vcmp.le.f32.partialorder %v749, 0.5
        %vm753 = vcmp.le.f32.partialorder %v750, 0.5
        %v754 = vsub.f32 1.0, %v748
        %v755 = vsub.f32 1.0, %v749
        %v756 = vsub.f32 1.0, %v750
        %v757 = vmul.f32 %v754, 0.5
        %v758 = vmul.f32 %v755, 0.5
        %v759 = vmul.f32 %v756, 0.5
        %v760 = vmax.f32 %v757, 0.0
        %v761 = vmax.f32 %v758, 0.0
        %v762 = vmax.f32 %v759, 0.0
        %v763 = vrsqrt.pop %v760
        %v764 = vmul.f32 %v760, %v763
        %vm765 = vcmp.eq.f32.partialorder %v760, inf
        %v766 = vsel %vm765, %v760, %v764
        %vm767 = vcmp.eq.f32.partialorder %v760, 0.0
        %v768 = vand.u32 %v760, 2147483648
        %v769 = vsel %vm767, %v768, %v766
        %v770 = vrsqrt.pop %v761
        %v771 = vmul.f32 %v761, %v770
        %vm772 = vcmp.eq.f32.partialorder %v761, inf
        %v773 = vsel %vm772, %v761, %v771
        %vm774 = vcmp.eq.f32.partialorder %v761, 0.0
        %v775 = vand.u32 %v761, 2147483648
        %v776 = vsel %vm774, %v775, %v773
        %v777 = vrsqrt.pop %v762
        %v778 = vmul.f32 %v762, %v777
        %vm779 = vcmp.eq.f32.partialorder %v762, inf
        %v780 = vsel %vm779, %v762, %v778
        %vm781 = vcmp.eq.f32.partialorder %v762, 0.0
        %v782 = vand.u32 %v762, 2147483648
        %v783 = vsel %vm781, %v782, %v780
        %v784 = vsel %vm751, %v745, %v769
        %v785 = vsel %vm752, %v746, %v776
        %v786 = vsel %vm753, %v747, %v783
        %v787 = vmul.f32 %v784, %v784
        %v788 = vmul.f32 %v785, %v785
        %v789 = vmul.f32 %v786, %v786
        %v790 = vmul.f32 %v787, 0.0421632
        %v791 = vmul.f32 %v788, 0.0421632
        %v792 = vmul.f32 %v789, 0.0421632
        %v793 = vadd.f32 %v790, 0.024181312
        %v794 = vadd.f32 %v791, 0.024181312
        %v795 = vadd.f32 %v792, 0.024181312
        %v796 = vmul.f32 %v793, %v787
        %v797 = vmul.f32 %v794, %v788
        %v798 = vmul.f32 %v795, %v789
        %v799 = vadd.f32 %v796, 0.045470025
        %v800 = vadd.f32 %v797, 0.045470025
        %v801 = vadd.f32 %v798, 0.045470025
        %v802 = vmul.f32 %v799, %v787
        %v803 = vmul.f32 %v800, %v788
        %v804 = vmul.f32 %v801, %v789
        %v805 = vadd.f32 %v802, 0.074953005
        %v806 = vadd.f32 %v803, 0.074953005
        %v807 = vadd.f32 %v804, 0.074953005
        %v808 = vmul.f32 %v805, %v787
        %v809 = vmul.f32 %v806, %v788
        %v810 = vmul.f32 %v807, %v789
        %v811 = vadd.f32 %v808, 0.16666752
        %v812 = vadd.f32 %v809, 0.16666752
        %v813 = vadd.f32 %v810, 0.16666752
        %v814 = vmul.f32 %v784, %v787
        %v815 = vmul.f32 %v785, %v788
        %v816 = vmul.f32 %v786, %v789
        %v817 = vmul.f32 %v814, %v811
        %v818 = vmul.f32 %v815, %v812
        %v819 = vmul.f32 %v816, %v813
        %v820 = vadd.f32 %v784, %v817
        %v821 = vadd.f32 %v785, %v818
        %v822 = vadd.f32 %v786, %v819
        %v823 = vsub.f32 1.5707964, %v820
        %v824 = vsub.f32 1.5707964, %v821
        %v825 = vsub.f32 1.5707964, %v822
        %v826 = vmul.f32 %v820, 2.0
        %v827 = vmul.f32 %v821, 2.0
        %v828 = vmul.f32 %v822, 2.0
        %vm829 = vcmp.lt.f32.partialorder %v745, 0.0
        %vm830 = vcmp.lt.f32.partialorder %v746, 0.0
        %vm831 = vcmp.lt.f32.partialorder %v747, 0.0
        %v832 = vsub.f32 3.1415927, %v826
        %v833 = vsub.f32 3.1415927, %v827
        %v834 = vsub.f32 3.1415927, %v828
        %v835 = vsel %vm829, %v832, %v826
        %v836 = vsel %vm830, %v833, %v827
        %v837 = vsel %vm831, %v834, %v828
        %v838 = vsel %vm751, %v823, %v835
        %v839 = vsel %vm752, %v824, %v836
        %v840 = vsel %vm753, %v825, %v837
        %v841 = vmul.f32 %v664, %v838
        %v842 = vmul.f32 %v665, %v839
        %v843 = vmul.f32 %v666, %v840
        %v844 = vadd.f32 %v616, %v841
        %v845 = vadd.f32 %v617, %v842
        %v846 = vadd.f32 %v618, %v843
        %s847 = sadd.s32 %s154, 3
        %s848 = sld [smem:[#allocation2 + %s847]]
        %s849 = sadd.s32 %s157, 3
        %s850 = sld [smem:[#allocation2 + %s849]]
        %s851 = sadd.s32 %s160, 3
        %s852 = sld [smem:[#allocation2 + %s851]]
        %s853 = sadd.s32 %s163, 3
        %s854 = sld [smem:[#allocation2 + %s853]]
        %s855 = sadd.s32 %s166, 3
        %s856 = sld [smem:[#allocation2 + %s855]]
        %s857 = sadd.s32 %s169, 3
        %s858 = sld [smem:[#allocation2 + %s857]]
        %s859 = sadd.s32 %s172, 3
        %s860 = sld [smem:[#allocation2 + %s859]]
        %s861 = sadd.s32 %s175, 3
        %s862 = sld [smem:[#allocation2 + %s861]]
        %s863 = sadd.s32 %s178, 3
        %s864 = sld [smem:[#allocation2 + %s863]]
        %s865 = sadd.s32 %s181, 3
        %s866 = sld [smem:[#allocation2 + %s865]]
        %v867 = vstv %s850
        %v868 = vmul.f32 %v141, %v867
        %v869 = vmul.f32 %v142, %v867
        %v870 = vmul.f32 %v143, %v867
        %v871 = vstv %s848
        %v872 = vadd.f32 %v871, %v868
        %v873 = vadd.f32 %v871, %v869
        %v874 = vadd.f32 %v871, %v870
        %v875 = vstv %s852
        %v876 = vmul.f32 %v145, %v875
        %v877 = vadd.f32 %v872, %v876
        %v878 = vadd.f32 %v873, %v876
        %v879 = vadd.f32 %v874, %v876
        %vm880 = vcmp.gt.f32.partialorder %v877, 0.0
        %vm881 = vcmp.gt.f32.partialorder %v878, 0.0
        %vm882 = vcmp.gt.f32.partialorder %v879, 0.0
        %v883 = vsel %vm880, 1.0, 0.0
        %v884 = vsel %vm881, 1.0, 0.0
        %v885 = vsel %vm882, 1.0, 0.0
        %vm886 = vcmp.lt.f32.partialorder %v877, 0.0
        %vm887 = vcmp.lt.f32.partialorder %v878, 0.0
        %vm888 = vcmp.lt.f32.partialorder %v879, 0.0
        %v889 = vsel %vm886, 1.0, 0.0
        %v890 = vsel %vm887, 1.0, 0.0
        %v891 = vsel %vm888, 1.0, 0.0
        %v892 = vsub.f32 %v883, %v889
        %v893 = vsub.f32 %v884, %v890
        %v894 = vsub.f32 %v885, %v891
        %v895 = vstv %s854
        %v896 = vadd.f32 %v150, %v895
        %v897 = vadd.f32 %v151, %v895
        %v898 = vadd.f32 %v152, %v895
        %v899 = vstv %s860
        %v900 = vmul.f32 %v141, %v899
        %v901 = vmul.f32 %v142, %v899
        %v902 = vmul.f32 %v143, %v899
        %v903 = vsub.f32 %v896, %v900
        %v904 = vsub.f32 %v897, %v901
        %v905 = vsub.f32 %v898, %v902
        %v906 = vstv %s862
        %v907 = vmul.f32 %v145, %v906
        %v908 = vsub.f32 %v903, %v907
        %v909 = vsub.f32 %v904, %v907
        %v910 = vsub.f32 %v905, %v907
        %v911 = vstv %s856
        %v912 = vadd.f32 %v150, %v911
        %v913 = vadd.f32 %v151, %v911
        %v914 = vadd.f32 %v152, %v911
        %v915 = vstv %s864
        %v916 = vmul.f32 %v141, %v915
        %v917 = vmul.f32 %v142, %v915
        %v918 = vmul.f32 %v143, %v915
        %v919 = vsub.f32 %v912, %v916
        %v920 = vsub.f32 %v913, %v917
        %v921 = vsub.f32 %v914, %v918
        %v922 = vstv %s866
        %v923 = vmul.f32 %v145, %v922
        %v924 = vsub.f32 %v919, %v923
        %v925 = vsub.f32 %v920, %v923
        %v926 = vsub.f32 %v921, %v923
        %v927 = vadd.f32 %v908, %v924
        %v928 = vadd.f32 %v909, %v925
        %v929 = vadd.f32 %v910, %v926
        %v930 = vstv %s858
        %v931 = vsub.f32 %v927, %v930
        %v932 = vsub.f32 %v928, %v930
        %v933 = vsub.f32 %v929, %v930
        %v934 = vmul.f32 %v931, 0.5
        %v935 = vmul.f32 %v932, 0.5
        %v936 = vmul.f32 %v933, 0.5
        %v937 = vmul.f32 %v908, %v924
        %v938 = vmul.f32 %v909, %v925
        %v939 = vmul.f32 %v910, %v926
        %v940 = vrsqrt.pop %v937
        %v941 = vmul.f32 %v937, %v940
        %vm942 = vcmp.eq.f32.partialorder %v937, inf
        %v943 = vsel %vm942, %v937, %v941
        %vm944 = vcmp.eq.f32.partialorder %v937, 0.0
        %v945 = vand.u32 %v937, 2147483648
        %v946 = vsel %vm944, %v945, %v943
        %v947 = vrsqrt.pop %v938
        %v948 = vmul.f32 %v938, %v947
        %vm949 = vcmp.eq.f32.partialorder %v938, inf
        %v950 = vsel %vm949, %v938, %v948
        %vm951 = vcmp.eq.f32.partialorder %v938, 0.0
        %v952 = vand.u32 %v938, 2147483648
        %v953 = vsel %vm951, %v952, %v950
        %v954 = vrsqrt.pop %v939
        %v955 = vmul.f32 %v939, %v954
        %vm956 = vcmp.eq.f32.partialorder %v939, inf
        %v957 = vsel %vm956, %v939, %v955
        %vm958 = vcmp.eq.f32.partialorder %v939, 0.0
        %v959 = vand.u32 %v939, 2147483648
        %v960 = vsel %vm958, %v959, %v957
        %v961 = vadd.f32 %v946, 1e-05
        %v962 = vadd.f32 %v953, 1e-05
        %v963 = vadd.f32 %v960, 1e-05
        %v964 = vrcp.pop %v961
        %v965 = vmul.f32 %v934, %v964
        %v966 = vrcp.pop %v962
        %v967 = vmul.f32 %v935, %v966
        %v968 = vrcp.pop %v963
        %v969 = vmul.f32 %v936, %v968
        %v970 = vmax.f32 %v965, -0.99999
        %v971 = vmax.f32 %v967, -0.99999
        %v972 = vmax.f32 %v969, -0.99999
        %v973 = vmin.f32 %v970, 0.99999
        %v974 = vmin.f32 %v971, 0.99999
        %v975 = vmin.f32 %v972, 0.99999
        %v976 = vand.u32 2147483647, %v973
        %v977 = vand.u32 2147483647, %v974
        %v978 = vand.u32 2147483647, %v975
        %vm979 = vcmp.le.f32.partialorder %v976, 0.5
        %vm980 = vcmp.le.f32.partialorder %v977, 0.5
        %vm981 = vcmp.le.f32.partialorder %v978, 0.5
        %v982 = vsub.f32 1.0, %v976
        %v983 = vsub.f32 1.0, %v977
        %v984 = vsub.f32 1.0, %v978
        %v985 = vmul.f32 %v982, 0.5
        %v986 = vmul.f32 %v983, 0.5
        %v987 = vmul.f32 %v984, 0.5
        %v988 = vmax.f32 %v985, 0.0
        %v989 = vmax.f32 %v986, 0.0
        %v990 = vmax.f32 %v987, 0.0
        %v991 = vrsqrt.pop %v988
        %v992 = vmul.f32 %v988, %v991
        %vm993 = vcmp.eq.f32.partialorder %v988, inf
        %v994 = vsel %vm993, %v988, %v992
        %vm995 = vcmp.eq.f32.partialorder %v988, 0.0
        %v996 = vand.u32 %v988, 2147483648
        %v997 = vsel %vm995, %v996, %v994
        %v998 = vrsqrt.pop %v989
        %v999 = vmul.f32 %v989, %v998
        %vm1000 = vcmp.eq.f32.partialorder %v989, inf
        %v1001 = vsel %vm1000, %v989, %v999
        %vm1002 = vcmp.eq.f32.partialorder %v989, 0.0
        %v1003 = vand.u32 %v989, 2147483648
        %v1004 = vsel %vm1002, %v1003, %v1001
        %v1005 = vrsqrt.pop %v990
        %v1006 = vmul.f32 %v990, %v1005
        %vm1007 = vcmp.eq.f32.partialorder %v990, inf
        %v1008 = vsel %vm1007, %v990, %v1006
        %vm1009 = vcmp.eq.f32.partialorder %v990, 0.0
        %v1010 = vand.u32 %v990, 2147483648
        %v1011 = vsel %vm1009, %v1010, %v1008
        %v1012 = vsel %vm979, %v973, %v997
        %v1013 = vsel %vm980, %v974, %v1004
        %v1014 = vsel %vm981, %v975, %v1011
        %v1015 = vmul.f32 %v1012, %v1012
        %v1016 = vmul.f32 %v1013, %v1013
        %v1017 = vmul.f32 %v1014, %v1014
        %v1018 = vmul.f32 %v1015, 0.0421632
        %v1019 = vmul.f32 %v1016, 0.0421632
        %v1020 = vmul.f32 %v1017, 0.0421632
        %v1021 = vadd.f32 %v1018, 0.024181312
        %v1022 = vadd.f32 %v1019, 0.024181312
        %v1023 = vadd.f32 %v1020, 0.024181312
        %v1024 = vmul.f32 %v1021, %v1015
        %v1025 = vmul.f32 %v1022, %v1016
        %v1026 = vmul.f32 %v1023, %v1017
        %v1027 = vadd.f32 %v1024, 0.045470025
        %v1028 = vadd.f32 %v1025, 0.045470025
        %v1029 = vadd.f32 %v1026, 0.045470025
        %v1030 = vmul.f32 %v1027, %v1015
        %v1031 = vmul.f32 %v1028, %v1016
        %v1032 = vmul.f32 %v1029, %v1017
        %v1033 = vadd.f32 %v1030, 0.074953005
        %v1034 = vadd.f32 %v1031, 0.074953005
        %v1035 = vadd.f32 %v1032, 0.074953005
        %v1036 = vmul.f32 %v1033, %v1015
        %v1037 = vmul.f32 %v1034, %v1016
        %v1038 = vmul.f32 %v1035, %v1017
        %v1039 = vadd.f32 %v1036, 0.16666752
        %v1040 = vadd.f32 %v1037, 0.16666752
        %v1041 = vadd.f32 %v1038, 0.16666752
        %v1042 = vmul.f32 %v1012, %v1015
        %v1043 = vmul.f32 %v1013, %v1016
        %v1044 = vmul.f32 %v1014, %v1017
        %v1045 = vmul.f32 %v1042, %v1039
        %v1046 = vmul.f32 %v1043, %v1040
        %v1047 = vmul.f32 %v1044, %v1041
        %v1048 = vadd.f32 %v1012, %v1045
        %v1049 = vadd.f32 %v1013, %v1046
        %v1050 = vadd.f32 %v1014, %v1047
        %v1051 = vsub.f32 1.5707964, %v1048
        %v1052 = vsub.f32 1.5707964, %v1049
        %v1053 = vsub.f32 1.5707964, %v1050
        %v1054 = vmul.f32 %v1048, 2.0
        %v1055 = vmul.f32 %v1049, 2.0
        %v1056 = vmul.f32 %v1050, 2.0
        %vm1057 = vcmp.lt.f32.partialorder %v973, 0.0
        %vm1058 = vcmp.lt.f32.partialorder %v974, 0.0
        %vm1059 = vcmp.lt.f32.partialorder %v975, 0.0
        %v1060 = vsub.f32 3.1415927, %v1054
        %v1061 = vsub.f32 3.1415927, %v1055
        %v1062 = vsub.f32 3.1415927, %v1056
        %v1063 = vsel %vm1057, %v1060, %v1054
        %v1064 = vsel %vm1058, %v1061, %v1055
        %v1065 = vsel %vm1059, %v1062, %v1056
        %v1066 = vsel %vm979, %v1051, %v1063
        %v1067 = vsel %vm980, %v1052, %v1064
        %v1068 = vsel %vm981, %v1053, %v1065
        %v1069 = vmul.f32 %v892, %v1066
        %v1070 = vmul.f32 %v893, %v1067
        %v1071 = vmul.f32 %v894, %v1068
        %v1072 = vadd.f32 %v844, %v1069
        %v1073 = vadd.f32 %v845, %v1070
        %v1074 = vadd.f32 %v846, %v1071
        %s1075 = sadd.s32 %s154, 4
        %s1076 = sld [smem:[#allocation2 + %s1075]]
        %s1077 = sadd.s32 %s157, 4
        %s1078 = sld [smem:[#allocation2 + %s1077]]
        %s1079 = sadd.s32 %s160, 4
        %s1080 = sld [smem:[#allocation2 + %s1079]]
        %s1081 = sadd.s32 %s163, 4
        %s1082 = sld [smem:[#allocation2 + %s1081]]
        %s1083 = sadd.s32 %s166, 4
        %s1084 = sld [smem:[#allocation2 + %s1083]]
        %s1085 = sadd.s32 %s169, 4
        %s1086 = sld [smem:[#allocation2 + %s1085]]
        %s1087 = sadd.s32 %s172, 4
        %s1088 = sld [smem:[#allocation2 + %s1087]]
        %s1089 = sadd.s32 %s175, 4
        %s1090 = sld [smem:[#allocation2 + %s1089]]
        %s1091 = sadd.s32 %s178, 4
        %s1092 = sld [smem:[#allocation2 + %s1091]]
        %s1093 = sadd.s32 %s181, 4
        %s1094 = sld [smem:[#allocation2 + %s1093]]
        %v1095 = vstv %s1078
        %v1096 = vmul.f32 %v141, %v1095
        %v1097 = vmul.f32 %v142, %v1095
        %v1098 = vmul.f32 %v143, %v1095
        %v1099 = vstv %s1076
        %v1100 = vadd.f32 %v1099, %v1096
        %v1101 = vadd.f32 %v1099, %v1097
        %v1102 = vadd.f32 %v1099, %v1098
        %v1103 = vstv %s1080
        %v1104 = vmul.f32 %v145, %v1103
        %v1105 = vadd.f32 %v1100, %v1104
        %v1106 = vadd.f32 %v1101, %v1104
        %v1107 = vadd.f32 %v1102, %v1104
        %vm1108 = vcmp.gt.f32.partialorder %v1105, 0.0
        %vm1109 = vcmp.gt.f32.partialorder %v1106, 0.0
        %vm1110 = vcmp.gt.f32.partialorder %v1107, 0.0
        %v1111 = vsel %vm1108, 1.0, 0.0
        %v1112 = vsel %vm1109, 1.0, 0.0
        %v1113 = vsel %vm1110, 1.0, 0.0
        %vm1114 = vcmp.lt.f32.partialorder %v1105, 0.0
        %vm1115 = vcmp.lt.f32.partialorder %v1106, 0.0
        %vm1116 = vcmp.lt.f32.partialorder %v1107, 0.0
        %v1117 = vsel %vm1114, 1.0, 0.0
        %v1118 = vsel %vm1115, 1.0, 0.0
        %v1119 = vsel %vm1116, 1.0, 0.0
        %v1120 = vsub.f32 %v1111, %v1117
        %v1121 = vsub.f32 %v1112, %v1118
        %v1122 = vsub.f32 %v1113, %v1119
        %v1123 = vstv %s1082
        %v1124 = vadd.f32 %v150, %v1123
        %v1125 = vadd.f32 %v151, %v1123
        %v1126 = vadd.f32 %v152, %v1123
        %v1127 = vstv %s1088
        %v1128 = vmul.f32 %v141, %v1127
        %v1129 = vmul.f32 %v142, %v1127
        %v1130 = vmul.f32 %v143, %v1127
        %v1131 = vsub.f32 %v1124, %v1128
        %v1132 = vsub.f32 %v1125, %v1129
        %v1133 = vsub.f32 %v1126, %v1130
        %v1134 = vstv %s1090
        %v1135 = vmul.f32 %v145, %v1134
        %v1136 = vsub.f32 %v1131, %v1135
        %v1137 = vsub.f32 %v1132, %v1135
        %v1138 = vsub.f32 %v1133, %v1135
        %v1139 = vstv %s1084
        %v1140 = vadd.f32 %v150, %v1139
        %v1141 = vadd.f32 %v151, %v1139
        %v1142 = vadd.f32 %v152, %v1139
        %v1143 = vstv %s1092
        %v1144 = vmul.f32 %v141, %v1143
        %v1145 = vmul.f32 %v142, %v1143
        %v1146 = vmul.f32 %v143, %v1143
        %v1147 = vsub.f32 %v1140, %v1144
        %v1148 = vsub.f32 %v1141, %v1145
        %v1149 = vsub.f32 %v1142, %v1146
        %v1150 = vstv %s1094
        %v1151 = vmul.f32 %v145, %v1150
        %v1152 = vsub.f32 %v1147, %v1151
        %v1153 = vsub.f32 %v1148, %v1151
        %v1154 = vsub.f32 %v1149, %v1151
        %v1155 = vadd.f32 %v1136, %v1152
        %v1156 = vadd.f32 %v1137, %v1153
        %v1157 = vadd.f32 %v1138, %v1154
        %v1158 = vstv %s1086
        %v1159 = vsub.f32 %v1155, %v1158
        %v1160 = vsub.f32 %v1156, %v1158
        %v1161 = vsub.f32 %v1157, %v1158
        %v1162 = vmul.f32 %v1159, 0.5
        %v1163 = vmul.f32 %v1160, 0.5
        %v1164 = vmul.f32 %v1161, 0.5
        %v1165 = vmul.f32 %v1136, %v1152
        %v1166 = vmul.f32 %v1137, %v1153
        %v1167 = vmul.f32 %v1138, %v1154
        %v1168 = vrsqrt.pop %v1165
        %v1169 = vmul.f32 %v1165, %v1168
        %vm1170 = vcmp.eq.f32.partialorder %v1165, inf
        %v1171 = vsel %vm1170, %v1165, %v1169
        %vm1172 = vcmp.eq.f32.partialorder %v1165, 0.0
        %v1173 = vand.u32 %v1165, 2147483648
        %v1174 = vsel %vm1172, %v1173, %v1171
        %v1175 = vrsqrt.pop %v1166
        %v1176 = vmul.f32 %v1166, %v1175
        %vm1177 = vcmp.eq.f32.partialorder %v1166, inf
        %v1178 = vsel %vm1177, %v1166, %v1176
        %vm1179 = vcmp.eq.f32.partialorder %v1166, 0.0
        %v1180 = vand.u32 %v1166, 2147483648
        %v1181 = vsel %vm1179, %v1180, %v1178
        %v1182 = vrsqrt.pop %v1167
        %v1183 = vmul.f32 %v1167, %v1182
        %vm1184 = vcmp.eq.f32.partialorder %v1167, inf
        %v1185 = vsel %vm1184, %v1167, %v1183
        %vm1186 = vcmp.eq.f32.partialorder %v1167, 0.0
        %v1187 = vand.u32 %v1167, 2147483648
        %v1188 = vsel %vm1186, %v1187, %v1185
        %v1189 = vadd.f32 %v1174, 1e-05
        %v1190 = vadd.f32 %v1181, 1e-05
        %v1191 = vadd.f32 %v1188, 1e-05
        %v1192 = vrcp.pop %v1189
        %v1193 = vmul.f32 %v1162, %v1192
        %v1194 = vrcp.pop %v1190
        %v1195 = vmul.f32 %v1163, %v1194
        %v1196 = vrcp.pop %v1191
        %v1197 = vmul.f32 %v1164, %v1196
        %v1198 = vmax.f32 %v1193, -0.99999
        %v1199 = vmax.f32 %v1195, -0.99999
        %v1200 = vmax.f32 %v1197, -0.99999
        %v1201 = vmin.f32 %v1198, 0.99999
        %v1202 = vmin.f32 %v1199, 0.99999
        %v1203 = vmin.f32 %v1200, 0.99999
        %v1204 = vand.u32 2147483647, %v1201
        %v1205 = vand.u32 2147483647, %v1202
        %v1206 = vand.u32 2147483647, %v1203
        %vm1207 = vcmp.le.f32.partialorder %v1204, 0.5
        %vm1208 = vcmp.le.f32.partialorder %v1205, 0.5
        %vm1209 = vcmp.le.f32.partialorder %v1206, 0.5
        %v1210 = vsub.f32 1.0, %v1204
        %v1211 = vsub.f32 1.0, %v1205
        %v1212 = vsub.f32 1.0, %v1206
        %v1213 = vmul.f32 %v1210, 0.5
        %v1214 = vmul.f32 %v1211, 0.5
        %v1215 = vmul.f32 %v1212, 0.5
        %v1216 = vmax.f32 %v1213, 0.0
        %v1217 = vmax.f32 %v1214, 0.0
        %v1218 = vmax.f32 %v1215, 0.0
        %v1219 = vrsqrt.pop %v1216
        %v1220 = vmul.f32 %v1216, %v1219
        %vm1221 = vcmp.eq.f32.partialorder %v1216, inf
        %v1222 = vsel %vm1221, %v1216, %v1220
        %vm1223 = vcmp.eq.f32.partialorder %v1216, 0.0
        %v1224 = vand.u32 %v1216, 2147483648
        %v1225 = vsel %vm1223, %v1224, %v1222
        %v1226 = vrsqrt.pop %v1217
        %v1227 = vmul.f32 %v1217, %v1226
        %vm1228 = vcmp.eq.f32.partialorder %v1217, inf
        %v1229 = vsel %vm1228, %v1217, %v1227
        %vm1230 = vcmp.eq.f32.partialorder %v1217, 0.0
        %v1231 = vand.u32 %v1217, 2147483648
        %v1232 = vsel %vm1230, %v1231, %v1229
        %v1233 = vrsqrt.pop %v1218
        %v1234 = vmul.f32 %v1218, %v1233
        %vm1235 = vcmp.eq.f32.partialorder %v1218, inf
        %v1236 = vsel %vm1235, %v1218, %v1234
        %vm1237 = vcmp.eq.f32.partialorder %v1218, 0.0
        %v1238 = vand.u32 %v1218, 2147483648
        %v1239 = vsel %vm1237, %v1238, %v1236
        %v1240 = vsel %vm1207, %v1201, %v1225
        %v1241 = vsel %vm1208, %v1202, %v1232
        %v1242 = vsel %vm1209, %v1203, %v1239
        %v1243 = vmul.f32 %v1240, %v1240
        %v1244 = vmul.f32 %v1241, %v1241
        %v1245 = vmul.f32 %v1242, %v1242
        %v1246 = vmul.f32 %v1243, 0.0421632
        %v1247 = vmul.f32 %v1244, 0.0421632
        %v1248 = vmul.f32 %v1245, 0.0421632
        %v1249 = vadd.f32 %v1246, 0.024181312
        %v1250 = vadd.f32 %v1247, 0.024181312
        %v1251 = vadd.f32 %v1248, 0.024181312
        %v1252 = vmul.f32 %v1249, %v1243
        %v1253 = vmul.f32 %v1250, %v1244
        %v1254 = vmul.f32 %v1251, %v1245
        %v1255 = vadd.f32 %v1252, 0.045470025
        %v1256 = vadd.f32 %v1253, 0.045470025
        %v1257 = vadd.f32 %v1254, 0.045470025
        %v1258 = vmul.f32 %v1255, %v1243
        %v1259 = vmul.f32 %v1256, %v1244
        %v1260 = vmul.f32 %v1257, %v1245
        %v1261 = vadd.f32 %v1258, 0.074953005
        %v1262 = vadd.f32 %v1259, 0.074953005
        %v1263 = vadd.f32 %v1260, 0.074953005
        %v1264 = vmul.f32 %v1261, %v1243
        %v1265 = vmul.f32 %v1262, %v1244
        %v1266 = vmul.f32 %v1263, %v1245
        %v1267 = vadd.f32 %v1264, 0.16666752
        %v1268 = vadd.f32 %v1265, 0.16666752
        %v1269 = vadd.f32 %v1266, 0.16666752
        %v1270 = vmul.f32 %v1240, %v1243
        %v1271 = vmul.f32 %v1241, %v1244
        %v1272 = vmul.f32 %v1242, %v1245
        %v1273 = vmul.f32 %v1270, %v1267
        %v1274 = vmul.f32 %v1271, %v1268
        %v1275 = vmul.f32 %v1272, %v1269
        %v1276 = vadd.f32 %v1240, %v1273
        %v1277 = vadd.f32 %v1241, %v1274
        %v1278 = vadd.f32 %v1242, %v1275
        %v1279 = vsub.f32 1.5707964, %v1276
        %v1280 = vsub.f32 1.5707964, %v1277
        %v1281 = vsub.f32 1.5707964, %v1278
        %v1282 = vmul.f32 %v1276, 2.0
        %v1283 = vmul.f32 %v1277, 2.0
        %v1284 = vmul.f32 %v1278, 2.0
        %vm1285 = vcmp.lt.f32.partialorder %v1201, 0.0
        %vm1286 = vcmp.lt.f32.partialorder %v1202, 0.0
        %vm1287 = vcmp.lt.f32.partialorder %v1203, 0.0
        %v1288 = vsub.f32 3.1415927, %v1282
        %v1289 = vsub.f32 3.1415927, %v1283
        %v1290 = vsub.f32 3.1415927, %v1284
        %v1291 = vsel %vm1285, %v1288, %v1282
        %v1292 = vsel %vm1286, %v1289, %v1283
        %v1293 = vsel %vm1287, %v1290, %v1284
        %v1294 = vsel %vm1207, %v1279, %v1291
        %v1295 = vsel %vm1208, %v1280, %v1292
        %v1296 = vsel %vm1209, %v1281, %v1293
        %v1297 = vmul.f32 %v1120, %v1294
        %v1298 = vmul.f32 %v1121, %v1295
        %v1299 = vmul.f32 %v1122, %v1296
        %v1300 = vadd.f32 %v1072, %v1297
        %v1301 = vadd.f32 %v1073, %v1298
        %v1302 = vadd.f32 %v1074, %v1299
        %s1303 = sadd.s32 %s154, 5
        %s1304 = sld [smem:[#allocation2 + %s1303]]
        %s1305 = sadd.s32 %s157, 5
        %s1306 = sld [smem:[#allocation2 + %s1305]]
        %s1307 = sadd.s32 %s160, 5
        %s1308 = sld [smem:[#allocation2 + %s1307]]
        %s1309 = sadd.s32 %s163, 5
        %s1310 = sld [smem:[#allocation2 + %s1309]]
        %s1311 = sadd.s32 %s166, 5
        %s1312 = sld [smem:[#allocation2 + %s1311]]
        %s1313 = sadd.s32 %s169, 5
        %s1314 = sld [smem:[#allocation2 + %s1313]]
        %s1315 = sadd.s32 %s172, 5
        %s1316 = sld [smem:[#allocation2 + %s1315]]
        %s1317 = sadd.s32 %s175, 5
        %s1318 = sld [smem:[#allocation2 + %s1317]]
        %s1319 = sadd.s32 %s178, 5
        %s1320 = sld [smem:[#allocation2 + %s1319]]
        %s1321 = sadd.s32 %s181, 5
        %s1322 = sld [smem:[#allocation2 + %s1321]]
        %v1323 = vstv %s1306
        %v1324 = vmul.f32 %v141, %v1323
        %v1325 = vmul.f32 %v142, %v1323
        %v1326 = vmul.f32 %v143, %v1323
        %v1327 = vstv %s1304
        %v1328 = vadd.f32 %v1327, %v1324
        %v1329 = vadd.f32 %v1327, %v1325
        %v1330 = vadd.f32 %v1327, %v1326
        %v1331 = vstv %s1308
        %v1332 = vmul.f32 %v145, %v1331
        %v1333 = vadd.f32 %v1328, %v1332
        %v1334 = vadd.f32 %v1329, %v1332
        %v1335 = vadd.f32 %v1330, %v1332
        %vm1336 = vcmp.gt.f32.partialorder %v1333, 0.0
        %vm1337 = vcmp.gt.f32.partialorder %v1334, 0.0
        %vm1338 = vcmp.gt.f32.partialorder %v1335, 0.0
        %v1339 = vsel %vm1336, 1.0, 0.0
        %v1340 = vsel %vm1337, 1.0, 0.0
        %v1341 = vsel %vm1338, 1.0, 0.0
        %vm1342 = vcmp.lt.f32.partialorder %v1333, 0.0
        %vm1343 = vcmp.lt.f32.partialorder %v1334, 0.0
        %vm1344 = vcmp.lt.f32.partialorder %v1335, 0.0
        %v1345 = vsel %vm1342, 1.0, 0.0
        %v1346 = vsel %vm1343, 1.0, 0.0
        %v1347 = vsel %vm1344, 1.0, 0.0
        %v1348 = vsub.f32 %v1339, %v1345
        %v1349 = vsub.f32 %v1340, %v1346
        %v1350 = vsub.f32 %v1341, %v1347
        %v1351 = vstv %s1310
        %v1352 = vadd.f32 %v150, %v1351
        %v1353 = vadd.f32 %v151, %v1351
        %v1354 = vadd.f32 %v152, %v1351
        %v1355 = vstv %s1316
        %v1356 = vmul.f32 %v141, %v1355
        %v1357 = vmul.f32 %v142, %v1355
        %v1358 = vmul.f32 %v143, %v1355
        %v1359 = vsub.f32 %v1352, %v1356
        %v1360 = vsub.f32 %v1353, %v1357
        %v1361 = vsub.f32 %v1354, %v1358
        %v1362 = vstv %s1318
        %v1363 = vmul.f32 %v145, %v1362
        %v1364 = vsub.f32 %v1359, %v1363
        %v1365 = vsub.f32 %v1360, %v1363
        %v1366 = vsub.f32 %v1361, %v1363
        %v1367 = vstv %s1312
        %v1368 = vadd.f32 %v150, %v1367
        %v1369 = vadd.f32 %v151, %v1367
        %v1370 = vadd.f32 %v152, %v1367
        %v1371 = vstv %s1320
        %v1372 = vmul.f32 %v141, %v1371
        %v1373 = vmul.f32 %v142, %v1371
        %v1374 = vmul.f32 %v143, %v1371
        %v1375 = vsub.f32 %v1368, %v1372
        %v1376 = vsub.f32 %v1369, %v1373
        %v1377 = vsub.f32 %v1370, %v1374
        %v1378 = vstv %s1322
        %v1379 = vmul.f32 %v145, %v1378
        %v1380 = vsub.f32 %v1375, %v1379
        %v1381 = vsub.f32 %v1376, %v1379
        %v1382 = vsub.f32 %v1377, %v1379
        %v1383 = vadd.f32 %v1364, %v1380
        %v1384 = vadd.f32 %v1365, %v1381
        %v1385 = vadd.f32 %v1366, %v1382
        %v1386 = vstv %s1314
        %v1387 = vsub.f32 %v1383, %v1386
        %v1388 = vsub.f32 %v1384, %v1386
        %v1389 = vsub.f32 %v1385, %v1386
        %v1390 = vmul.f32 %v1387, 0.5
        %v1391 = vmul.f32 %v1388, 0.5
        %v1392 = vmul.f32 %v1389, 0.5
        %v1393 = vmul.f32 %v1364, %v1380
        %v1394 = vmul.f32 %v1365, %v1381
        %v1395 = vmul.f32 %v1366, %v1382
        %v1396 = vrsqrt.pop %v1393
        %v1397 = vmul.f32 %v1393, %v1396
        %vm1398 = vcmp.eq.f32.partialorder %v1393, inf
        %v1399 = vsel %vm1398, %v1393, %v1397
        %vm1400 = vcmp.eq.f32.partialorder %v1393, 0.0
        %v1401 = vand.u32 %v1393, 2147483648
        %v1402 = vsel %vm1400, %v1401, %v1399
        %v1403 = vrsqrt.pop %v1394
        %v1404 = vmul.f32 %v1394, %v1403
        %vm1405 = vcmp.eq.f32.partialorder %v1394, inf
        %v1406 = vsel %vm1405, %v1394, %v1404
        %vm1407 = vcmp.eq.f32.partialorder %v1394, 0.0
        %v1408 = vand.u32 %v1394, 2147483648
        %v1409 = vsel %vm1407, %v1408, %v1406
        %v1410 = vrsqrt.pop %v1395
        %v1411 = vmul.f32 %v1395, %v1410
        %vm1412 = vcmp.eq.f32.partialorder %v1395, inf
        %v1413 = vsel %vm1412, %v1395, %v1411
        %vm1414 = vcmp.eq.f32.partialorder %v1395, 0.0
        %v1415 = vand.u32 %v1395, 2147483648
        %v1416 = vsel %vm1414, %v1415, %v1413
        %v1417 = vadd.f32 %v1402, 1e-05
        %v1418 = vadd.f32 %v1409, 1e-05
        %v1419 = vadd.f32 %v1416, 1e-05
        %v1420 = vrcp.pop %v1417
        %v1421 = vmul.f32 %v1390, %v1420
        %v1422 = vrcp.pop %v1418
        %v1423 = vmul.f32 %v1391, %v1422
        %v1424 = vrcp.pop %v1419
        %v1425 = vmul.f32 %v1392, %v1424
        %v1426 = vmax.f32 %v1421, -0.99999
        %v1427 = vmax.f32 %v1423, -0.99999
        %v1428 = vmax.f32 %v1425, -0.99999
        %v1429 = vmin.f32 %v1426, 0.99999
        %v1430 = vmin.f32 %v1427, 0.99999
        %v1431 = vmin.f32 %v1428, 0.99999
        %v1432 = vand.u32 2147483647, %v1429
        %v1433 = vand.u32 2147483647, %v1430
        %v1434 = vand.u32 2147483647, %v1431
        %vm1435 = vcmp.le.f32.partialorder %v1432, 0.5
        %vm1436 = vcmp.le.f32.partialorder %v1433, 0.5
        %vm1437 = vcmp.le.f32.partialorder %v1434, 0.5
        %v1438 = vsub.f32 1.0, %v1432
        %v1439 = vsub.f32 1.0, %v1433
        %v1440 = vsub.f32 1.0, %v1434
        %v1441 = vmul.f32 %v1438, 0.5
        %v1442 = vmul.f32 %v1439, 0.5
        %v1443 = vmul.f32 %v1440, 0.5
        %v1444 = vmax.f32 %v1441, 0.0
        %v1445 = vmax.f32 %v1442, 0.0
        %v1446 = vmax.f32 %v1443, 0.0
        %v1447 = vrsqrt.pop %v1444
        %v1448 = vmul.f32 %v1444, %v1447
        %vm1449 = vcmp.eq.f32.partialorder %v1444, inf
        %v1450 = vsel %vm1449, %v1444, %v1448
        %vm1451 = vcmp.eq.f32.partialorder %v1444, 0.0
        %v1452 = vand.u32 %v1444, 2147483648
        %v1453 = vsel %vm1451, %v1452, %v1450
        %v1454 = vrsqrt.pop %v1445
        %v1455 = vmul.f32 %v1445, %v1454
        %vm1456 = vcmp.eq.f32.partialorder %v1445, inf
        %v1457 = vsel %vm1456, %v1445, %v1455
        %vm1458 = vcmp.eq.f32.partialorder %v1445, 0.0
        %v1459 = vand.u32 %v1445, 2147483648
        %v1460 = vsel %vm1458, %v1459, %v1457
        %v1461 = vrsqrt.pop %v1446
        %v1462 = vmul.f32 %v1446, %v1461
        %vm1463 = vcmp.eq.f32.partialorder %v1446, inf
        %v1464 = vsel %vm1463, %v1446, %v1462
        %vm1465 = vcmp.eq.f32.partialorder %v1446, 0.0
        %v1466 = vand.u32 %v1446, 2147483648
        %v1467 = vsel %vm1465, %v1466, %v1464
        %v1468 = vsel %vm1435, %v1429, %v1453
        %v1469 = vsel %vm1436, %v1430, %v1460
        %v1470 = vsel %vm1437, %v1431, %v1467
        %v1471 = vmul.f32 %v1468, %v1468
        %v1472 = vmul.f32 %v1469, %v1469
        %v1473 = vmul.f32 %v1470, %v1470
        %v1474 = vmul.f32 %v1471, 0.0421632
        %v1475 = vmul.f32 %v1472, 0.0421632
        %v1476 = vmul.f32 %v1473, 0.0421632
        %v1477 = vadd.f32 %v1474, 0.024181312
        %v1478 = vadd.f32 %v1475, 0.024181312
        %v1479 = vadd.f32 %v1476, 0.024181312
        %v1480 = vmul.f32 %v1477, %v1471
        %v1481 = vmul.f32 %v1478, %v1472
        %v1482 = vmul.f32 %v1479, %v1473
        %v1483 = vadd.f32 %v1480, 0.045470025
        %v1484 = vadd.f32 %v1481, 0.045470025
        %v1485 = vadd.f32 %v1482, 0.045470025
        %v1486 = vmul.f32 %v1483, %v1471
        %v1487 = vmul.f32 %v1484, %v1472
        %v1488 = vmul.f32 %v1485, %v1473
        %v1489 = vadd.f32 %v1486, 0.074953005
        %v1490 = vadd.f32 %v1487, 0.074953005
        %v1491 = vadd.f32 %v1488, 0.074953005
        %v1492 = vmul.f32 %v1489, %v1471
        %v1493 = vmul.f32 %v1490, %v1472
        %v1494 = vmul.f32 %v1491, %v1473
        %v1495 = vadd.f32 %v1492, 0.16666752
        %v1496 = vadd.f32 %v1493, 0.16666752
        %v1497 = vadd.f32 %v1494, 0.16666752
        %v1498 = vmul.f32 %v1468, %v1471
        %v1499 = vmul.f32 %v1469, %v1472
        %v1500 = vmul.f32 %v1470, %v1473
        %v1501 = vmul.f32 %v1498, %v1495
        %v1502 = vmul.f32 %v1499, %v1496
        %v1503 = vmul.f32 %v1500, %v1497
        %v1504 = vadd.f32 %v1468, %v1501
        %v1505 = vadd.f32 %v1469, %v1502
        %v1506 = vadd.f32 %v1470, %v1503
        %v1507 = vsub.f32 1.5707964, %v1504
        %v1508 = vsub.f32 1.5707964, %v1505
        %v1509 = vsub.f32 1.5707964, %v1506
        %v1510 = vmul.f32 %v1504, 2.0
        %v1511 = vmul.f32 %v1505, 2.0
        %v1512 = vmul.f32 %v1506, 2.0
        %vm1513 = vcmp.lt.f32.partialorder %v1429, 0.0
        %vm1514 = vcmp.lt.f32.partialorder %v1430, 0.0
        %vm1515 = vcmp.lt.f32.partialorder %v1431, 0.0
        %v1516 = vsub.f32 3.1415927, %v1510
        %v1517 = vsub.f32 3.1415927, %v1511
        %v1518 = vsub.f32 3.1415927, %v1512
        %v1519 = vsel %vm1513, %v1516, %v1510
        %v1520 = vsel %vm1514, %v1517, %v1511
        %v1521 = vsel %vm1515, %v1518, %v1512
        %v1522 = vsel %vm1435, %v1507, %v1519
        %v1523 = vsel %vm1436, %v1508, %v1520
        %v1524 = vsel %vm1437, %v1509, %v1521
        %v1525 = vmul.f32 %v1348, %v1522
        %v1526 = vmul.f32 %v1349, %v1523
        %v1527 = vmul.f32 %v1350, %v1524
        %v1528 = vadd.f32 %v1300, %v1525
        %v1529 = vadd.f32 %v1301, %v1526
        %v1530 = vadd.f32 %v1302, %v1527
        %s1531 = sadd.s32 %s154, 6
        %s1532 = sld [smem:[#allocation2 + %s1531]]
        %s1533 = sadd.s32 %s157, 6
        %s1534 = sld [smem:[#allocation2 + %s1533]]
        %s1535 = sadd.s32 %s160, 6
        %s1536 = sld [smem:[#allocation2 + %s1535]]
        %s1537 = sadd.s32 %s163, 6
        %s1538 = sld [smem:[#allocation2 + %s1537]]
        %s1539 = sadd.s32 %s166, 6
        %s1540 = sld [smem:[#allocation2 + %s1539]]
        %s1541 = sadd.s32 %s169, 6
        %s1542 = sld [smem:[#allocation2 + %s1541]]
        %s1543 = sadd.s32 %s172, 6
        %s1544 = sld [smem:[#allocation2 + %s1543]]
        %s1545 = sadd.s32 %s175, 6
        %s1546 = sld [smem:[#allocation2 + %s1545]]
        %s1547 = sadd.s32 %s178, 6
        %s1548 = sld [smem:[#allocation2 + %s1547]]
        %s1549 = sadd.s32 %s181, 6
        %s1550 = sld [smem:[#allocation2 + %s1549]]
        %v1551 = vstv %s1534
        %v1552 = vmul.f32 %v141, %v1551
        %v1553 = vmul.f32 %v142, %v1551
        %v1554 = vmul.f32 %v143, %v1551
        %v1555 = vstv %s1532
        %v1556 = vadd.f32 %v1555, %v1552
        %v1557 = vadd.f32 %v1555, %v1553
        %v1558 = vadd.f32 %v1555, %v1554
        %v1559 = vstv %s1536
        %v1560 = vmul.f32 %v145, %v1559
        %v1561 = vadd.f32 %v1556, %v1560
        %v1562 = vadd.f32 %v1557, %v1560
        %v1563 = vadd.f32 %v1558, %v1560
        %vm1564 = vcmp.gt.f32.partialorder %v1561, 0.0
        %vm1565 = vcmp.gt.f32.partialorder %v1562, 0.0
        %vm1566 = vcmp.gt.f32.partialorder %v1563, 0.0
        %v1567 = vsel %vm1564, 1.0, 0.0
        %v1568 = vsel %vm1565, 1.0, 0.0
        %v1569 = vsel %vm1566, 1.0, 0.0
        %vm1570 = vcmp.lt.f32.partialorder %v1561, 0.0
        %vm1571 = vcmp.lt.f32.partialorder %v1562, 0.0
        %vm1572 = vcmp.lt.f32.partialorder %v1563, 0.0
        %v1573 = vsel %vm1570, 1.0, 0.0
        %v1574 = vsel %vm1571, 1.0, 0.0
        %v1575 = vsel %vm1572, 1.0, 0.0
        %v1576 = vsub.f32 %v1567, %v1573
        %v1577 = vsub.f32 %v1568, %v1574
        %v1578 = vsub.f32 %v1569, %v1575
        %v1579 = vstv %s1538
        %v1580 = vadd.f32 %v150, %v1579
        %v1581 = vadd.f32 %v151, %v1579
        %v1582 = vadd.f32 %v152, %v1579
        %v1583 = vstv %s1544
        %v1584 = vmul.f32 %v141, %v1583
        %v1585 = vmul.f32 %v142, %v1583
        %v1586 = vmul.f32 %v143, %v1583
        %v1587 = vsub.f32 %v1580, %v1584
        %v1588 = vsub.f32 %v1581, %v1585
        %v1589 = vsub.f32 %v1582, %v1586
        %v1590 = vstv %s1546
        %v1591 = vmul.f32 %v145, %v1590
        %v1592 = vsub.f32 %v1587, %v1591
        %v1593 = vsub.f32 %v1588, %v1591
        %v1594 = vsub.f32 %v1589, %v1591
        %v1595 = vstv %s1540
        %v1596 = vadd.f32 %v150, %v1595
        %v1597 = vadd.f32 %v151, %v1595
        %v1598 = vadd.f32 %v152, %v1595
        %v1599 = vstv %s1548
        %v1600 = vmul.f32 %v141, %v1599
        %v1601 = vmul.f32 %v142, %v1599
        %v1602 = vmul.f32 %v143, %v1599
        %v1603 = vsub.f32 %v1596, %v1600
        %v1604 = vsub.f32 %v1597, %v1601
        %v1605 = vsub.f32 %v1598, %v1602
        %v1606 = vstv %s1550
        %v1607 = vmul.f32 %v145, %v1606
        %v1608 = vsub.f32 %v1603, %v1607
        %v1609 = vsub.f32 %v1604, %v1607
        %v1610 = vsub.f32 %v1605, %v1607
        %v1611 = vadd.f32 %v1592, %v1608
        %v1612 = vadd.f32 %v1593, %v1609
        %v1613 = vadd.f32 %v1594, %v1610
        %v1614 = vstv %s1542
        %v1615 = vsub.f32 %v1611, %v1614
        %v1616 = vsub.f32 %v1612, %v1614
        %v1617 = vsub.f32 %v1613, %v1614
        %v1618 = vmul.f32 %v1615, 0.5
        %v1619 = vmul.f32 %v1616, 0.5
        %v1620 = vmul.f32 %v1617, 0.5
        %v1621 = vmul.f32 %v1592, %v1608
        %v1622 = vmul.f32 %v1593, %v1609
        %v1623 = vmul.f32 %v1594, %v1610
        %v1624 = vrsqrt.pop %v1621
        %v1625 = vmul.f32 %v1621, %v1624
        %vm1626 = vcmp.eq.f32.partialorder %v1621, inf
        %v1627 = vsel %vm1626, %v1621, %v1625
        %vm1628 = vcmp.eq.f32.partialorder %v1621, 0.0
        %v1629 = vand.u32 %v1621, 2147483648
        %v1630 = vsel %vm1628, %v1629, %v1627
        %v1631 = vrsqrt.pop %v1622
        %v1632 = vmul.f32 %v1622, %v1631
        %vm1633 = vcmp.eq.f32.partialorder %v1622, inf
        %v1634 = vsel %vm1633, %v1622, %v1632
        %vm1635 = vcmp.eq.f32.partialorder %v1622, 0.0
        %v1636 = vand.u32 %v1622, 2147483648
        %v1637 = vsel %vm1635, %v1636, %v1634
        %v1638 = vrsqrt.pop %v1623
        %v1639 = vmul.f32 %v1623, %v1638
        %vm1640 = vcmp.eq.f32.partialorder %v1623, inf
        %v1641 = vsel %vm1640, %v1623, %v1639
        %vm1642 = vcmp.eq.f32.partialorder %v1623, 0.0
        %v1643 = vand.u32 %v1623, 2147483648
        %v1644 = vsel %vm1642, %v1643, %v1641
        %v1645 = vadd.f32 %v1630, 1e-05
        %v1646 = vadd.f32 %v1637, 1e-05
        %v1647 = vadd.f32 %v1644, 1e-05
        %v1648 = vrcp.pop %v1645
        %v1649 = vmul.f32 %v1618, %v1648
        %v1650 = vrcp.pop %v1646
        %v1651 = vmul.f32 %v1619, %v1650
        %v1652 = vrcp.pop %v1647
        %v1653 = vmul.f32 %v1620, %v1652
        %v1654 = vmax.f32 %v1649, -0.99999
        %v1655 = vmax.f32 %v1651, -0.99999
        %v1656 = vmax.f32 %v1653, -0.99999
        %v1657 = vmin.f32 %v1654, 0.99999
        %v1658 = vmin.f32 %v1655, 0.99999
        %v1659 = vmin.f32 %v1656, 0.99999
        %v1660 = vand.u32 2147483647, %v1657
        %v1661 = vand.u32 2147483647, %v1658
        %v1662 = vand.u32 2147483647, %v1659
        %vm1663 = vcmp.le.f32.partialorder %v1660, 0.5
        %vm1664 = vcmp.le.f32.partialorder %v1661, 0.5
        %vm1665 = vcmp.le.f32.partialorder %v1662, 0.5
        %v1666 = vsub.f32 1.0, %v1660
        %v1667 = vsub.f32 1.0, %v1661
        %v1668 = vsub.f32 1.0, %v1662
        %v1669 = vmul.f32 %v1666, 0.5
        %v1670 = vmul.f32 %v1667, 0.5
        %v1671 = vmul.f32 %v1668, 0.5
        %v1672 = vmax.f32 %v1669, 0.0
        %v1673 = vmax.f32 %v1670, 0.0
        %v1674 = vmax.f32 %v1671, 0.0
        %v1675 = vrsqrt.pop %v1672
        %v1676 = vmul.f32 %v1672, %v1675
        %vm1677 = vcmp.eq.f32.partialorder %v1672, inf
        %v1678 = vsel %vm1677, %v1672, %v1676
        %vm1679 = vcmp.eq.f32.partialorder %v1672, 0.0
        %v1680 = vand.u32 %v1672, 2147483648
        %v1681 = vsel %vm1679, %v1680, %v1678
        %v1682 = vrsqrt.pop %v1673
        %v1683 = vmul.f32 %v1673, %v1682
        %vm1684 = vcmp.eq.f32.partialorder %v1673, inf
        %v1685 = vsel %vm1684, %v1673, %v1683
        %vm1686 = vcmp.eq.f32.partialorder %v1673, 0.0
        %v1687 = vand.u32 %v1673, 2147483648
        %v1688 = vsel %vm1686, %v1687, %v1685
        %v1689 = vrsqrt.pop %v1674
        %v1690 = vmul.f32 %v1674, %v1689
        %vm1691 = vcmp.eq.f32.partialorder %v1674, inf
        %v1692 = vsel %vm1691, %v1674, %v1690
        %vm1693 = vcmp.eq.f32.partialorder %v1674, 0.0
        %v1694 = vand.u32 %v1674, 2147483648
        %v1695 = vsel %vm1693, %v1694, %v1692
        %v1696 = vsel %vm1663, %v1657, %v1681
        %v1697 = vsel %vm1664, %v1658, %v1688
        %v1698 = vsel %vm1665, %v1659, %v1695
        %v1699 = vmul.f32 %v1696, %v1696
        %v1700 = vmul.f32 %v1697, %v1697
        %v1701 = vmul.f32 %v1698, %v1698
        %v1702 = vmul.f32 %v1699, 0.0421632
        %v1703 = vmul.f32 %v1700, 0.0421632
        %v1704 = vmul.f32 %v1701, 0.0421632
        %v1705 = vadd.f32 %v1702, 0.024181312
        %v1706 = vadd.f32 %v1703, 0.024181312
        %v1707 = vadd.f32 %v1704, 0.024181312
        %v1708 = vmul.f32 %v1705, %v1699
        %v1709 = vmul.f32 %v1706, %v1700
        %v1710 = vmul.f32 %v1707, %v1701
        %v1711 = vadd.f32 %v1708, 0.045470025
        %v1712 = vadd.f32 %v1709, 0.045470025
        %v1713 = vadd.f32 %v1710, 0.045470025
        %v1714 = vmul.f32 %v1711, %v1699
        %v1715 = vmul.f32 %v1712, %v1700
        %v1716 = vmul.f32 %v1713, %v1701
        %v1717 = vadd.f32 %v1714, 0.074953005
        %v1718 = vadd.f32 %v1715, 0.074953005
        %v1719 = vadd.f32 %v1716, 0.074953005
        %v1720 = vmul.f32 %v1717, %v1699
        %v1721 = vmul.f32 %v1718, %v1700
        %v1722 = vmul.f32 %v1719, %v1701
        %v1723 = vadd.f32 %v1720, 0.16666752
        %v1724 = vadd.f32 %v1721, 0.16666752
        %v1725 = vadd.f32 %v1722, 0.16666752
        %v1726 = vmul.f32 %v1696, %v1699
        %v1727 = vmul.f32 %v1697, %v1700
        %v1728 = vmul.f32 %v1698, %v1701
        %v1729 = vmul.f32 %v1726, %v1723
        %v1730 = vmul.f32 %v1727, %v1724
        %v1731 = vmul.f32 %v1728, %v1725
        %v1732 = vadd.f32 %v1696, %v1729
        %v1733 = vadd.f32 %v1697, %v1730
        %v1734 = vadd.f32 %v1698, %v1731
        %v1735 = vsub.f32 1.5707964, %v1732
        %v1736 = vsub.f32 1.5707964, %v1733
        %v1737 = vsub.f32 1.5707964, %v1734
        %v1738 = vmul.f32 %v1732, 2.0
        %v1739 = vmul.f32 %v1733, 2.0
        %v1740 = vmul.f32 %v1734, 2.0
        %vm1741 = vcmp.lt.f32.partialorder %v1657, 0.0
        %vm1742 = vcmp.lt.f32.partialorder %v1658, 0.0
        %vm1743 = vcmp.lt.f32.partialorder %v1659, 0.0
        %v1744 = vsub.f32 3.1415927, %v1738
        %v1745 = vsub.f32 3.1415927, %v1739
        %v1746 = vsub.f32 3.1415927, %v1740
        %v1747 = vsel %vm1741, %v1744, %v1738
        %v1748 = vsel %vm1742, %v1745, %v1739
        %v1749 = vsel %vm1743, %v1746, %v1740
        %v1750 = vsel %vm1663, %v1735, %v1747
        %v1751 = vsel %vm1664, %v1736, %v1748
        %v1752 = vsel %vm1665, %v1737, %v1749
        %v1753 = vmul.f32 %v1576, %v1750
        %v1754 = vmul.f32 %v1577, %v1751
        %v1755 = vmul.f32 %v1578, %v1752
        %v1756 = vadd.f32 %v1528, %v1753
        %v1757 = vadd.f32 %v1529, %v1754
        %v1758 = vadd.f32 %v1530, %v1755
        %s1759 = sadd.s32 %s154, 7
        %s1760 = sld [smem:[#allocation2 + %s1759]]
        %s1761 = sadd.s32 %s157, 7
        %s1762 = sld [smem:[#allocation2 + %s1761]]
        %s1763 = sadd.s32 %s160, 7
        %s1764 = sld [smem:[#allocation2 + %s1763]]
        %s1765 = sadd.s32 %s163, 7
        %s1766 = sld [smem:[#allocation2 + %s1765]]
        %s1767 = sadd.s32 %s166, 7
        %s1768 = sld [smem:[#allocation2 + %s1767]]
        %s1769 = sadd.s32 %s169, 7
        %s1770 = sld [smem:[#allocation2 + %s1769]]
        %s1771 = sadd.s32 %s172, 7
        %s1772 = sld [smem:[#allocation2 + %s1771]]
        %s1773 = sadd.s32 %s175, 7
        %s1774 = sld [smem:[#allocation2 + %s1773]]
        %s1775 = sadd.s32 %s178, 7
        %s1776 = sld [smem:[#allocation2 + %s1775]]
        %s1777 = sadd.s32 %s181, 7
        %s1778 = sld [smem:[#allocation2 + %s1777]]
        %v1779 = vstv %s1762
        %v1780 = vmul.f32 %v141, %v1779
        %v1781 = vmul.f32 %v142, %v1779
        %v1782 = vmul.f32 %v143, %v1779
        %v1783 = vstv %s1760
        %v1784 = vadd.f32 %v1783, %v1780
        %v1785 = vadd.f32 %v1783, %v1781
        %v1786 = vadd.f32 %v1783, %v1782
        %v1787 = vstv %s1764
        %v1788 = vmul.f32 %v145, %v1787
        %v1789 = vadd.f32 %v1784, %v1788
        %v1790 = vadd.f32 %v1785, %v1788
        %v1791 = vadd.f32 %v1786, %v1788
        %vm1792 = vcmp.gt.f32.partialorder %v1789, 0.0
        %vm1793 = vcmp.gt.f32.partialorder %v1790, 0.0
        %vm1794 = vcmp.gt.f32.partialorder %v1791, 0.0
        %v1795 = vsel %vm1792, 1.0, 0.0
        %v1796 = vsel %vm1793, 1.0, 0.0
        %v1797 = vsel %vm1794, 1.0, 0.0
        %vm1798 = vcmp.lt.f32.partialorder %v1789, 0.0
        %vm1799 = vcmp.lt.f32.partialorder %v1790, 0.0
        %vm1800 = vcmp.lt.f32.partialorder %v1791, 0.0
        %v1801 = vsel %vm1798, 1.0, 0.0
        %v1802 = vsel %vm1799, 1.0, 0.0
        %v1803 = vsel %vm1800, 1.0, 0.0
        %v1804 = vsub.f32 %v1795, %v1801
        %v1805 = vsub.f32 %v1796, %v1802
        %v1806 = vsub.f32 %v1797, %v1803
        %v1807 = vstv %s1766
        %v1808 = vadd.f32 %v150, %v1807
        %v1809 = vadd.f32 %v151, %v1807
        %v1810 = vadd.f32 %v152, %v1807
        %v1811 = vstv %s1772
        %v1812 = vmul.f32 %v141, %v1811
        %v1813 = vmul.f32 %v142, %v1811
        %v1814 = vmul.f32 %v143, %v1811
        %v1815 = vsub.f32 %v1808, %v1812
        %v1816 = vsub.f32 %v1809, %v1813
        %v1817 = vsub.f32 %v1810, %v1814
        %v1818 = vstv %s1774
        %v1819 = vmul.f32 %v145, %v1818
        %v1820 = vsub.f32 %v1815, %v1819
        %v1821 = vsub.f32 %v1816, %v1819
        %v1822 = vsub.f32 %v1817, %v1819
        %v1823 = vstv %s1768
        %v1824 = vadd.f32 %v150, %v1823
        %v1825 = vadd.f32 %v151, %v1823
        %v1826 = vadd.f32 %v152, %v1823
        %v1827 = vstv %s1776
        %v1828 = vmul.f32 %v141, %v1827
        %v1829 = vmul.f32 %v142, %v1827
        %v1830 = vmul.f32 %v143, %v1827
        %v1831 = vsub.f32 %v1824, %v1828
        %v1832 = vsub.f32 %v1825, %v1829
        %v1833 = vsub.f32 %v1826, %v1830
        %v1834 = vstv %s1778
        %v1835 = vmul.f32 %v145, %v1834
        %v1836 = vsub.f32 %v1831, %v1835
        %v1837 = vsub.f32 %v1832, %v1835
        %v1838 = vsub.f32 %v1833, %v1835
        %v1839 = vadd.f32 %v1820, %v1836
        %v1840 = vadd.f32 %v1821, %v1837
        %v1841 = vadd.f32 %v1822, %v1838
        %v1842 = vstv %s1770
        %v1843 = vsub.f32 %v1839, %v1842
        %v1844 = vsub.f32 %v1840, %v1842
        %v1845 = vsub.f32 %v1841, %v1842
        %v1846 = vmul.f32 %v1843, 0.5
        %v1847 = vmul.f32 %v1844, 0.5
        %v1848 = vmul.f32 %v1845, 0.5
        %v1849 = vmul.f32 %v1820, %v1836
        %v1850 = vmul.f32 %v1821, %v1837
        %v1851 = vmul.f32 %v1822, %v1838
        %v1852 = vrsqrt.pop %v1849
        %v1853 = vmul.f32 %v1849, %v1852
        %vm1854 = vcmp.eq.f32.partialorder %v1849, inf
        %v1855 = vsel %vm1854, %v1849, %v1853
        %vm1856 = vcmp.eq.f32.partialorder %v1849, 0.0
        %v1857 = vand.u32 %v1849, 2147483648
        %v1858 = vsel %vm1856, %v1857, %v1855
        %v1859 = vrsqrt.pop %v1850
        %v1860 = vmul.f32 %v1850, %v1859
        %vm1861 = vcmp.eq.f32.partialorder %v1850, inf
        %v1862 = vsel %vm1861, %v1850, %v1860
        %vm1863 = vcmp.eq.f32.partialorder %v1850, 0.0
        %v1864 = vand.u32 %v1850, 2147483648
        %v1865 = vsel %vm1863, %v1864, %v1862
        %v1866 = vrsqrt.pop %v1851
        %v1867 = vmul.f32 %v1851, %v1866
        %vm1868 = vcmp.eq.f32.partialorder %v1851, inf
        %v1869 = vsel %vm1868, %v1851, %v1867
        %vm1870 = vcmp.eq.f32.partialorder %v1851, 0.0
        %v1871 = vand.u32 %v1851, 2147483648
        %v1872 = vsel %vm1870, %v1871, %v1869
        %v1873 = vadd.f32 %v1858, 1e-05
        %v1874 = vadd.f32 %v1865, 1e-05
        %v1875 = vadd.f32 %v1872, 1e-05
        %v1876 = vrcp.pop %v1873
        %v1877 = vmul.f32 %v1846, %v1876
        %v1878 = vrcp.pop %v1874
        %v1879 = vmul.f32 %v1847, %v1878
        %v1880 = vrcp.pop %v1875
        %v1881 = vmul.f32 %v1848, %v1880
        %v1882 = vmax.f32 %v1877, -0.99999
        %v1883 = vmax.f32 %v1879, -0.99999
        %v1884 = vmax.f32 %v1881, -0.99999
        %v1885 = vmin.f32 %v1882, 0.99999
        %v1886 = vmin.f32 %v1883, 0.99999
        %v1887 = vmin.f32 %v1884, 0.99999
        %v1888 = vand.u32 2147483647, %v1885
        %v1889 = vand.u32 2147483647, %v1886
        %v1890 = vand.u32 2147483647, %v1887
        %vm1891 = vcmp.le.f32.partialorder %v1888, 0.5
        %vm1892 = vcmp.le.f32.partialorder %v1889, 0.5
        %vm1893 = vcmp.le.f32.partialorder %v1890, 0.5
        %v1894 = vsub.f32 1.0, %v1888
        %v1895 = vsub.f32 1.0, %v1889
        %v1896 = vsub.f32 1.0, %v1890
        %v1897 = vmul.f32 %v1894, 0.5
        %v1898 = vmul.f32 %v1895, 0.5
        %v1899 = vmul.f32 %v1896, 0.5
        %v1900 = vmax.f32 %v1897, 0.0
        %v1901 = vmax.f32 %v1898, 0.0
        %v1902 = vmax.f32 %v1899, 0.0
        %v1903 = vrsqrt.pop %v1900
        %v1904 = vmul.f32 %v1900, %v1903
        %vm1905 = vcmp.eq.f32.partialorder %v1900, inf
        %v1906 = vsel %vm1905, %v1900, %v1904
        %vm1907 = vcmp.eq.f32.partialorder %v1900, 0.0
        %v1908 = vand.u32 %v1900, 2147483648
        %v1909 = vsel %vm1907, %v1908, %v1906
        %v1910 = vrsqrt.pop %v1901
        %v1911 = vmul.f32 %v1901, %v1910
        %vm1912 = vcmp.eq.f32.partialorder %v1901, inf
        %v1913 = vsel %vm1912, %v1901, %v1911
        %vm1914 = vcmp.eq.f32.partialorder %v1901, 0.0
        %v1915 = vand.u32 %v1901, 2147483648
        %v1916 = vsel %vm1914, %v1915, %v1913
        %v1917 = vrsqrt.pop %v1902
        %v1918 = vmul.f32 %v1902, %v1917
        %vm1919 = vcmp.eq.f32.partialorder %v1902, inf
        %v1920 = vsel %vm1919, %v1902, %v1918
        %vm1921 = vcmp.eq.f32.partialorder %v1902, 0.0
        %v1922 = vand.u32 %v1902, 2147483648
        %v1923 = vsel %vm1921, %v1922, %v1920
        %v1924 = vsel %vm1891, %v1885, %v1909
        %v1925 = vsel %vm1892, %v1886, %v1916
        %v1926 = vsel %vm1893, %v1887, %v1923
        %v1927 = vmul.f32 %v1924, %v1924
        %v1928 = vmul.f32 %v1925, %v1925
        %v1929 = vmul.f32 %v1926, %v1926
        %v1930 = vmul.f32 %v1927, 0.0421632
        %v1931 = vmul.f32 %v1928, 0.0421632
        %v1932 = vmul.f32 %v1929, 0.0421632
        %v1933 = vadd.f32 %v1930, 0.024181312
        %v1934 = vadd.f32 %v1931, 0.024181312
        %v1935 = vadd.f32 %v1932, 0.024181312
        %v1936 = vmul.f32 %v1933, %v1927
        %v1937 = vmul.f32 %v1934, %v1928
        %v1938 = vmul.f32 %v1935, %v1929
        %v1939 = vadd.f32 %v1936, 0.045470025
        %v1940 = vadd.f32 %v1937, 0.045470025
        %v1941 = vadd.f32 %v1938, 0.045470025
        %v1942 = vmul.f32 %v1939, %v1927
        %v1943 = vmul.f32 %v1940, %v1928
        %v1944 = vmul.f32 %v1941, %v1929
        %v1945 = vadd.f32 %v1942, 0.074953005
        %v1946 = vadd.f32 %v1943, 0.074953005
        %v1947 = vadd.f32 %v1944, 0.074953005
        %v1948 = vmul.f32 %v1945, %v1927
        %v1949 = vmul.f32 %v1946, %v1928
        %v1950 = vmul.f32 %v1947, %v1929
        %v1951 = vadd.f32 %v1948, 0.16666752
        %v1952 = vadd.f32 %v1949, 0.16666752
        %v1953 = vadd.f32 %v1950, 0.16666752
        %v1954 = vmul.f32 %v1924, %v1927
        %v1955 = vmul.f32 %v1925, %v1928
        %v1956 = vmul.f32 %v1926, %v1929
        %v1957 = vmul.f32 %v1954, %v1951
        %v1958 = vmul.f32 %v1955, %v1952
        %v1959 = vmul.f32 %v1956, %v1953
        %v1960 = vadd.f32 %v1924, %v1957
        %v1961 = vadd.f32 %v1925, %v1958
        %v1962 = vadd.f32 %v1926, %v1959
        %v1963 = vsub.f32 1.5707964, %v1960
        %v1964 = vsub.f32 1.5707964, %v1961
        %v1965 = vsub.f32 1.5707964, %v1962
        %v1966 = vmul.f32 %v1960, 2.0
        %v1967 = vmul.f32 %v1961, 2.0
        %v1968 = vmul.f32 %v1962, 2.0
        %vm1969 = vcmp.lt.f32.partialorder %v1885, 0.0
        %vm1970 = vcmp.lt.f32.partialorder %v1886, 0.0
        %vm1971 = vcmp.lt.f32.partialorder %v1887, 0.0
        %v1972 = vsub.f32 3.1415927, %v1966
        %v1973 = vsub.f32 3.1415927, %v1967
        %v1974 = vsub.f32 3.1415927, %v1968
        %v1975 = vsel %vm1969, %v1972, %v1966
        %v1976 = vsel %vm1970, %v1973, %v1967
        %v1977 = vsel %vm1971, %v1974, %v1968
        %v1978 = vsel %vm1891, %v1963, %v1975
        %v1979 = vsel %vm1892, %v1964, %v1976
        %v1980 = vsel %vm1893, %v1965, %v1977
        %v1981 = vmul.f32 %v1804, %v1978
        %v1982 = vmul.f32 %v1805, %v1979
        %v1983 = vmul.f32 %v1806, %v1980
        %v1984 = vadd.f32 %v1756, %v1981
        %v1985 = vadd.f32 %v1757, %v1982
        %v1986 = vadd.f32 %v1758, %v1983
        %v1987 = vand.u32 2147483647, %v1984
        %v1988 = vand.u32 2147483647, %v1985
        %v1989 = vand.u32 2147483647, %v1986
        %v1990 = vmul.f32 %v1987, 0.15915494
        %v1991 = vmul.f32 %v1988, 0.15915494
        %v1992 = vmul.f32 %v1989, 0.15915494
        %v1993 = vmax.f32 %v1990, 0.0
        %v1994 = vmax.f32 %v1991, 0.0
        %v1995 = vmax.f32 %v1992, 0.0
        %v1996 = vmin.f32 %v1993, 1.0
        %v1997 = vmin.f32 %v1994, 1.0
        %v1998 = vmin.f32 %v1995, 1.0
        %v2000 = vrot.slane %v1998, 7
        %vm2004 = vcmask 1040384
        %v2005 = vrot.slane %v1996, 7
        %v2006 = vrot.slane %v1997, 7
        %v2007 = vsel %vm2004, %v2005, %v2006
        %v2008 = vsel %vm2004, %v2006, %v2000
        %v2012 = vsel %vm2004, %v2000, %v2005
        %v2013 = vadd.f32 %v2012, %v1996
        %v2014 = vadd.f32 %v2007, %v1997
        %v2015 = vadd.f32 %v2008, %v1998
        %v2016 = vadd.f32 %v2013, %v1996
        %v2017 = vadd.f32 %v2014, %v1997
        %v2018 = vadd.f32 %v2015, %v1998
        %vm2019 = vcmask 1046528
        %v2020 = vrot.slane %v1996, 1
        %v2021 = vrot.slane %v1997, 1
        %v2022 = vsel %vm2019, %v2020, %v2021
        %v2023 = vrot.slane %v1998, 1
        %v2024 = vsel %vm2019, %v2021, %v2023
        %v2029 = vsel %vm2019, %v2023, %v2020
        %v2030 = vadd.f32 %v2016, %v2022
        %v2031 = vadd.f32 %v2017, %v2024
        %v2032 = vadd.f32 %v2018, %v2029
        %2033 = vrot.lane.b32.xlu0 %v1996, 1
        %v2034 = vpop.permute.xlu0 %2033
        %2035 = vrot.lane.b32.xlu0 %v1997, 1
        %v2036 = vpop.permute.xlu0 %2035
        %2037 = vrot.lane.b32.xlu0 %v1998, 1
        %v2038 = vpop.permute.xlu0 %2037
        %v2042 = vadd.f32 %v2034, %v1996
        %v2043 = vadd.f32 %v2036, %v1997
        %v2044 = vadd.f32 %v2038, %v1998
        %v2045 = vadd.f32 %v2042, %v1996
        %v2046 = vadd.f32 %v2043, %v1997
        %v2047 = vadd.f32 %v2044, %v1998
        %2048 = vrot.lane.b32.xlu0 %v1996, 127
        %v2049 = vpop.permute.xlu0 %2048
        %2050 = vrot.lane.b32.xlu0 %v1997, 127
        %v2051 = vpop.permute.xlu0 %2050
        %2052 = vrot.lane.b32.xlu0 %v1998, 127
        %v2053 = vpop.permute.xlu0 %2052
        %v2057 = vadd.f32 %v2045, %v2049
        %v2058 = vadd.f32 %v2046, %v2051
        %v2059 = vadd.f32 %v2047, %v2053
        %2063 = vrot.lane.b32.xlu0 %v2030, 1
        %v2064 = vpop.permute.xlu0 %2063
        %2065 = vrot.lane.b32.xlu0 %v2031, 1
        %v2066 = vpop.permute.xlu0 %2065
        %2067 = vrot.lane.b32.xlu0 %v2032, 1
        %v2068 = vpop.permute.xlu0 %2067
        %2072 = vrot.lane.b32.xlu0 %v2030, 127
        %v2073 = vpop.permute.xlu0 %2072
        %2074 = vrot.lane.b32.xlu0 %v2031, 127
        %v2075 = vpop.permute.xlu0 %2074
        %2076 = vrot.lane.b32.xlu0 %v2032, 127
        %v2077 = vpop.permute.xlu0 %2076
        %v2081 = vsub.f32 %v2064, %v2073
        %v2082 = vsub.f32 %v2066, %v2075
        %v2083 = vsub.f32 %v2068, %v2077
        %v2085 = vrot.slane %v2059, 7
        %v2089 = vrot.slane %v2057, 7
        %v2090 = vrot.slane %v2058, 7
        %v2091 = vsel %vm2004, %v2089, %v2090
        %v2092 = vsel %vm2004, %v2090, %v2085
        %v2096 = vsel %vm2004, %v2085, %v2089
        %v2097 = vrot.slane %v2057, 1
        %v2098 = vrot.slane %v2058, 1
        %v2099 = vsel %vm2019, %v2097, %v2098
        %v2100 = vrot.slane %v2059, 1
        %v2101 = vsel %vm2019, %v2098, %v2100
        %v2106 = vsel %vm2019, %v2100, %v2097
        %v2107 = vsub.f32 %v2096, %v2099
        %v2108 = vsub.f32 %v2091, %v2101
        %v2109 = vsub.f32 %v2092, %v2106
        %v2110 = vmul.f32 %v2081, %v2081
        %v2111 = vmul.f32 %v2082, %v2082
        %v2112 = vmul.f32 %v2083, %v2083
        %v2113 = vmul.f32 %v2107, %v2107
        %v2114 = vmul.f32 %v2108, %v2108
        %v2115 = vmul.f32 %v2109, %v2109
        %v2116 = vadd.f32 %v2110, %v2113
        %v2117 = vadd.f32 %v2111, %v2114
        %v2118 = vadd.f32 %v2112, %v2115
        %v2119 = vrsqrt.pop %v2116
        %v2120 = vmul.f32 %v2116, %v2119
        %vm2121 = vcmp.eq.f32.partialorder %v2116, inf
        %v2122 = vsel %vm2121, %v2116, %v2120
        %vm2123 = vcmp.eq.f32.partialorder %v2116, 0.0
        %v2124 = vand.u32 %v2116, 2147483648
        %v2125 = vsel %vm2123, %v2124, %v2122
        %v2126 = vrsqrt.pop %v2117
        %v2127 = vmul.f32 %v2117, %v2126
        %vm2128 = vcmp.eq.f32.partialorder %v2117, inf
        %v2129 = vsel %vm2128, %v2117, %v2127
        %vm2130 = vcmp.eq.f32.partialorder %v2117, 0.0
        %v2131 = vand.u32 %v2117, 2147483648
        %v2132 = vsel %vm2130, %v2131, %v2129
        %v2133 = vrsqrt.pop %v2118
        %v2134 = vmul.f32 %v2118, %v2133
        %vm2135 = vcmp.eq.f32.partialorder %v2118, inf
        %v2136 = vsel %vm2135, %v2118, %v2134
        %vm2137 = vcmp.eq.f32.partialorder %v2118, 0.0
        %v2138 = vand.u32 %v2118, 2147483648
        %v2139 = vsel %vm2137, %v2138, %v2136
        %v2140 = vmul.f32 %v2125, 2.0
        %v2141 = vmul.f32 %v2132, 2.0
        %v2142 = vmul.f32 %v2139, 2.0
        %vm2143 = vcmp.ge.s32.totalorder %v133, 1
        %vm2144 = vcmp.ge.s32.totalorder %v134, 1
        %vm2145 = vcmp.ge.s32.totalorder %v135, 1
        %vm2146 = vcmp.le.s32.totalorder %v133, 14
        %vm2147 = vcmp.le.s32.totalorder %v134, 14
        %vm2148 = vcmp.le.s32.totalorder %v135, 14
        %vm2149 = vmand %vm2143, %vm2146
        %vm2150 = vmand %vm2144, %vm2147
        %vm2151 = vmand %vm2145, %vm2148
        %vm2152 = vcmp.ge.s32.totalorder %v137, 1
        %vm2153 = vmand %vm2149, %vm2152
        %vm2154 = vmand %vm2150, %vm2152
        %vm2155 = vmand %vm2151, %vm2152
        %vm2156 = vcmp.le.s32.totalorder %v137, 14
        %vm2157 = vmand %vm2153, %vm2156
        %vm2158 = vmand %vm2154, %vm2156
        %vm2159 = vmand %vm2155, %vm2156
        %v2160 = vsel %vm2157, %v2140, 0.0
        %v2161 = vsel %vm2158, %v2141, 0.0
        %v2162 = vsel %vm2159, %v2142, 0.0
        %2163 = vst [vmem:[%s124 - $0x4] sm:$0xf0] %v2160
        %2164 = vst [vmem:[%s124 + $0x4] sm:$0xff] %v2161
        %2165 = vst [vmem:[%s124 + $0xc] sm:$0xf] %v2162
        %s2166 = sand.u32 %s59, 1
        %s2167 = scalar_lea.sflag [#allocation3], %s2166
        %s2168 = sand.u32 %s59, 1
        %s2169 = smul.addr %s2168, 16
        %s2170 = scalar_lea.vmem [#allocation5], %s2169
        // Predicated region
        $region29: #{tpu_custom_call.1} parent=23 // pred_check
          %p2171 = pneg %p69
        $region30: #{tpu_custom_call.1} parent=23 // pred_check_branch
          %2173 = sbr.rel (%p2171) target = $region32
        $region31: #{tpu_custom_call.1} parent=23 // pred_region
          %s2174 = smul.u32 2, %s21
          %s2176 = ssub.s32 256, 256
          %2177 = vsyncadd %s2167, %s2176
          %s2178 = smul.addr %s20, 2
          %s2179 = sadd.s32 %s2174, %s2178
          %s2180 = smul.addr %s2179, 128
          %s2181 = scalar_lea.hbm %s1, %s2180
          %s2182 = sshll.u32 %s2170, 4
          %s2183 = int_to_ptr.vmem [resolvable:$true] %s2182
          %2188 = dma.vmem_to_hbm [thread:$0]  %s2183, 256, %s2181, %s2167, 128, 128, 8
        $region32: #{tpu_custom_call.1} parent=23 // pred_fallthru
          _
      $region24: #{tpu_custom_call.1} parent=5 // pred_fallthru
        _
      %p2189 = scmp.le.s32.totalorder 2, %s11
      // Predicated region
      $region33: #{tpu_custom_call.1} parent=5 // pred_check
        %p2190 = pneg %p2189
      $region34: #{tpu_custom_call.1} parent=5 // pred_check_branch
        %2192 = sbr.rel (%p2190) target = $region36
      $region35: #{tpu_custom_call.1} parent=5 // pred_region
        %s2193 = ssub.s32 %s11, 2
        // Predicated region
        $region37: #{tpu_custom_call.1} parent=35 // pred_check
          %p2194 = pneg %p75
        $region38: #{tpu_custom_call.1} parent=35 // pred_check_branch
          %2196 = sbr.rel (%p2194) target = $region40
        $region39: #{tpu_custom_call.1} parent=35 // pred_region
          %s2197 = sand.u32 %s60, 1
          %s2198 = scalar_lea.sflag [#allocation3], %s2197
          %s2199 = sand.u32 %s60, 1
          %s2200 = smul.addr %s2199, 16
          %s2201 = scalar_lea.vmem [#allocation5], %s2200
          %2202 = dma.done %s2198, 256
        $region40: #{tpu_custom_call.1} parent=35 // pred_fallthru
          _
      $region36: #{tpu_custom_call.1} parent=5 // pred_fallthru
        _
    $region6: #{tpu_custom_call.1} parent=1 // loop_footer
      %s15 = sadd.s32 1, %s11
    $region7: #{tpu_custom_call.1} parent=1 // loop_footer_branch
      %10 = sbr.rel target = $region3
    $region8: #{tpu_custom_call.1} parent=1 // loop_exit
      _
    %2203 = vsyncpa [#allocation3], 1
    %s2204 = scalar_lea.sflag [#allocation3], 1
    %2205 = vsyncpa %s2204, 1
    %2206 = vsyncpa [#allocation4], 1
    %s2207 = scalar_lea.sflag [#allocation4], 1
    %2208 = vsyncpa %s2207, 1

</llo_original>
